<compile_context>
chip_gen: v7x
topology: tpu7x:2x2x1
jax: 0.10.0
libtpu: 0.0.40
codegen_flags: <defaults>
</compile_context>

<pallas_src>
import functools

import jax
import jax.numpy as jnp
from jax.experimental import pallas as pl
from jax.experimental.pallas import tpu as pltpu


def _convlstm_kernel(comb_ref, cprev_ref, w_ref, b_ref, h_ref, c_ref, acc_ref,
                     *, W, RB, Ch, Ct, K):
    # comb_ref : (1, H+K-1, W+K-1, Ct)  spatially padded [x ; h_prev], bf16
    # cprev_ref: (1, RB, W, Ch)          f32
    # w_ref    : (K, K, Ct, 4*Ch)        bf16  (HWIO)
    # b_ref    : (1, 4*Ch)               f32
    # h_ref    : (1, RB, W, Ch)          bf16 output
    # c_ref    : (1, RB, W, Ch)          f32 output
    # acc_ref  : (RB*W, 4*Ch)            f32 VMEM scratch accumulator
    r = pl.program_id(1)
    M = RB * W
    row0 = pl.multiple_of(r * RB, RB)      # first padded row of this row-block

    # Bias-initialized accumulator, resident in VMEM (not vregs).
    acc_ref[...] = jnp.broadcast_to(b_ref[...], (M, 4 * Ch)).astype(jnp.float32)

    # One aligned full-width row-slab load per kernel row; the K column taps
    # are static value slices of that slab (relayout stays in-register instead
    # of re-reading shifted windows from the ref).  Each tap issues its own
    # MXU matmul (contraction depth Ct) accumulated in place into the scratch.
    for kh in range(K):
        row = comb_ref[0, pl.ds(row0 + kh, RB), :, :]      # (RB, Wp, Ct)
        for kw in range(K):
            tap = row[:, kw:kw + W, :].reshape(M, Ct)       # (M, Ct)
            acc_ref[...] += jnp.dot(tap, w_ref[kh, kw],
                                    preferred_element_type=jnp.float32)

    # Full-width nonlinearities (2 EUP passes over (M, 4*Ch)), then cheap
    # static lane slices per gate.
    acc = acc_ref[...]
    sg = jax.nn.sigmoid(acc)
    th = jnp.tanh(acc)
    i_g = sg[:, 0 * Ch:1 * Ch]
    f_g = sg[:, 1 * Ch:2 * Ch]
    g_g = th[:, 2 * Ch:3 * Ch]
    o_g = sg[:, 3 * Ch:4 * Ch]

    c_prev = cprev_ref[0].reshape(M, Ch)
    c_next = f_g * c_prev + i_g * g_g
    h_next = o_g * jnp.tanh(c_next)

    h_ref[0] = h_next.reshape(RB, W, Ch).astype(h_ref.dtype)   # bf16
    c_ref[0] = c_next.reshape(RB, W, Ch).astype(c_ref.dtype)   # f32


def _pick_row_block(H, W, max_pixels=256):
    """Largest divisor RB of H with RB*W <= max_pixels (M fills the MXU)."""
    rb = 1
    for cand in range(1, H + 1):
        if H % cand == 0 and cand * W <= max_pixels:
            rb = cand
    return rb


def prepare_conv_params(weight_oihw, bias, *, compute_dtype=jnp.bfloat16):
    """One-time conv parameter prep (call once, reuse across timesteps).

    OIHW [4*Ch, Ct, K, K] -> HWIO (K, K, Ct, 4*Ch) bf16; bias -> (1, 4*Ch) f32.
    """
    w = jnp.transpose(weight_oihw, (2, 3, 1, 0)).astype(compute_dtype)
    b = bias.reshape(1, -1).astype(jnp.float32)
    return w, b


def conv_lstm_cell_nhwc(x, h_prev, c_prev, w_packed, b2d, *,
                        compute_dtype=jnp.bfloat16, max_pixels=256):
    """ConvLSTM cell step with NHWC state (preferred entry point for rollouts).

    Returns (h_next bf16, c_next f32), both NHWC.  Use max_pixels=128 on v5e.
    """
    B, H, W, Cin = x.shape
    Ch = h_prev.shape[-1]
    K = w_packed.shape[0]
    assert K % 2 == 1, "padded-slab geometry assumes an odd kernel size"
    pad = K // 2
    Ct = Cin + Ch
    assert w_packed.shape == (K, K, Ct, 4 * Ch)
    Hp, Wp = H + K - 1, W + K - 1
    RB = _pick_row_block(H, W, max_pixels)
    M = RB * W

    # Single fused HBM op: concat [x ; h_prev], cast to compute dtype and pad
    # spatially (SAME).  No channel padding -> ~3.5x fewer HBM bytes than a
    # 128-lane-padded slab; the MXU contraction handles Ct directly.
    comb = jnp.concatenate([x, h_prev], axis=-1).astype(compute_dtype)
    comb = jnp.pad(comb, ((0, 0), (pad, pad), (pad, pad), (0, 0)))

    kernel = functools.partial(_convlstm_kernel, W=W, RB=RB, Ch=Ch, Ct=Ct, K=K)

    h_next, c_next = pl.pallas_call(
        kernel,
        out_shape=(jax.ShapeDtypeStruct((B, H, W, Ch), jnp.bfloat16),
                   jax.ShapeDtypeStruct((B, H, W, Ch), jnp.float32)),
        grid_spec=pltpu.PrefetchScalarGridSpec(
            num_scalar_prefetch=0,
            grid=(B, H // RB),      # both axes parallel -> feeds both v7x TCs
            in_specs=[
                # Whole padded slab per batch element; block index is constant
                # in r so it is fetched once per b.  Row slabs are read from
                # the ref inside the kernel.
                pl.BlockSpec((1, Hp, Wp, Ct), lambda b, r: (b, 0, 0, 0)),
                pl.BlockSpec((1, RB, W, Ch), lambda b, r: (b, r, 0, 0)),
                pl.BlockSpec((K, K, Ct, 4 * Ch), lambda b, r: (0, 0, 0, 0)),
                pl.BlockSpec((1, 4 * Ch), lambda b, r: (0, 0)),
            ],
            out_specs=[
                pl.BlockSpec((1, RB, W, Ch), lambda b, r: (b, r, 0, 0)),
                pl.BlockSpec((1, RB, W, Ch), lambda b, r: (b, r, 0, 0)),
            ],
            scratch_shapes=[pltpu.VMEM((M, 4 * Ch), jnp.float32)],
        ),
        compiler_params=pltpu.CompilerParams(
            dimension_semantics=("parallel", "parallel"),
            # Footprint at the test shape is well under 1 MiB; the unpadded
            # Ct-channel slab keeps even 256x256 images (~4.6 MiB/buffer)
            # comfortably inside this budget on v7x's 64 MiB VMEM.
            vmem_limit_bytes=32 * 1024 * 1024,
        ),
    )(comb, c_prev.astype(jnp.float32), w_packed, b2d)
    return h_next, c_next


def conv_lstm_cell(x_nchw, h_prev_nchw, c_prev_nchw, weight_oihw, bias,
                   kernel_size=3):
    """PyTorch-parity entry point: NCHW f32 in / NCHW f32 out (boundary glue)."""
    del kernel_size  # implied by the weight shape
    w_packed, b2d = prepare_conv_params(weight_oihw, bias)
    x = jnp.transpose(x_nchw, (0, 2, 3, 1))
    h = jnp.transpose(h_prev_nchw, (0, 2, 3, 1))
    c = jnp.transpose(c_prev_nchw, (0, 2, 3, 1))
    h_next, c_next = conv_lstm_cell_nhwc(x, h, c, w_packed, b2d)
    return (jnp.transpose(h_next.astype(jnp.float32), (0, 3, 1, 2)),
            jnp.transpose(c_next, (0, 3, 1, 2)))


def _reference(x, h_prev, c_prev, weight_oihw, bias):
    """Pure-JAX f32 NCHW reference mirroring the PyTorch module."""
    combined = jnp.concatenate([x, h_prev], axis=1)
    gates = jax.lax.conv_general_dilated(
        combined, weight_oihw, window_strides=(1, 1), padding="SAME",
        dimension_numbers=("NCHW", "OIHW", "NCHW"))
    gates = gates + bias.reshape(1, -1, 1, 1)
    i, f, g, o = jnp.split(gates, 4, axis=1)
    i = jax.nn.sigmoid(i)
    f = jax.nn.sigmoid(f)
    g = jnp.tanh(g)
    o = jax.nn.sigmoid(o)
    c_next = f * c_prev + i * g
    h_next = o * jnp.tanh(c_next)
    return h_next, c_next


if __name__ == "__main__":
    B, Cin, H, W = 2, 4, 16, 16
    hidden_dim = 32
    K = 3
    Ct = Cin + hidden_dim

    key = jax.random.PRNGKey(0)
    kx, kh, kc, kw, kb = jax.random.split(key, 5)

    x = jax.random.normal(kx, (B, Cin, H, W), jnp.float32)
    h_prev = jax.random.normal(kh, (B, hidden_dim, H, W), jnp.float32)
    c_prev = jax.random.normal(kc, (B, hidden_dim, H, W), jnp.float32)

    # Deterministic conv parameters (PyTorch OIHW layout: [4*Ch, Ct, K, K]).
    fan_in = Ct * K * K
    bound = 1.0 / (fan_in ** 0.5)
    weight = jax.random.uniform(kw, (4 * hidden_dim, Ct, K, K), jnp.float32,
                                minval=-bound, maxval=bound)
    bias = jax.random.uniform(kb, (4 * hidden_dim,), jnp.float32,
                              minval=-bound, maxval=bound)

    h_next, c_next = conv_lstm_cell(x, h_prev, c_prev, weight, bias, K)
    jax.block_until_ready((h_next, c_next))

    h_ref, c_ref = _reference(x, h_prev, c_prev, weight, bias)
    # bf16 matmul inputs (and bf16 h writeback) with f32 accumulation:
    # validate against the f32 reference with a loosened but tight tolerance.
    assert jnp.allclose(h_next, h_ref, atol=3e-2, rtol=3e-2), (
        float(jnp.max(jnp.abs(h_next - h_ref))))
    assert jnp.allclose(c_next, c_ref, atol=3e-2, rtol=3e-2), (
        float(jnp.max(jnp.abs(c_next - c_ref))))

    print("KERNEL_OK")
</pallas_src>

<mosaic_0001>
module attributes {stable_mosaic.version = 11 : i64} {
  func.func @_convlstm_kernel(%arg0: i32, %arg1: i32, %arg2: memref<1x18x18x36xbf16, #tpu.memory_space<vmem>>, %arg3: memref<1x16x16x32xf32, #tpu.memory_space<vmem>>, %arg4: memref<3x3x36x128xbf16, #tpu.memory_space<vmem>>, %arg5: memref<1x128xf32, #tpu.memory_space<vmem>>, %arg6: memref<1x16x16x32xbf16, #tpu.memory_space<vmem>>, %arg7: memref<1x16x16x32xf32, #tpu.memory_space<vmem>>, %arg8: memref<256x128xf32, #tpu.memory_space<vmem>>) attributes {dimension_semantics = [#tpu.dimension_semantics<parallel>, #tpu.dimension_semantics<parallel>], iteration_bounds = array<i64: 2, 1>, scalar_prefetch = 0 : i64, scratch_operands = 1 : i64, tpu.core_type = #tpu.core_type<tc>, window_params = [{transform_indices = @transform_0, window_bounds = array<i64: 1, 18, 18, 36>}, {transform_indices = @transform_1, window_bounds = array<i64: 1, 16, 16, 32>}, {pipeline_mode = #tpu.pipeline_mode<synchronous>, transform_indices = @transform_2, window_bounds = array<i64: 3, 3, 36, 128>}, {pipeline_mode = #tpu.pipeline_mode<synchronous>, transform_indices = @transform_3, window_bounds = array<i64: 1, 128>}, {transform_indices = @transform_4, window_bounds = array<i64: 1, 16, 16, 32>}, {transform_indices = @transform_5, window_bounds = array<i64: 1, 16, 16, 32>}]} {
    %c16_i32 = arith.constant 16 : i32
    %0 = arith.muli %arg1, %c16_i32 : i32
    %1 = tpu.assume_multiple %0, 16 : i32
    %c0 = arith.constant 0 : index
    %c0_0 = arith.constant 0 : index
    %2 = vector.load %arg5[%c0, %c0_0] : memref<1x128xf32, #tpu.memory_space<vmem>>, vector<1x128xf32>
    %3 = vector.shape_cast %2 : vector<1x128xf32> to vector<1x128xf32>
    %4 = vector.broadcast %3 : vector<1x128xf32> to vector<256x128xf32>
    %c0_1 = arith.constant 0 : index
    %c0_2 = arith.constant 0 : index
    %5 = vector.load %arg8[%c0_1, %c0_2] : memref<256x128xf32, #tpu.memory_space<vmem>>, vector<256x128xf32>
    tpu.vector_store %arg8[%c0_1, %c0_2], %4 {strides = array<i32>} : memref<256x128xf32, #tpu.memory_space<vmem>>, vector<256x128xf32>,
    %c0_i32 = arith.constant 0 : i32
    %6 = arith.addi %1, %c0_i32 : i32
    %c0_3 = arith.constant 0 : index
    %7 = arith.index_cast %6 : i32 to index
    %c0_4 = arith.constant 0 : index
    %c0_5 = arith.constant 0 : index
    %8 = vector.load %arg2[%c0_3, %7, %c0_4, %c0_5] : memref<1x18x18x36xbf16, #tpu.memory_space<vmem>>, vector<1x16x18x36xbf16>
    %9 = vector.shape_cast %8 : vector<1x16x18x36xbf16> to vector<16x18x36xbf16>
    %10 = vector.extract_strided_slice %9 {offsets = [0, 0, 0], sizes = [16, 16, 36], strides = [1, 1, 1]} : vector<16x18x36xbf16> to vector<16x16x36xbf16>
    %11 = vector.shape_cast %10 : vector<16x16x36xbf16> to vector<256x36xbf16>
    %c0_6 = arith.constant 0 : index
    %c0_7 = arith.constant 0 : index
    %12 = vector.load %arg8[%c0_6, %c0_7] : memref<256x128xf32, #tpu.memory_space<vmem>>, vector<256x128xf32>
    %c0_8 = arith.constant 0 : index
    %c0_9 = arith.constant 0 : index
    %c0_10 = arith.constant 0 : index
    %c0_11 = arith.constant 0 : index
    %13 = vector.load %arg4[%c0_8, %c0_9, %c0_10, %c0_11] : memref<3x3x36x128xbf16, #tpu.memory_space<vmem>>, vector<1x1x36x128xbf16>
    %14 = vector.shape_cast %13 : vector<1x1x36x128xbf16> to vector<36x128xbf16>
    %cst = arith.constant dense<0.000000e+00> : vector<256x128xf32>
    %15 = tpu.matmul %11, %14, %cst {dimension_numbers = #tpu.dot_dimension_numbers<[1], [0], [0], [1], [0, 0, 1, 1], [], []>} : vector<256x36xbf16>, vector<36x128xbf16>, vector<256x128xf32> -> vector<256x128xf32>
    %16 = arith.addf %12, %15 : vector<256x128xf32>
    %c0_12 = arith.constant 0 : index
    %c0_13 = arith.constant 0 : index
    %17 = vector.load %arg8[%c0_12, %c0_13] : memref<256x128xf32, #tpu.memory_space<vmem>>, vector<256x128xf32>
    tpu.vector_store %arg8[%c0_12, %c0_13], %16 {strides = array<i32>} : memref<256x128xf32, #tpu.memory_space<vmem>>, vector<256x128xf32>,
    %18 = vector.extract_strided_slice %9 {offsets = [0, 1, 0], sizes = [16, 16, 36], strides = [1, 1, 1]} : vector<16x18x36xbf16> to vector<16x16x36xbf16>
    %19 = vector.shape_cast %18 : vector<16x16x36xbf16> to vector<256x36xbf16>
    %c0_14 = arith.constant 0 : index
    %c0_15 = arith.constant 0 : index
    %20 = vector.load %arg8[%c0_14, %c0_15] : memref<256x128xf32, #tpu.memory_space<vmem>>, vector<256x128xf32>
    %c0_16 = arith.constant 0 : index
    %c1 = arith.constant 1 : index
    %c0_17 = arith.constant 0 : index
    %c0_18 = arith.constant 0 : index
    %21 = vector.load %arg4[%c0_16, %c1, %c0_17, %c0_18] : memref<3x3x36x128xbf16, #tpu.memory_space<vmem>>, vector<1x1x36x128xbf16>
    %22 = vector.shape_cast %21 : vector<1x1x36x128xbf16> to vector<36x128xbf16>
    %cst_19 = arith.constant dense<0.000000e+00> : vector<256x128xf32>
    %23 = tpu.matmul %19, %22, %cst_19 {dimension_numbers = #tpu.dot_dimension_numbers<[1], [0], [0], [1], [0, 0, 1, 1], [], []>} : vector<256x36xbf16>, vector<36x128xbf16>, vector<256x128xf32> -> vector<256x128xf32>
    %24 = arith.addf %20, %23 : vector<256x128xf32>
    %c0_20 = arith.constant 0 : index
    %c0_21 = arith.constant 0 : index
    %25 = vector.load %arg8[%c0_20, %c0_21] : memref<256x128xf32, #tpu.memory_space<vmem>>, vector<256x128xf32>
    tpu.vector_store %arg8[%c0_20, %c0_21], %24 {strides = array<i32>} : memref<256x128xf32, #tpu.memory_space<vmem>>, vector<256x128xf32>,
    %26 = vector.extract_strided_slice %9 {offsets = [0, 2, 0], sizes = [16, 16, 36], strides = [1, 1, 1]} : vector<16x18x36xbf16> to vector<16x16x36xbf16>
    %27 = vector.shape_cast %26 : vector<16x16x36xbf16> to vector<256x36xbf16>
    %c0_22 = arith.constant 0 : index
    %c0_23 = arith.constant 0 : index
    %28 = vector.load %arg8[%c0_22, %c0_23] : memref<256x128xf32, #tpu.memory_space<vmem>>, vector<256x128xf32>
    %c0_24 = arith.constant 0 : index
    %c2 = arith.constant 2 : index
    %c0_25 = arith.constant 0 : index
    %c0_26 = arith.constant 0 : index
    %29 = vector.load %arg4[%c0_24, %c2, %c0_25, %c0_26] : memref<3x3x36x128xbf16, #tpu.memory_space<vmem>>, vector<1x1x36x128xbf16>
    %30 = vector.shape_cast %29 : vector<1x1x36x128xbf16> to vector<36x128xbf16>
    %cst_27 = arith.constant dense<0.000000e+00> : vector<256x128xf32>
    %31 = tpu.matmul %27, %30, %cst_27 {dimension_numbers = #tpu.dot_dimension_numbers<[1], [0], [0], [1], [0, 0, 1, 1], [], []>} : vector<256x36xbf16>, vector<36x128xbf16>, vector<256x128xf32> -> vector<256x128xf32>
    %32 = arith.addf %28, %31 : vector<256x128xf32>
    %c0_28 = arith.constant 0 : index
    %c0_29 = arith.constant 0 : index
    %33 = vector.load %arg8[%c0_28, %c0_29] : memref<256x128xf32, #tpu.memory_space<vmem>>, vector<256x128xf32>
    tpu.vector_store %arg8[%c0_28, %c0_29], %32 {strides = array<i32>} : memref<256x128xf32, #tpu.memory_space<vmem>>, vector<256x128xf32>,
    %c1_i32 = arith.constant 1 : i32
    %34 = arith.addi %1, %c1_i32 : i32
    %c0_30 = arith.constant 0 : index
    %35 = arith.index_cast %34 : i32 to index
    %c0_31 = arith.constant 0 : index
    %c0_32 = arith.constant 0 : index
    %36 = vector.load %arg2[%c0_30, %35, %c0_31, %c0_32] : memref<1x18x18x36xbf16, #tpu.memory_space<vmem>>, vector<1x16x18x36xbf16>
    %37 = vector.shape_cast %36 : vector<1x16x18x36xbf16> to vector<16x18x36xbf16>
    %38 = vector.extract_strided_slice %37 {offsets = [0, 0, 0], sizes = [16, 16, 36], strides = [1, 1, 1]} : vector<16x18x36xbf16> to vector<16x16x36xbf16>
    %39 = vector.shape_cast %38 : vector<16x16x36xbf16> to vector<256x36xbf16>
    %c0_33 = arith.constant 0 : index
    %c0_34 = arith.constant 0 : index
    %40 = vector.load %arg8[%c0_33, %c0_34] : memref<256x128xf32, #tpu.memory_space<vmem>>, vector<256x128xf32>
    %c1_35 = arith.constant 1 : index
    %c0_36 = arith.constant 0 : index
    %c0_37 = arith.constant 0 : index
    %c0_38 = arith.constant 0 : index
    %41 = vector.load %arg4[%c1_35, %c0_36, %c0_37, %c0_38] : memref<3x3x36x128xbf16, #tpu.memory_space<vmem>>, vector<1x1x36x128xbf16>
    %42 = vector.shape_cast %41 : vector<1x1x36x128xbf16> to vector<36x128xbf16>
    %cst_39 = arith.constant dense<0.000000e+00> : vector<256x128xf32>
    %43 = tpu.matmul %39, %42, %cst_39 {dimension_numbers = #tpu.dot_dimension_numbers<[1], [0], [0], [1], [0, 0, 1, 1], [], []>} : vector<256x36xbf16>, vector<36x128xbf16>, vector<256x128xf32> -> vector<256x128xf32>
    %44 = arith.addf %40, %43 : vector<256x128xf32>
    %c0_40 = arith.constant 0 : index
    %c0_41 = arith.constant 0 : index
    %45 = vector.load %arg8[%c0_40, %c0_41] : memref<256x128xf32, #tpu.memory_space<vmem>>, vector<256x128xf32>
    tpu.vector_store %arg8[%c0_40, %c0_41], %44 {strides = array<i32>} : memref<256x128xf32, #tpu.memory_space<vmem>>, vector<256x128xf32>,
    %46 = vector.extract_strided_slice %37 {offsets = [0, 1, 0], sizes = [16, 16, 36], strides = [1, 1, 1]} : vector<16x18x36xbf16> to vector<16x16x36xbf16>
    %47 = vector.shape_cast %46 : vector<16x16x36xbf16> to vector<256x36xbf16>
    %c0_42 = arith.constant 0 : index
    %c0_43 = arith.constant 0 : index
    %48 = vector.load %arg8[%c0_42, %c0_43] : memref<256x128xf32, #tpu.memory_space<vmem>>, vector<256x128xf32>
    %c1_44 = arith.constant 1 : index
    %c1_45 = arith.constant 1 : index
    %c0_46 = arith.constant 0 : index
    %c0_47 = arith.constant 0 : index
    %49 = vector.load %arg4[%c1_44, %c1_45, %c0_46, %c0_47] : memref<3x3x36x128xbf16, #tpu.memory_space<vmem>>, vector<1x1x36x128xbf16>
    %50 = vector.shape_cast %49 : vector<1x1x36x128xbf16> to vector<36x128xbf16>
    %cst_48 = arith.constant dense<0.000000e+00> : vector<256x128xf32>
    %51 = tpu.matmul %47, %50, %cst_48 {dimension_numbers = #tpu.dot_dimension_numbers<[1], [0], [0], [1], [0, 0, 1, 1], [], []>} : vector<256x36xbf16>, vector<36x128xbf16>, vector<256x128xf32> -> vector<256x128xf32>
    %52 = arith.addf %48, %51 : vector<256x128xf32>
    %c0_49 = arith.constant 0 : index
    %c0_50 = arith.constant 0 : index
    %53 = vector.load %arg8[%c0_49, %c0_50] : memref<256x128xf32, #tpu.memory_space<vmem>>, vector<256x128xf32>
    tpu.vector_store %arg8[%c0_49, %c0_50], %52 {strides = array<i32>} : memref<256x128xf32, #tpu.memory_space<vmem>>, vector<256x128xf32>,
    %54 = vector.extract_strided_slice %37 {offsets = [0, 2, 0], sizes = [16, 16, 36], strides = [1, 1, 1]} : vector<16x18x36xbf16> to vector<16x16x36xbf16>
    %55 = vector.shape_cast %54 : vector<16x16x36xbf16> to vector<256x36xbf16>
    %c0_51 = arith.constant 0 : index
    %c0_52 = arith.constant 0 : index
    %56 = vector.load %arg8[%c0_51, %c0_52] : memref<256x128xf32, #tpu.memory_space<vmem>>, vector<256x128xf32>
    %c1_53 = arith.constant 1 : index
    %c2_54 = arith.constant 2 : index
    %c0_55 = arith.constant 0 : index
    %c0_56 = arith.constant 0 : index
    %57 = vector.load %arg4[%c1_53, %c2_54, %c0_55, %c0_56] : memref<3x3x36x128xbf16, #tpu.memory_space<vmem>>, vector<1x1x36x128xbf16>
    %58 = vector.shape_cast %57 : vector<1x1x36x128xbf16> to vector<36x128xbf16>
    %cst_57 = arith.constant dense<0.000000e+00> : vector<256x128xf32>
    %59 = tpu.matmul %55, %58, %cst_57 {dimension_numbers = #tpu.dot_dimension_numbers<[1], [0], [0], [1], [0, 0, 1, 1], [], []>} : vector<256x36xbf16>, vector<36x128xbf16>, vector<256x128xf32> -> vector<256x128xf32>
    %60 = arith.addf %56, %59 : vector<256x128xf32>
    %c0_58 = arith.constant 0 : index
    %c0_59 = arith.constant 0 : index
    %61 = vector.load %arg8[%c0_58, %c0_59] : memref<256x128xf32, #tpu.memory_space<vmem>>, vector<256x128xf32>
    tpu.vector_store %arg8[%c0_58, %c0_59], %60 {strides = array<i32>} : memref<256x128xf32, #tpu.memory_space<vmem>>, vector<256x128xf32>,
    %c2_i32 = arith.constant 2 : i32
    %62 = arith.addi %1, %c2_i32 : i32
    %c0_60 = arith.constant 0 : index
    %63 = arith.index_cast %62 : i32 to index
    %c0_61 = arith.constant 0 : index
    %c0_62 = arith.constant 0 : index
    %64 = vector.load %arg2[%c0_60, %63, %c0_61, %c0_62] : memref<1x18x18x36xbf16, #tpu.memory_space<vmem>>, vector<1x16x18x36xbf16>
    %65 = vector.shape_cast %64 : vector<1x16x18x36xbf16> to vector<16x18x36xbf16>
    %66 = vector.extract_strided_slice %65 {offsets = [0, 0, 0], sizes = [16, 16, 36], strides = [1, 1, 1]} : vector<16x18x36xbf16> to vector<16x16x36xbf16>
    %67 = vector.shape_cast %66 : vector<16x16x36xbf16> to vector<256x36xbf16>
    %c0_63 = arith.constant 0 : index
    %c0_64 = arith.constant 0 : index
    %68 = vector.load %arg8[%c0_63, %c0_64] : memref<256x128xf32, #tpu.memory_space<vmem>>, vector<256x128xf32>
    %c2_65 = arith.constant 2 : index
    %c0_66 = arith.constant 0 : index
    %c0_67 = arith.constant 0 : index
    %c0_68 = arith.constant 0 : index
    %69 = vector.load %arg4[%c2_65, %c0_66, %c0_67, %c0_68] : memref<3x3x36x128xbf16, #tpu.memory_space<vmem>>, vector<1x1x36x128xbf16>
    %70 = vector.shape_cast %69 : vector<1x1x36x128xbf16> to vector<36x128xbf16>
    %cst_69 = arith.constant dense<0.000000e+00> : vector<256x128xf32>
    %71 = tpu.matmul %67, %70, %cst_69 {dimension_numbers = #tpu.dot_dimension_numbers<[1], [0], [0], [1], [0, 0, 1, 1], [], []>} : vector<256x36xbf16>, vector<36x128xbf16>, vector<256x128xf32> -> vector<256x128xf32>
    %72 = arith.addf %68, %71 : vector<256x128xf32>
    %c0_70 = arith.constant 0 : index
    %c0_71 = arith.constant 0 : index
    %73 = vector.load %arg8[%c0_70, %c0_71] : memref<256x128xf32, #tpu.memory_space<vmem>>, vector<256x128xf32>
    tpu.vector_store %arg8[%c0_70, %c0_71], %72 {strides = array<i32>} : memref<256x128xf32, #tpu.memory_space<vmem>>, vector<256x128xf32>,
    %74 = vector.extract_strided_slice %65 {offsets = [0, 1, 0], sizes = [16, 16, 36], strides = [1, 1, 1]} : vector<16x18x36xbf16> to vector<16x16x36xbf16>
    %75 = vector.shape_cast %74 : vector<16x16x36xbf16> to vector<256x36xbf16>
    %c0_72 = arith.constant 0 : index
    %c0_73 = arith.constant 0 : index
    %76 = vector.load %arg8[%c0_72, %c0_73] : memref<256x128xf32, #tpu.memory_space<vmem>>, vector<256x128xf32>
    %c2_74 = arith.constant 2 : index
    %c1_75 = arith.constant 1 : index
    %c0_76 = arith.constant 0 : index
    %c0_77 = arith.constant 0 : index
    %77 = vector.load %arg4[%c2_74, %c1_75, %c0_76, %c0_77] : memref<3x3x36x128xbf16, #tpu.memory_space<vmem>>, vector<1x1x36x128xbf16>
    %78 = vector.shape_cast %77 : vector<1x1x36x128xbf16> to vector<36x128xbf16>
    %cst_78 = arith.constant dense<0.000000e+00> : vector<256x128xf32>
    %79 = tpu.matmul %75, %78, %cst_78 {dimension_numbers = #tpu.dot_dimension_numbers<[1], [0], [0], [1], [0, 0, 1, 1], [], []>} : vector<256x36xbf16>, vector<36x128xbf16>, vector<256x128xf32> -> vector<256x128xf32>
    %80 = arith.addf %76, %79 : vector<256x128xf32>
    %c0_79 = arith.constant 0 : index
    %c0_80 = arith.constant 0 : index
    %81 = vector.load %arg8[%c0_79, %c0_80] : memref<256x128xf32, #tpu.memory_space<vmem>>, vector<256x128xf32>
    tpu.vector_store %arg8[%c0_79, %c0_80], %80 {strides = array<i32>} : memref<256x128xf32, #tpu.memory_space<vmem>>, vector<256x128xf32>,
    %82 = vector.extract_strided_slice %65 {offsets = [0, 2, 0], sizes = [16, 16, 36], strides = [1, 1, 1]} : vector<16x18x36xbf16> to vector<16x16x36xbf16>
    %83 = vector.shape_cast %82 : vector<16x16x36xbf16> to vector<256x36xbf16>
    %c0_81 = arith.constant 0 : index
    %c0_82 = arith.constant 0 : index
    %84 = vector.load %arg8[%c0_81, %c0_82] : memref<256x128xf32, #tpu.memory_space<vmem>>, vector<256x128xf32>
    %c2_83 = arith.constant 2 : index
    %c2_84 = arith.constant 2 : index
    %c0_85 = arith.constant 0 : index
    %c0_86 = arith.constant 0 : index
    %85 = vector.load %arg4[%c2_83, %c2_84, %c0_85, %c0_86] : memref<3x3x36x128xbf16, #tpu.memory_space<vmem>>, vector<1x1x36x128xbf16>
    %86 = vector.shape_cast %85 : vector<1x1x36x128xbf16> to vector<36x128xbf16>
    %cst_87 = arith.constant dense<0.000000e+00> : vector<256x128xf32>
    %87 = tpu.matmul %83, %86, %cst_87 {dimension_numbers = #tpu.dot_dimension_numbers<[1], [0], [0], [1], [0, 0, 1, 1], [], []>} : vector<256x36xbf16>, vector<36x128xbf16>, vector<256x128xf32> -> vector<256x128xf32>
    %88 = arith.addf %84, %87 : vector<256x128xf32>
    %c0_88 = arith.constant 0 : index
    %c0_89 = arith.constant 0 : index
    %89 = vector.load %arg8[%c0_88, %c0_89] : memref<256x128xf32, #tpu.memory_space<vmem>>, vector<256x128xf32>
    tpu.vector_store %arg8[%c0_88, %c0_89], %88 {strides = array<i32>} : memref<256x128xf32, #tpu.memory_space<vmem>>, vector<256x128xf32>,
    %c0_90 = arith.constant 0 : index
    %c0_91 = arith.constant 0 : index
    %90 = vector.load %arg8[%c0_90, %c0_91] : memref<256x128xf32, #tpu.memory_space<vmem>>, vector<256x128xf32>
    %91 = arith.negf %90 : vector<256x128xf32>
    %92 = math.exp %91 : vector<256x128xf32>
    %cst_92 = arith.constant 1.000000e+00 : f32
    %93 = vector.broadcast %cst_92 : f32 to vector<256x128xf32>
    %94 = arith.addf %93, %92 : vector<256x128xf32>
    %95 = arith.divf %93, %94 : vector<256x128xf32>
    %96 = math.tanh %90 : vector<256x128xf32>
    %97 = vector.extract_strided_slice %95 {offsets = [0, 0], sizes = [256, 32], strides = [1, 1]} : vector<256x128xf32> to vector<256x32xf32>
    %98 = vector.extract_strided_slice %95 {offsets = [0, 32], sizes = [256, 32], strides = [1, 1]} : vector<256x128xf32> to vector<256x32xf32>
    %99 = vector.extract_strided_slice %96 {offsets = [0, 64], sizes = [256, 32], strides = [1, 1]} : vector<256x128xf32> to vector<256x32xf32>
    %100 = vector.extract_strided_slice %95 {offsets = [0, 96], sizes = [256, 32], strides = [1, 1]} : vector<256x128xf32> to vector<256x32xf32>
    %c0_93 = arith.constant 0 : index
    %c0_94 = arith.constant 0 : index
    %c0_95 = arith.constant 0 : index
    %c0_96 = arith.constant 0 : index
    %101 = vector.load %arg3[%c0_93, %c0_94, %c0_95, %c0_96] : memref<1x16x16x32xf32, #tpu.memory_space<vmem>>, vector<1x16x16x32xf32>
    %102 = vector.shape_cast %101 : vector<1x16x16x32xf32> to vector<16x16x32xf32>
    %103 = vector.shape_cast %102 : vector<16x16x32xf32> to vector<256x32xf32>
    %104 = arith.mulf %98, %103 : vector<256x32xf32>
    %105 = arith.mulf %97, %99 : vector<256x32xf32>
    %106 = arith.addf %104, %105 : vector<256x32xf32>
    %107 = math.tanh %106 : vector<256x32xf32>
    %108 = arith.mulf %100, %107 : vector<256x32xf32>
    %109 = vector.shape_cast %108 : vector<256x32xf32> to vector<16x16x32xf32>
    %110 = arith.truncf %109 : vector<16x16x32xf32> to vector<16x16x32xbf16>
    %c0_97 = arith.constant 0 : index
    %c0_98 = arith.constant 0 : index
    %c0_99 = arith.constant 0 : index
    %c0_100 = arith.constant 0 : index
    %111 = vector.load %arg6[%c0_97, %c0_98, %c0_99, %c0_100] : memref<1x16x16x32xbf16, #tpu.memory_space<vmem>>, vector<1x16x16x32xbf16>
    %112 = vector.shape_cast %111 : vector<1x16x16x32xbf16> to vector<16x16x32xbf16>
    %113 = vector.shape_cast %110 : vector<16x16x32xbf16> to vector<1x16x16x32xbf16>
    tpu.vector_store %arg6[%c0_97, %c0_98, %c0_99, %c0_100], %113 {strides = array<i32>} : memref<1x16x16x32xbf16, #tpu.memory_space<vmem>>, vector<1x16x16x32xbf16>,
    %114 = vector.shape_cast %106 : vector<256x32xf32> to vector<16x16x32xf32>
    %c0_101 = arith.constant 0 : index
    %c0_102 = arith.constant 0 : index
    %c0_103 = arith.constant 0 : index
    %c0_104 = arith.constant 0 : index
    %115 = vector.load %arg7[%c0_101, %c0_102, %c0_103, %c0_104] : memref<1x16x16x32xf32, #tpu.memory_space<vmem>>, vector<1x16x16x32xf32>
    %116 = vector.shape_cast %115 : vector<1x16x16x32xf32> to vector<16x16x32xf32>
    %117 = vector.shape_cast %114 : vector<16x16x32xf32> to vector<1x16x16x32xf32>
    tpu.vector_store %arg7[%c0_101, %c0_102, %c0_103, %c0_104], %117 {strides = array<i32>} : memref<1x16x16x32xf32, #tpu.memory_space<vmem>>, vector<1x16x16x32xf32>,
    return
  }
  func.func @transform_0(%arg0: i32, %arg1: i32) -> (i32, i32, i32, i32) {
    %c0_i32 = arith.constant 0 : i32
    %c0_i32_0 = arith.constant 0 : i32
    %c0_i32_1 = arith.constant 0 : i32
    %c0_i32_2 = arith.constant 0 : i32
    return %arg0, %c0_i32, %c0_i32_0, %c0_i32_1 : i32, i32, i32, i32
  }
  func.func @transform_1(%arg0: i32, %arg1: i32) -> (i32, i32, i32, i32) {
    %c0_i32 = arith.constant 0 : i32
    %c0_i32_0 = arith.constant 0 : i32
    %c0_i32_1 = arith.constant 0 : i32
    return %arg0, %arg1, %c0_i32, %c0_i32_0 : i32, i32, i32, i32
  }
  func.func @transform_2(%arg0: i32, %arg1: i32) -> (i32, i32, i32, i32) {
    %c0_i32 = arith.constant 0 : i32
    %c0_i32_0 = arith.constant 0 : i32
    %c0_i32_1 = arith.constant 0 : i32
    %c0_i32_2 = arith.constant 0 : i32
    %c0_i32_3 = arith.constant 0 : i32
    return %c0_i32, %c0_i32_0, %c0_i32_1, %c0_i32_2 : i32, i32, i32, i32
  }
  func.func @transform_3(%arg0: i32, %arg1: i32) -> (i32, i32) {
    %c0_i32 = arith.constant 0 : i32
    %c0_i32_0 = arith.constant 0 : i32
    %c0_i32_1 = arith.constant 0 : i32
    return %c0_i32, %c0_i32_0 : i32, i32
  }
  func.func @transform_4(%arg0: i32, %arg1: i32) -> (i32, i32, i32, i32) {
    %c0_i32 = arith.constant 0 : i32
    %c0_i32_0 = arith.constant 0 : i32
    %c0_i32_1 = arith.constant 0 : i32
    return %arg0, %arg1, %c0_i32, %c0_i32_0 : i32, i32, i32, i32
  }
  func.func @transform_5(%arg0: i32, %arg1: i32) -> (i32, i32, i32, i32) {
    %c0_i32 = arith.constant 0 : i32
    %c0_i32_0 = arith.constant 0 : i32
    %c0_i32_1 = arith.constant 0 : i32
    return %arg0, %arg1, %c0_i32, %c0_i32_0 : i32, i32, i32, i32
  }
}

</mosaic_0001>

<llo_original>
// kernel: tpu_custom_call.1
$region0: #{tpu_custom_call.1}
  #allocation0 [shape = 'u32[]', space=smem, size = 0x4, offset = 0x4, fixed_abs, tag = 'smem constant byte address 0x4 - core index']
  #allocation1 [shape = 'u32[144,128]{1,0:T(1,128)}', space=vmem, size = 0x12000, scoped, tag = 'internal scratch']
  #allocation2 [shape = 'f32[256,128]{1,0:T(8,128)}', space=vmem, size = 0x20000, scoped, tag = 'scratch operand']
  %s0 = inlined_call_operand.vmem [shape: bf16[2,18,18,36], index: 0, kind: input, shape index: {}]
  %s1 = inlined_call_operand.vmem [shape: f32[2,16,16,32], index: 1, kind: input, shape index: {}]
  %s2 = inlined_call_operand.vmem [shape: bf16[3,3,36,128], index: 2, kind: input, shape index: {}]
  %s3 = inlined_call_operand.vmem [shape: f32[1,128], index: 3, kind: input, shape index: {}]
  %s4 = inlined_call_operand.hbm [shape: bf16[2,16,16,32], index: 4, kind: output, shape index: {0}]
  %s5 = inlined_call_operand.hbm [shape: f32[2,16,16,32], index: 5, kind: output, shape index: {1}]
  %6 = xla_tuple %s4, %s5
  %s7 = sld [smem:[#allocation0]]
  $region57: #{tpu_custom_call.1} parent=0
    _
  %s9 = ssub.s32 1, %s7
  %s10 = scalar_select 0, %s9, %s7
  $region1: #{tpu_custom_call.1} parent=0
    #allocation3 [shape = 'u8[131072]{0}', space=vmem, size = 0x20000, scoped, tag = 'output window, operand 0']
    #allocation4 [shape = 's32[2]{0}', space=sflag, size = 0x8, scoped, tag = 'scoped memory for tpu_custom_call.1']
    #allocation5 [shape = 'u8[262144]{0}', space=vmem, size = 0x40000, scoped, tag = 'output window, operand 1']
    #allocation6 [shape = 's32[2]{0}', space=sflag, size = 0x8, scoped, tag = 'scoped memory for tpu_custom_call.1']
    %11 = vsyncpa [#allocation4], 0
    %s12 = scalar_lea.sflag [#allocation4], 1
    %13 = vsyncpa %s12, 0
    %14 = vsyncpa [#allocation6], 0
    %s15 = scalar_lea.sflag [#allocation6], 1
    %16 = vsyncpa %s15, 0
    loop: start=0, step=1, limit=4
    $region2: #{tpu_custom_call.1} parent=1 // loop_pre_header
      _
    $region3: #{tpu_custom_call.1} parent=1 // loop_header
      %s18 = sphi 0, %s22
      %p19 = scmp.ge.s32.totalorder %s18, 4
      %s25 = sphi 0, %s37
      %s26 = sphi 0, %s33
      %s27 = sphi 0, %s25
      %s28 = sphi 0, %s26
      %s29 = sphi 0, %s27
      %s30 = sphi 0, %s28
      %s40 = sphi 0, %s42
      %s43 = sphi 0, %s40
      %s44 = sphi 0, %s43
      %s60 = sphi 0, %s44
      %s68 = sphi 0, %s70
      %s71 = sphi 0, %s68
      %s72 = sphi 0, %s71
      %s88 = sphi 0, %s72
      %s92 = sphi 0, %s92
      %s94 = sphi 0, %s92
      %s95 = sphi 0, %s94
      %s109 = sphi 0, %s95
      %s113 = sphi 0, %s113
      %s115 = sphi 0, %s113
      %s116 = sphi 0, %s115
      %s130 = sphi 0, %s116
      %s138 = sphi 0, %s140
      %s141 = sphi 0, %s138
      %s142 = sphi 0, %s141
      %s158 = sphi 0, %s142
      %s166 = sphi 0, %s168
      %s169 = sphi 0, %s166
      %s170 = sphi 0, %s169
      %s186 = sphi 0, %s170
    $region4: #{tpu_custom_call.1} parent=1 // loop_header_branch
      %21 = sbr.rel (%p19) target = $region8
    $region5: #{tpu_custom_call.1} parent=1 // loop_body
      %s23 = ssub.s32 %s18, 1
      %s24 = ssub.s32 %s18, 2
      %s31 = sadd.s32 1, %s26
      %p32 = scmp.ge.s32.totalorder %s31, 1
      %s33 = scalar_select %p32, 0, %s31
      %s34 = sadd.s32 1, %s25
      %s35 = scalar_select %p32, %s34, %s25
      %p36 = scmp.ge.s32.totalorder %s35, 2
      %s37 = scalar_select %p36, 0, %s35
      %s38 = ssub.s32 %s25, %s37
      %p39 = scmp.eq.s32.totalorder %s38, 0
      %s41 = sadd.s32 %s40, 1
      %s42 = scalar_select %p39, %s40, %s41
      %p45 = pneg %p39
      %p46 = scmp.eq.s32.totalorder %s18, 1
      %p47 = por %p45, %p46
      %p48 = scmp.ne.s32.totalorder %s40, %s43
      %p49 = scmp.eq.s32.totalorder %s18, 0
      %p50 = por %p48, %p49
      %p51 = scmp.ne.s32.totalorder %s40, %s43
      %p52 = scmp.eq.s32.totalorder %s23, 1
      %p53 = por %p51, %p52
      %p54 = scmp.ne.s32.totalorder %s43, %s44
      %p55 = scmp.eq.s32.totalorder %s23, 0
      %p56 = por %p54, %p55
      %p57 = scmp.ne.s32.totalorder %s43, %s44
      %p58 = scmp.eq.s32.totalorder %s24, 1
      %p59 = por %p57, %p58
      %p61 = scmp.ne.s32.totalorder %s44, %s60
      %p62 = scmp.eq.s32.totalorder %s24, 0
      %p63 = por %p61, %p62
      %s64 = ssub.s32 %s25, %s37
      %s65 = ssub.s32 %s26, %s33
      %s66 = sor.u32 %s64, %s65
      %p67 = scmp.eq.s32.totalorder %s66, 0
      %s69 = sadd.s32 %s68, 1
      %s70 = scalar_select %p67, %s68, %s69
      %p73 = pneg %p67
      %p74 = scmp.eq.s32.totalorder %s18, 1
      %p75 = por %p73, %p74
      %p76 = scmp.ne.s32.totalorder %s68, %s71
      %p77 = scmp.eq.s32.totalorder %s18, 0
      %p78 = por %p76, %p77
      %p79 = scmp.ne.s32.totalorder %s68, %s71
      %p80 = scmp.eq.s32.totalorder %s23, 1
      %p81 = por %p79, %p80
      %p82 = scmp.ne.s32.totalorder %s71, %s72
      %p83 = scmp.eq.s32.totalorder %s23, 0
      %p84 = por %p82, %p83
      %p85 = scmp.ne.s32.totalorder %s71, %s72
      %p86 = scmp.eq.s32.totalorder %s24, 1
      %p87 = por %p85, %p86
      %p89 = scmp.ne.s32.totalorder %s72, %s88
      %p90 = scmp.eq.s32.totalorder %s24, 0
      %p91 = por %p89, %p90
      %s93 = sadd.s32 %s92, 1
      %p96 = scmp.eq.s32.totalorder %s18, 1
      %p97 = scmp.ne.s32.totalorder %s92, %s94
      %p98 = scmp.eq.s32.totalorder %s18, 0
      %p99 = por %p97, %p98
      %p100 = scmp.ne.s32.totalorder %s92, %s94
      %p101 = scmp.eq.s32.totalorder %s23, 1
      %p102 = por %p100, %p101
      %p103 = scmp.ne.s32.totalorder %s94, %s95
      %p104 = scmp.eq.s32.totalorder %s23, 0
      %p105 = por %p103, %p104
      %p106 = scmp.ne.s32.totalorder %s94, %s95
      %p107 = scmp.eq.s32.totalorder %s24, 1
      %p108 = por %p106, %p107
      %p110 = scmp.ne.s32.totalorder %s95, %s109
      %p111 = scmp.eq.s32.totalorder %s24, 0
      %p112 = por %p110, %p111
      %s114 = sadd.s32 %s113, 1
      %p117 = scmp.eq.s32.totalorder %s18, 1
      %p118 = scmp.ne.s32.totalorder %s113, %s115
      %p119 = scmp.eq.s32.totalorder %s18, 0
      %p120 = por %p118, %p119
      %p121 = scmp.ne.s32.totalorder %s113, %s115
      %p122 = scmp.eq.s32.totalorder %s23, 1
      %p123 = por %p121, %p122
      %p124 = scmp.ne.s32.totalorder %s115, %s116
      %p125 = scmp.eq.s32.totalorder %s23, 0
      %p126 = por %p124, %p125
      %p127 = scmp.ne.s32.totalorder %s115, %s116
      %p128 = scmp.eq.s32.totalorder %s24, 1
      %p129 = por %p127, %p128
      %p131 = scmp.ne.s32.totalorder %s116, %s130
      %p132 = scmp.eq.s32.totalorder %s24, 0
      %p133 = por %p131, %p132
      %s134 = ssub.s32 %s25, %s37
      %s135 = ssub.s32 %s26, %s33
      %s136 = sor.u32 %s134, %s135
      %p137 = scmp.eq.s32.totalorder %s136, 0
      %s139 = sadd.s32 %s138, 1
      %s140 = scalar_select %p137, %s138, %s139
      %p143 = pneg %p137
      %p144 = scmp.eq.s32.totalorder %s18, 1
      %p145 = por %p143, %p144
      %p146 = scmp.ne.s32.totalorder %s138, %s141
      %p147 = scmp.eq.s32.totalorder %s18, 0
      %p148 = por %p146, %p147
      %p149 = scmp.ne.s32.totalorder %s138, %s141
      %p150 = scmp.eq.s32.totalorder %s23, 1
      %p151 = por %p149, %p150
      %p152 = scmp.ne.s32.totalorder %s141, %s142
      %p153 = scmp.eq.s32.totalorder %s23, 0
      %p154 = por %p152, %p153
      %p155 = scmp.ne.s32.totalorder %s141, %s142
      %p156 = scmp.eq.s32.totalorder %s24, 1
      %p157 = por %p155, %p156
      %p159 = scmp.ne.s32.totalorder %s142, %s158
      %p160 = scmp.eq.s32.totalorder %s24, 0
      %p161 = por %p159, %p160
      %s162 = ssub.s32 %s25, %s37
      %s163 = ssub.s32 %s26, %s33
      %s164 = sor.u32 %s162, %s163
      %p165 = scmp.eq.s32.totalorder %s164, 0
      %s167 = sadd.s32 %s166, 1
      %s168 = scalar_select %p165, %s166, %s167
      %p171 = pneg %p165
      %p172 = scmp.eq.s32.totalorder %s18, 1
      %p173 = por %p171, %p172
      %p174 = scmp.ne.s32.totalorder %s166, %s169
      %p175 = scmp.eq.s32.totalorder %s18, 0
      %p176 = por %p174, %p175
      %p177 = scmp.ne.s32.totalorder %s166, %s169
      %p178 = scmp.eq.s32.totalorder %s23, 1
      %p179 = por %p177, %p178
      %p180 = scmp.ne.s32.totalorder %s169, %s170
      %p181 = scmp.eq.s32.totalorder %s23, 0
      %p182 = por %p180, %p181
      %p183 = scmp.ne.s32.totalorder %s169, %s170
      %p184 = scmp.eq.s32.totalorder %s24, 1
      %p185 = por %p183, %p184
      %p187 = scmp.ne.s32.totalorder %s170, %s186
      %p188 = scmp.eq.s32.totalorder %s24, 0
      %p189 = por %p187, %p188
      %p190 = scmp.le.s32.totalorder 1, %s18
      %p191 = scmp.lt.s32.totalorder %s18, 3
      %p192 = pnand %p190, %p191
      %p193 = pneg %p192
      // Predicated region
      $region9: #{tpu_custom_call.1} parent=5 // pred_check
        _
      $region10: #{tpu_custom_call.1} parent=5 // pred_check_branch
        %195 = sbr.rel (%p192) target = $region12
      $region11: #{tpu_custom_call.1} parent=5 // pred_region
        %s196 = ssub.s32 %s18, 1
        // Predicated region
        $region13: #{tpu_custom_call.1} parent=11 // pred_check
          %p197 = pneg %p105
        $region14: #{tpu_custom_call.1} parent=11 // pred_check_branch
          %199 = sbr.rel (%p197) target = $region16
        $region15: #{tpu_custom_call.1} parent=11 // pred_region
          _
        $region16: #{tpu_custom_call.1} parent=11 // pred_fallthru
          _
        // Predicated region
        $region17: #{tpu_custom_call.1} parent=11 // pred_check
          %p200 = pneg %p126
        $region18: #{tpu_custom_call.1} parent=11 // pred_check_branch
          %202 = sbr.rel (%p200) target = $region20
        $region19: #{tpu_custom_call.1} parent=11 // pred_region
          _
        $region20: #{tpu_custom_call.1} parent=11 // pred_fallthru
          _
      $region12: #{tpu_custom_call.1} parent=5 // pred_fallthru
        _
      %p203 = scmp.lt.s32.totalorder %s18, 2
      // Predicated region
      $region21: #{tpu_custom_call.1} parent=5 // pred_check
        %p204 = pneg %p203
      $region22: #{tpu_custom_call.1} parent=5 // pred_check_branch
        %206 = sbr.rel (%p204) target = $region24
      $region23: #{tpu_custom_call.1} parent=5 // pred_region
        // Predicated region
        $region25: #{tpu_custom_call.1} parent=23 // pred_check
          %p207 = pneg %p50
        $region26: #{tpu_custom_call.1} parent=23 // pred_check_branch
          %209 = sbr.rel (%p207) target = $region28
        $region27: #{tpu_custom_call.1} parent=23 // pred_region
          %p210 = scmp.lt.s32.totalorder %s25, 1
          %s211 = scalar_select %p210, %s25, 1
          %s212 = smul.addr %s211, 54
          %s213 = smul.addr %s212, 4
          %s214 = scalar_lea.vmem %s0, %s213
        $region28: #{tpu_custom_call.1} parent=23 // pred_fallthru
          _
        // Predicated region
        $region29: #{tpu_custom_call.1} parent=23 // pred_check
          %p215 = pneg %p78
        $region30: #{tpu_custom_call.1} parent=23 // pred_check_branch
          %217 = sbr.rel (%p215) target = $region32
        $region31: #{tpu_custom_call.1} parent=23 // pred_region
          %s218 = smul.u32 16, %s26
          %p219 = scmp.lt.s32.totalorder %s25, 1
          %s220 = scalar_select %p219, %s25, 1
          %p221 = scmp.lt.s32.totalorder %s218, 15
          %s222 = scalar_select %p221, %s218, 15
          %s223 = smul.addr %s222, 2
          %s224 = smul.addr %s220, 32
          %s225 = sadd.s32 %s223, %s224
          %s226 = smul.addr %s225, 8
          %s227 = scalar_lea.vmem %s1, %s226
          %s228 = smul.u32 16, %s26
        $region32: #{tpu_custom_call.1} parent=23 // pred_fallthru
          _
      $region24: #{tpu_custom_call.1} parent=5 // pred_fallthru
        _
      %p229 = scmp.le.s32.totalorder 1, %s18
      %p230 = scmp.lt.s32.totalorder %s18, 3
      %p231 = pnand %p229, %p230
      %p232 = pneg %p231
      // Predicated region
      $region33: #{tpu_custom_call.1} parent=5 // pred_check
        _
      $region34: #{tpu_custom_call.1} parent=5 // pred_check_branch
        %234 = sbr.rel (%p231) target = $region36
      $region35: #{tpu_custom_call.1} parent=5 // pred_region
        %s235 = ssub.s32 %s18, 1
        %p236 = scmp.lt.s32.totalorder %s27, 1
        %s237 = scalar_select %p236, %s27, 1
        %s238 = smul.addr %s237, 54
        %s239 = smul.addr %s238, 4
        %s240 = scalar_lea.vmem %s0, %s239
        %p241 = pneg %p56
        %p242 = pneg %p53
        %s243 = smul.u32 16, %s28
        %p244 = scmp.lt.s32.totalorder %s27, 1
        %s245 = scalar_select %p244, %s27, 1
        %p246 = scmp.lt.s32.totalorder %s243, 15
        %s247 = scalar_select %p246, %s243, 15
        %s248 = smul.addr %s247, 2
        %s249 = smul.addr %s245, 32
        %s250 = sadd.s32 %s248, %s249
        %s251 = smul.addr %s250, 8
        %s252 = scalar_lea.vmem %s1, %s251
        %p253 = pneg %p84
        %p254 = pneg %p81
        %p255 = pneg %p105
        %p256 = pneg %p102
        %p257 = pneg %p126
        %p258 = pneg %p123
        %p259 = pneg %p154
        %p260 = pneg %p151
        %s261 = sand.u32 %s141, 1
        %s262 = scalar_lea.sflag [#allocation4], %s261
        %s263 = sand.u32 %s141, 1
        %s264 = smul.addr %s263, 128
        %s265 = scalar_lea.vmem [#allocation3], %s264
        %p266 = pneg %p182
        %p267 = pneg %p179
        %s268 = sand.u32 %s169, 1
        %s269 = scalar_lea.sflag [#allocation6], %s268
        %s270 = sand.u32 %s169, 1
        %s271 = smul.addr %s270, 256
        %s272 = scalar_lea.vmem [#allocation5], %s271
        %p273 = scmp.lt.s32.totalorder %s27, 1
        %s274 = scalar_select %p273, %s27, 1
        %s275 = smul.addr %s274, 54
        %s276 = smul.addr %s275, 4
        %s277 = scalar_lea.vmem %s0, %s276
        %s278 = smul.u32 16, %s28
        %p279 = scmp.lt.s32.totalorder %s27, 1
        %s280 = scalar_select %p279, %s27, 1
        %p281 = scmp.lt.s32.totalorder %s278, 15
        %s282 = scalar_select %p281, %s278, 15
        %s283 = smul.addr %s282, 2
        %s284 = smul.addr %s280, 32
        %s285 = sadd.s32 %s283, %s284
        %s286 = smul.addr %s285, 8
        %s287 = scalar_lea.vmem %s1, %s286
        %s288 = smul.u32 16, %s28
        %s289 = smul.u32 16, %s28
        %s290 = smul.u32 16, %s28
        %s292 = smul.u32 %s28, 16
        %v293 = vld [vmem:[%s3] sm:$0x1]
        %v295 = vlaneseq
        %v296 = vshrl.u32 %v295, 7
        %v297 = vsub.s32 0, %v296
        %v298 = vrot.slane %v293, %v297
        %300 = vst [vmem:[#allocation2] sm:$0xff] %v298
        %301 = vst [vmem:[#allocation2 + $0x8] sm:$0xff] %v298
        %302 = vst [vmem:[#allocation2 + $0x10] sm:$0xff] %v298
        %303 = vst [vmem:[#allocation2 + $0x18] sm:$0xff] %v298
        %304 = vst [vmem:[#allocation2 + $0x20] sm:$0xff] %v298
        %305 = vst [vmem:[#allocation2 + $0x28] sm:$0xff] %v298
        %306 = vst [vmem:[#allocation2 + $0x30] sm:$0xff] %v298
        %307 = vst [vmem:[#allocation2 + $0x38] sm:$0xff] %v298
        %308 = vst [vmem:[#allocation2 + $0x40] sm:$0xff] %v298
        %309 = vst [vmem:[#allocation2 + $0x48] sm:$0xff] %v298
        %310 = vst [vmem:[#allocation2 + $0x50] sm:$0xff] %v298
        %311 = vst [vmem:[#allocation2 + $0x58] sm:$0xff] %v298
        %312 = vst [vmem:[#allocation2 + $0x60] sm:$0xff] %v298
        %313 = vst [vmem:[#allocation2 + $0x68] sm:$0xff] %v298
        %314 = vst [vmem:[#allocation2 + $0x70] sm:$0xff] %v298
        %315 = vst [vmem:[#allocation2 + $0x78] sm:$0xff] %v298
        %316 = vst [vmem:[#allocation2 + $0x80] sm:$0xff] %v298
        %317 = vst [vmem:[#allocation2 + $0x88] sm:$0xff] %v298
        %318 = vst [vmem:[#allocation2 + $0x90] sm:$0xff] %v298
        %319 = vst [vmem:[#allocation2 + $0x98] sm:$0xff] %v298
        %320 = vst [vmem:[#allocation2 + $0xa0] sm:$0xff] %v298
        %321 = vst [vmem:[#allocation2 + $0xa8] sm:$0xff] %v298
        %322 = vst [vmem:[#allocation2 + $0xb0] sm:$0xff] %v298
        %323 = vst [vmem:[#allocation2 + $0xb8] sm:$0xff] %v298
        %324 = vst [vmem:[#allocation2 + $0xc0] sm:$0xff] %v298
        %325 = vst [vmem:[#allocation2 + $0xc8] sm:$0xff] %v298
        %326 = vst [vmem:[#allocation2 + $0xd0] sm:$0xff] %v298
        %327 = vst [vmem:[#allocation2 + $0xd8] sm:$0xff] %v298
        %328 = vst [vmem:[#allocation2 + $0xe0] sm:$0xff] %v298
        %329 = vst [vmem:[#allocation2 + $0xe8] sm:$0xff] %v298
        %330 = vst [vmem:[#allocation2 + $0xf0] sm:$0xff] %v298
        %331 = vst [vmem:[#allocation2 + $0xf8] sm:$0xff] %v298
        %s332 = smul.u32 %s292, 3
        %s333 = smul.addr %s332, 4
        %s334 = scalar_lea.vmem %s277, %s333
        %v335 = vld [vmem:[%s334] sm:$0xf]
        %v336 = vld [vmem:[%s334 + $0x4] sm:$0xf]
        %v337 = vld [vmem:[%s334 + $0x8] sm:$0x1]
        %v338 = vld [vmem:[%s334 + $0xc] sm:$0xf]
        %v339 = vld [vmem:[%s334 + $0x10] sm:$0xf]
        %v340 = vld [vmem:[%s334 + $0x14] sm:$0x1]
        %v341 = vld [vmem:[%s334 + $0x18] sm:$0xf]
        %v342 = vld [vmem:[%s334 + $0x1c] sm:$0xf]
        %v343 = vld [vmem:[%s334 + $0x20] sm:$0x1]
        %v344 = vld [vmem:[%s334 + $0x24] sm:$0xf]
        %v345 = vld [vmem:[%s334 + $0x28] sm:$0xf]
        %v346 = vld [vmem:[%s334 + $0x2c] sm:$0x1]
        %v347 = vld [vmem:[%s334 + $0x30] sm:$0xf]
        %v348 = vld [vmem:[%s334 + $0x34] sm:$0xf]
        %v349 = vld [vmem:[%s334 + $0x38] sm:$0x1]
        %v350 = vld [vmem:[%s334 + $0x3c] sm:$0xf]
        %v351 = vld [vmem:[%s334 + $0x40] sm:$0xf]
        %v352 = vld [vmem:[%s334 + $0x44] sm:$0x1]
        %v353 = vld [vmem:[%s334 + $0x48] sm:$0xf]
        %v354 = vld [vmem:[%s334 + $0x4c] sm:$0xf]
        %v355 = vld [vmem:[%s334 + $0x50] sm:$0x1]
        %v356 = vld [vmem:[%s334 + $0x54] sm:$0xf]
        %v357 = vld [vmem:[%s334 + $0x58] sm:$0xf]
        %v358 = vld [vmem:[%s334 + $0x5c] sm:$0x1]
        %v359 = vld [vmem:[%s334 + $0x60] sm:$0xf]
        %v360 = vld [vmem:[%s334 + $0x64] sm:$0xf]
        %v361 = vld [vmem:[%s334 + $0x68] sm:$0x1]
        %v362 = vld [vmem:[%s334 + $0x6c] sm:$0xf]
        %v363 = vld [vmem:[%s334 + $0x70] sm:$0xf]
        %v364 = vld [vmem:[%s334 + $0x74] sm:$0x1]
        %v365 = vld [vmem:[%s334 + $0x78] sm:$0xf]
        %v366 = vld [vmem:[%s334 + $0x7c] sm:$0xf]
        %v367 = vld [vmem:[%s334 + $0x80] sm:$0x1]
        %v368 = vld [vmem:[%s334 + $0x84] sm:$0xf]
        %v369 = vld [vmem:[%s334 + $0x88] sm:$0xf]
        %v370 = vld [vmem:[%s334 + $0x8c] sm:$0x1]
        %v371 = vld [vmem:[%s334 + $0x90] sm:$0xf]
        %v372 = vld [vmem:[%s334 + $0x94] sm:$0xf]
        %v373 = vld [vmem:[%s334 + $0x98] sm:$0x1]
        %v374 = vld [vmem:[%s334 + $0x9c] sm:$0xf]
        %v375 = vld [vmem:[%s334 + $0xa0] sm:$0xf]
        %v376 = vld [vmem:[%s334 + $0xa4] sm:$0x1]
        %v377 = vld [vmem:[%s334 + $0xa8] sm:$0xf]
        %v378 = vld [vmem:[%s334 + $0xac] sm:$0xf]
        %v379 = vld [vmem:[%s334 + $0xb0] sm:$0x1]
        %v380 = vld [vmem:[%s334 + $0xb4] sm:$0xf]
        %v381 = vld [vmem:[%s334 + $0xb8] sm:$0xf]
        %v382 = vld [vmem:[%s334 + $0xbc] sm:$0x1]
        %v383 = vld [vmem:[#allocation2] sm:$0xff]
        %v384 = vld [vmem:[#allocation2 + $0x8] sm:$0xff]
        %v385 = vld [vmem:[#allocation2 + $0x10] sm:$0xff]
        %v386 = vld [vmem:[#allocation2 + $0x18] sm:$0xff]
        %v387 = vld [vmem:[#allocation2 + $0x20] sm:$0xff]
        %v388 = vld [vmem:[#allocation2 + $0x28] sm:$0xff]
        %v389 = vld [vmem:[#allocation2 + $0x30] sm:$0xff]
        %v390 = vld [vmem:[#allocation2 + $0x38] sm:$0xff]
        %v391 = vld [vmem:[#allocation2 + $0x40] sm:$0xff]
        %v392 = vld [vmem:[#allocation2 + $0x48] sm:$0xff]
        %v393 = vld [vmem:[#allocation2 + $0x50] sm:$0xff]
        %v394 = vld [vmem:[#allocation2 + $0x58] sm:$0xff]
        %v395 = vld [vmem:[#allocation2 + $0x60] sm:$0xff]
        %v396 = vld [vmem:[#allocation2 + $0x68] sm:$0xff]
        %v397 = vld [vmem:[#allocation2 + $0x70] sm:$0xff]
        %v398 = vld [vmem:[#allocation2 + $0x78] sm:$0xff]
        %v399 = vld [vmem:[#allocation2 + $0x80] sm:$0xff]
        %v400 = vld [vmem:[#allocation2 + $0x88] sm:$0xff]
        %v401 = vld [vmem:[#allocation2 + $0x90] sm:$0xff]
        %v402 = vld [vmem:[#allocation2 + $0x98] sm:$0xff]
        %v403 = vld [vmem:[#allocation2 + $0xa0] sm:$0xff]
        %v404 = vld [vmem:[#allocation2 + $0xa8] sm:$0xff]
        %v405 = vld [vmem:[#allocation2 + $0xb0] sm:$0xff]
        %v406 = vld [vmem:[#allocation2 + $0xb8] sm:$0xff]
        %v407 = vld [vmem:[#allocation2 + $0xc0] sm:$0xff]
        %v408 = vld [vmem:[#allocation2 + $0xc8] sm:$0xff]
        %v409 = vld [vmem:[#allocation2 + $0xd0] sm:$0xff]
        %v410 = vld [vmem:[#allocation2 + $0xd8] sm:$0xff]
        %v411 = vld [vmem:[#allocation2 + $0xe0] sm:$0xff]
        %v412 = vld [vmem:[#allocation2 + $0xe8] sm:$0xff]
        %v413 = vld [vmem:[#allocation2 + $0xf0] sm:$0xff]
        %v414 = vld [vmem:[#allocation2 + $0xf8] sm:$0xff]
        %v415 = vld [vmem:[%s2] sm:$0xf]
        %v416 = vld [vmem:[%s2 + $0x4] sm:$0xf]
        %v417 = vld [vmem:[%s2 + $0x8] sm:$0xf]
        %v418 = vld [vmem:[%s2 + $0xc] sm:$0xf]
        %v419 = vld [vmem:[%s2 + $0x10] sm:$0x3]
        %v452 = vunpack.c.l.b16 %v335
        %v453 = vunpack.c.l.b16 %v336
        %v454 = vunpack.c.l.b16 %v338
        %v455 = vunpack.c.l.b16 %v339
        %v456 = vunpack.c.l.b16 %v341
        %v457 = vunpack.c.l.b16 %v342
        %v458 = vunpack.c.l.b16 %v344
        %v459 = vunpack.c.l.b16 %v345
        %v460 = vunpack.c.l.b16 %v347
        %v461 = vunpack.c.l.b16 %v348
        %v462 = vunpack.c.l.b16 %v350
        %v463 = vunpack.c.l.b16 %v351
        %v464 = vunpack.c.l.b16 %v353
        %v465 = vunpack.c.l.b16 %v354
        %v466 = vunpack.c.l.b16 %v356
        %v467 = vunpack.c.l.b16 %v357
        %v468 = vunpack.c.l.b16 %v359
        %v469 = vunpack.c.l.b16 %v360
        %v470 = vunpack.c.l.b16 %v362
        %v471 = vunpack.c.l.b16 %v363
        %v472 = vunpack.c.l.b16 %v365
        %v473 = vunpack.c.l.b16 %v366
        %v474 = vunpack.c.l.b16 %v368
        %v475 = vunpack.c.l.b16 %v369
        %v476 = vunpack.c.l.b16 %v371
        %v477 = vunpack.c.l.b16 %v372
        %v478 = vunpack.c.l.b16 %v374
        %v479 = vunpack.c.l.b16 %v375
        %v480 = vunpack.c.l.b16 %v377
        %v481 = vunpack.c.l.b16 %v378
        %v482 = vunpack.c.l.b16 %v380
        %v483 = vunpack.c.l.b16 %v381
        %v484 = vpack.c.b16 %v453, %v452
        %v485 = vpack.c.b16 %v455, %v454
        %v486 = vpack.c.b16 %v457, %v456
        %v487 = vpack.c.b16 %v459, %v458
        %v488 = vpack.c.b16 %v461, %v460
        %v489 = vpack.c.b16 %v463, %v462
        %v490 = vpack.c.b16 %v465, %v464
        %v491 = vpack.c.b16 %v467, %v466
        %v492 = vpack.c.b16 %v469, %v468
        %v493 = vpack.c.b16 %v471, %v470
        %v494 = vpack.c.b16 %v473, %v472
        %v495 = vpack.c.b16 %v475, %v474
        %v496 = vpack.c.b16 %v477, %v476
        %v497 = vpack.c.b16 %v479, %v478
        %v498 = vpack.c.b16 %v481, %v480
        %v499 = vpack.c.b16 %v483, %v482
        %v505 = vunpack.c.l.b16 %v415
        %v506 = vunpack.c.l.b16 %v416
        %v507 = vunpack.c.l.b16 %v417
        %v508 = vunpack.c.l.b16 %v418
        %v509 = vunpack.c.l.b16 %v419
        %v510 = vpack.c.b16 %v506, %v505
        %v511 = vpack.c.b16 %v508, %v507
        %v512 = vpack.c.b16 %v509, %v509
        %vm515 = vcmask 293888
        %v517 = vsel %vm515, %v484, 0
        %v520 = vsel %vm515, %v485, 0
        %v523 = vsel %vm515, %v486, 0
        %v526 = vsel %vm515, %v487, 0
        %v529 = vsel %vm515, %v488, 0
        %v532 = vsel %vm515, %v489, 0
        %v535 = vsel %vm515, %v490, 0
        %v538 = vsel %vm515, %v491, 0
        %v541 = vsel %vm515, %v492, 0
        %v544 = vsel %vm515, %v493, 0
        %v547 = vsel %vm515, %v494, 0
        %v550 = vsel %vm515, %v495, 0
        %v553 = vsel %vm515, %v496, 0
        %v556 = vsel %vm515, %v497, 0
        %v559 = vsel %vm515, %v498, 0
        %v562 = vsel %vm515, %v499, 0
        %vm564 = vcmask 1041408
        %v566 = vsel %vm564, %v512, 0
        %568 = vmatprep.subr.bf16.mxu0 0
        %569 = vmatpush1.bf16.msra.mxu0 %v510
        %570 = vmatprep.subr.bf16.mxu0 0
        %571 = vmatpush1.bf16.msra.mxu0 %v511
        %572 = vmatprep.subr.bf16.mxu0 0
        %573 = vmatpush1.bf16.msra.mxu0 %v566
        %574 = vmatprep.subr.bf16.mxu0 0
        %575 = vmatpush1.bf16.msra.mxu0 0
        %576 = vmatprep.subr.bf16.mxu0 0
        %577 = vmatpush1.bf16.msra.mxu0 0
        %578 = vmatprep.subr.bf16.mxu0 0
        %579 = vmatpush1.bf16.msra.mxu0 0
        %580 = vmatprep.subr.bf16.mxu0 0
        %581 = vmatpush1.bf16.msra.mxu0 0
        %582 = vmatprep.subr.bf16.mxu0 0
        %583 = vmatpush1.bf16.msra.mxu0 0
        %584 = vmatprep.subr.bf16.mxu0 0
        %585 = vmatpush1.bf16.msra.mxu0 0
        %586 = vmatprep.subr.bf16.mxu0 0
        %587 = vmatpush1.bf16.msra.mxu0 0
        %588 = vmatprep.subr.bf16.mxu0 0
        %589 = vmatpush1.bf16.msra.mxu0 0
        %590 = vmatprep.subr.bf16.mxu0 0
        %591 = vmatpush1.bf16.msra.mxu0 0
        %592 = vmatprep.subr.bf16.mxu0 0
        %593 = vmatpush1.bf16.msra.mxu0 0
        %594 = vmatprep.subr.bf16.mxu0 0
        %595 = vmatpush1.bf16.msra.mxu0 0
        %596 = vmatprep.subr.bf16.mxu0 0
        %597 = vmatpush1.bf16.msra.mxu0 0
        %598 = vmatprep.subr.bf16.mxu0 0
        %599 = vmatpush1.bf16.msra.mxu0 0
        %600 = vmatprep.mubr.bf16.mxu0 0
        %601 = vmatmul.mubr.bf16.gmra.mrb[0].mxu0 %v517
        %v602 = vpop.f32.mrb[0].mxu0
        %v603 = vadd.f32 0.0, %v602
        %v604 = vpop.f32.mrb[0].mxu0
        %v605 = vpop.f32.mrb[0].mxu0
        %v606 = vadd.f32 0.0, %v605
        %v607 = vpop.f32.mrb[0].mxu0
        %608 = vmatprep.mubr.bf16.mxu0 0
        %609 = vmatmul.mubr.bf16.gmra.mrb[0].mxu0 %v520
        %v610 = vpop.f32.mrb[0].mxu0
        %v611 = vadd.f32 0.0, %v610
        %v612 = vpop.f32.mrb[0].mxu0
        %v613 = vpop.f32.mrb[0].mxu0
        %v614 = vadd.f32 0.0, %v613
        %v615 = vpop.f32.mrb[0].mxu0
        %616 = vmatprep.mubr.bf16.mxu0 0
        %617 = vmatmul.mubr.bf16.gmra.mrb[0].mxu0 %v523
        %v618 = vpop.f32.mrb[0].mxu0
        %v619 = vadd.f32 0.0, %v618
        %v620 = vpop.f32.mrb[0].mxu0
        %v621 = vpop.f32.mrb[0].mxu0
        %v622 = vadd.f32 0.0, %v621
        %v623 = vpop.f32.mrb[0].mxu0
        %624 = vmatprep.mubr.bf16.mxu0 0
        %625 = vmatmul.mubr.bf16.gmra.mrb[0].mxu0 %v526
        %v626 = vpop.f32.mrb[0].mxu0
        %v627 = vadd.f32 0.0, %v626
        %v628 = vpop.f32.mrb[0].mxu0
        %v629 = vpop.f32.mrb[0].mxu0
        %v630 = vadd.f32 0.0, %v629
        %v631 = vpop.f32.mrb[0].mxu0
        %632 = vmatprep.mubr.bf16.mxu0 0
        %633 = vmatmul.mubr.bf16.gmra.mrb[0].mxu0 %v529
        %v634 = vpop.f32.mrb[0].mxu0
        %v635 = vadd.f32 0.0, %v634
        %v636 = vpop.f32.mrb[0].mxu0
        %v637 = vpop.f32.mrb[0].mxu0
        %v638 = vadd.f32 0.0, %v637
        %v639 = vpop.f32.mrb[0].mxu0
        %640 = vmatprep.mubr.bf16.mxu0 0
        %641 = vmatmul.mubr.bf16.gmra.mrb[0].mxu0 %v532
        %v642 = vpop.f32.mrb[0].mxu0
        %v643 = vadd.f32 0.0, %v642
        %v644 = vpop.f32.mrb[0].mxu0
        %v645 = vpop.f32.mrb[0].mxu0
        %v646 = vadd.f32 0.0, %v645
        %v647 = vpop.f32.mrb[0].mxu0
        %648 = vmatprep.mubr.bf16.mxu0 0
        %649 = vmatmul.mubr.bf16.gmra.mrb[0].mxu0 %v535
        %v650 = vpop.f32.mrb[0].mxu0
        %v651 = vadd.f32 0.0, %v650
        %v652 = vpop.f32.mrb[0].mxu0
        %v653 = vpop.f32.mrb[0].mxu0
        %v654 = vadd.f32 0.0, %v653
        %v655 = vpop.f32.mrb[0].mxu0
        %656 = vmatprep.mubr.bf16.mxu0 0
        %657 = vmatmul.mubr.bf16.gmra.mrb[0].mxu0 %v538
        %v658 = vpop.f32.mrb[0].mxu0
        %v659 = vadd.f32 0.0, %v658
        %v660 = vpop.f32.mrb[0].mxu0
        %v661 = vpop.f32.mrb[0].mxu0
        %v662 = vadd.f32 0.0, %v661
        %v663 = vpop.f32.mrb[0].mxu0
        %664 = vmatprep.mubr.bf16.mxu0 0
        %665 = vmatmul.mubr.bf16.gmra.mrb[0].mxu0 %v541
        %v666 = vpop.f32.mrb[0].mxu0
        %v667 = vadd.f32 0.0, %v666
        %v668 = vpop.f32.mrb[0].mxu0
        %v669 = vpop.f32.mrb[0].mxu0
        %v670 = vadd.f32 0.0, %v669
        %v671 = vpop.f32.mrb[0].mxu0
        %672 = vmatprep.mubr.bf16.mxu0 0
        %673 = vmatmul.mubr.bf16.gmra.mrb[0].mxu0 %v544
        %v674 = vpop.f32.mrb[0].mxu0
        %v675 = vadd.f32 0.0, %v674
        %v676 = vpop.f32.mrb[0].mxu0
        %v677 = vpop.f32.mrb[0].mxu0
        %v678 = vadd.f32 0.0, %v677
        %v679 = vpop.f32.mrb[0].mxu0
        %680 = vmatprep.mubr.bf16.mxu0 0
        %681 = vmatmul.mubr.bf16.gmra.mrb[0].mxu0 %v547
        %v682 = vpop.f32.mrb[0].mxu0
        %v683 = vadd.f32 0.0, %v682
        %v684 = vpop.f32.mrb[0].mxu0
        %v685 = vpop.f32.mrb[0].mxu0
        %v686 = vadd.f32 0.0, %v685
        %v687 = vpop.f32.mrb[0].mxu0
        %688 = vmatprep.mubr.bf16.mxu0 0
        %689 = vmatmul.mubr.bf16.gmra.mrb[0].mxu0 %v550
        %v690 = vpop.f32.mrb[0].mxu0
        %v691 = vadd.f32 0.0, %v690
        %v692 = vpop.f32.mrb[0].mxu0
        %v693 = vpop.f32.mrb[0].mxu0
        %v694 = vadd.f32 0.0, %v693
        %v695 = vpop.f32.mrb[0].mxu0
        %696 = vmatprep.mubr.bf16.mxu0 0
        %697 = vmatmul.mubr.bf16.gmra.mrb[0].mxu0 %v553
        %v698 = vpop.f32.mrb[0].mxu0
        %v699 = vadd.f32 0.0, %v698
        %v700 = vpop.f32.mrb[0].mxu0
        %v701 = vpop.f32.mrb[0].mxu0
        %v702 = vadd.f32 0.0, %v701
        %v703 = vpop.f32.mrb[0].mxu0
        %704 = vmatprep.mubr.bf16.mxu0 0
        %705 = vmatmul.mubr.bf16.gmra.mrb[0].mxu0 %v556
        %v706 = vpop.f32.mrb[0].mxu0
        %v707 = vadd.f32 0.0, %v706
        %v708 = vpop.f32.mrb[0].mxu0
        %v709 = vpop.f32.mrb[0].mxu0
        %v710 = vadd.f32 0.0, %v709
        %v711 = vpop.f32.mrb[0].mxu0
        %712 = vmatprep.mubr.bf16.mxu0 0
        %713 = vmatmul.mubr.bf16.gmra.mrb[0].mxu0 %v559
        %v714 = vpop.f32.mrb[0].mxu0
        %v715 = vadd.f32 0.0, %v714
        %v716 = vpop.f32.mrb[0].mxu0
        %v717 = vpop.f32.mrb[0].mxu0
        %v718 = vadd.f32 0.0, %v717
        %v719 = vpop.f32.mrb[0].mxu0
        %720 = vmatprep.mubr.bf16.mxu0 0
        %721 = vmatmul.mubr.bf16.gmra.mrb[0].mxu0 %v562
        %v722 = vpop.f32.mrb[0].mxu0
        %v723 = vadd.f32 0.0, %v722
        %v724 = vpop.f32.mrb[0].mxu0
        %v725 = vpop.f32.mrb[0].mxu0
        %v726 = vadd.f32 0.0, %v725
        %v727 = vpop.f32.mrb[0].mxu0
        %728 = vdwg.mxu0
        %v729 = vadd.f32 %v383, %v603
        %v730 = vadd.f32 %v384, %v606
        %v731 = vadd.f32 %v385, %v611
        %v732 = vadd.f32 %v386, %v614
        %v733 = vadd.f32 %v387, %v619
        %v734 = vadd.f32 %v388, %v622
        %v735 = vadd.f32 %v389, %v627
        %v736 = vadd.f32 %v390, %v630
        %v737 = vadd.f32 %v391, %v635
        %v738 = vadd.f32 %v392, %v638
        %v739 = vadd.f32 %v393, %v643
        %v740 = vadd.f32 %v394, %v646
        %v741 = vadd.f32 %v395, %v651
        %v742 = vadd.f32 %v396, %v654
        %v743 = vadd.f32 %v397, %v659
        %v744 = vadd.f32 %v398, %v662
        %v745 = vadd.f32 %v399, %v667
        %v746 = vadd.f32 %v400, %v670
        %v747 = vadd.f32 %v401, %v675
        %v748 = vadd.f32 %v402, %v678
        %v749 = vadd.f32 %v403, %v683
        %v750 = vadd.f32 %v404, %v686
        %v751 = vadd.f32 %v405, %v691
        %v752 = vadd.f32 %v406, %v694
        %v753 = vadd.f32 %v407, %v699
        %v754 = vadd.f32 %v408, %v702
        %v755 = vadd.f32 %v409, %v707
        %v756 = vadd.f32 %v410, %v710
        %v757 = vadd.f32 %v411, %v715
        %v758 = vadd.f32 %v412, %v718
        %v759 = vadd.f32 %v413, %v723
        %v760 = vadd.f32 %v414, %v726
        %761 = vst [vmem:[#allocation2] sm:$0xff] %v729
        %762 = vst [vmem:[#allocation2 + $0x8] sm:$0xff] %v730
        %763 = vst [vmem:[#allocation2 + $0x10] sm:$0xff] %v731
        %764 = vst [vmem:[#allocation2 + $0x18] sm:$0xff] %v732
        %765 = vst [vmem:[#allocation2 + $0x20] sm:$0xff] %v733
        %766 = vst [vmem:[#allocation2 + $0x28] sm:$0xff] %v734
        %767 = vst [vmem:[#allocation2 + $0x30] sm:$0xff] %v735
        %768 = vst [vmem:[#allocation2 + $0x38] sm:$0xff] %v736
        %769 = vst [vmem:[#allocation2 + $0x40] sm:$0xff] %v737
        %770 = vst [vmem:[#allocation2 + $0x48] sm:$0xff] %v738
        %771 = vst [vmem:[#allocation2 + $0x50] sm:$0xff] %v739
        %772 = vst [vmem:[#allocation2 + $0x58] sm:$0xff] %v740
        %773 = vst [vmem:[#allocation2 + $0x60] sm:$0xff] %v741
        %774 = vst [vmem:[#allocation2 + $0x68] sm:$0xff] %v742
        %775 = vst [vmem:[#allocation2 + $0x70] sm:$0xff] %v743
        %776 = vst [vmem:[#allocation2 + $0x78] sm:$0xff] %v744
        %777 = vst [vmem:[#allocation2 + $0x80] sm:$0xff] %v745
        %778 = vst [vmem:[#allocation2 + $0x88] sm:$0xff] %v746
        %779 = vst [vmem:[#allocation2 + $0x90] sm:$0xff] %v747
        %780 = vst [vmem:[#allocation2 + $0x98] sm:$0xff] %v748
        %781 = vst [vmem:[#allocation2 + $0xa0] sm:$0xff] %v749
        %782 = vst [vmem:[#allocation2 + $0xa8] sm:$0xff] %v750
        %783 = vst [vmem:[#allocation2 + $0xb0] sm:$0xff] %v751
        %784 = vst [vmem:[#allocation2 + $0xb8] sm:$0xff] %v752
        %785 = vst [vmem:[#allocation2 + $0xc0] sm:$0xff] %v753
        %786 = vst [vmem:[#allocation2 + $0xc8] sm:$0xff] %v754
        %787 = vst [vmem:[#allocation2 + $0xd0] sm:$0xff] %v755
        %788 = vst [vmem:[#allocation2 + $0xd8] sm:$0xff] %v756
        %789 = vst [vmem:[#allocation2 + $0xe0] sm:$0xff] %v757
        %790 = vst [vmem:[#allocation2 + $0xe8] sm:$0xff] %v758
        %791 = vst [vmem:[#allocation2 + $0xf0] sm:$0xff] %v759
        %792 = vst [vmem:[#allocation2 + $0xf8] sm:$0xff] %v760
        %vm793 = vsmask.f32 3328
        %vm794 = vsmask.f32 7440
        %vm795 = vmor %vm793, %vm794
        %v797 = vshrl.u32 %v335, 16
        %v799 = vrot.slane %v797, 4
        %v800 = vshll.u32 %v335, 16
        %v802 = vrot.slane %v800, 5
        %v803 = vor.u32 %v799, %v802
        %v804 = vrot.slane %v803, 4
        %v806 = vshll.u32 %v336, 16
        %v808 = vrot.slane %v806, 5
        %v809 = vsel %vm795, %v804, %v808
        %v810 = vshrl.u32 %v336, 16
        %v812 = vrot.slane %v810, 4
        %v813 = vor.u32 %v812, %v808
        %v814 = vrot.slane %v813, 4
        %v816 = vshll.u32 %v337, 16
        %v818 = vrot.slane %v816, 5
        %v819 = vsel %vm795, %v814, %v818
        %v821 = vshrl.u32 %v338, 16
        %v823 = vrot.slane %v821, 4
        %v824 = vshll.u32 %v338, 16
        %v826 = vrot.slane %v824, 5
        %v827 = vor.u32 %v823, %v826
        %v828 = vrot.slane %v827, 4
        %v830 = vshll.u32 %v339, 16
        %v832 = vrot.slane %v830, 5
        %v833 = vsel %vm795, %v828, %v832
        %v834 = vshrl.u32 %v339, 16
        %v836 = vrot.slane %v834, 4
        %v837 = vor.u32 %v836, %v832
        %v838 = vrot.slane %v837, 4
        %v840 = vshll.u32 %v340, 16
        %v842 = vrot.slane %v840, 5
        %v843 = vsel %vm795, %v838, %v842
        %v845 = vshrl.u32 %v341, 16
        %v847 = vrot.slane %v845, 4
        %v848 = vshll.u32 %v341, 16
        %v850 = vrot.slane %v848, 5
        %v851 = vor.u32 %v847, %v850
        %v852 = vrot.slane %v851, 4
        %v854 = vshll.u32 %v342, 16
        %v856 = vrot.slane %v854, 5
        %v857 = vsel %vm795, %v852, %v856
        %v858 = vshrl.u32 %v342, 16
        %v860 = vrot.slane %v858, 4
        %v861 = vor.u32 %v860, %v856
        %v862 = vrot.slane %v861, 4
        %v864 = vshll.u32 %v343, 16
        %v866 = vrot.slane %v864, 5
        %v867 = vsel %vm795, %v862, %v866
        %v869 = vshrl.u32 %v344, 16
        %v871 = vrot.slane %v869, 4
        %v872 = vshll.u32 %v344, 16
        %v874 = vrot.slane %v872, 5
        %v875 = vor.u32 %v871, %v874
        %v876 = vrot.slane %v875, 4
        %v878 = vshll.u32 %v345, 16
        %v880 = vrot.slane %v878, 5
        %v881 = vsel %vm795, %v876, %v880
        %v882 = vshrl.u32 %v345, 16
        %v884 = vrot.slane %v882, 4
        %v885 = vor.u32 %v884, %v880
        %v886 = vrot.slane %v885, 4
        %v888 = vshll.u32 %v346, 16
        %v890 = vrot.slane %v888, 5
        %v891 = vsel %vm795, %v886, %v890
        %v893 = vshrl.u32 %v347, 16
        %v895 = vrot.slane %v893, 4
        %v896 = vshll.u32 %v347, 16
        %v898 = vrot.slane %v896, 5
        %v899 = vor.u32 %v895, %v898
        %v900 = vrot.slane %v899, 4
        %v902 = vshll.u32 %v348, 16
        %v904 = vrot.slane %v902, 5
        %v905 = vsel %vm795, %v900, %v904
        %v906 = vshrl.u32 %v348, 16
        %v908 = vrot.slane %v906, 4
        %v909 = vor.u32 %v908, %v904
        %v910 = vrot.slane %v909, 4
        %v912 = vshll.u32 %v349, 16
        %v914 = vrot.slane %v912, 5
        %v915 = vsel %vm795, %v910, %v914
        %v917 = vshrl.u32 %v350, 16
        %v919 = vrot.slane %v917, 4
        %v920 = vshll.u32 %v350, 16
        %v922 = vrot.slane %v920, 5
        %v923 = vor.u32 %v919, %v922
        %v924 = vrot.slane %v923, 4
        %v926 = vshll.u32 %v351, 16
        %v928 = vrot.slane %v926, 5
        %v929 = vsel %vm795, %v924, %v928
        %v930 = vshrl.u32 %v351, 16
        %v932 = vrot.slane %v930, 4
        %v933 = vor.u32 %v932, %v928
        %v934 = vrot.slane %v933, 4
        %v936 = vshll.u32 %v352, 16
        %v938 = vrot.slane %v936, 5
        %v939 = vsel %vm795, %v934, %v938
        %v941 = vshrl.u32 %v353, 16
        %v943 = vrot.slane %v941, 4
        %v944 = vshll.u32 %v353, 16
        %v946 = vrot.slane %v944, 5
        %v947 = vor.u32 %v943, %v946
        %v948 = vrot.slane %v947, 4
        %v950 = vshll.u32 %v354, 16
        %v952 = vrot.slane %v950, 5
        %v953 = vsel %vm795, %v948, %v952
        %v954 = vshrl.u32 %v354, 16
        %v956 = vrot.slane %v954, 4
        %v957 = vor.u32 %v956, %v952
        %v958 = vrot.slane %v957, 4
        %v960 = vshll.u32 %v355, 16
        %v962 = vrot.slane %v960, 5
        %v963 = vsel %vm795, %v958, %v962
        %v965 = vshrl.u32 %v356, 16
        %v967 = vrot.slane %v965, 4
        %v968 = vshll.u32 %v356, 16
        %v970 = vrot.slane %v968, 5
        %v971 = vor.u32 %v967, %v970
        %v972 = vrot.slane %v971, 4
        %v974 = vshll.u32 %v357, 16
        %v976 = vrot.slane %v974, 5
        %v977 = vsel %vm795, %v972, %v976
        %v978 = vshrl.u32 %v357, 16
        %v980 = vrot.slane %v978, 4
        %v981 = vor.u32 %v980, %v976
        %v982 = vrot.slane %v981, 4
        %v984 = vshll.u32 %v358, 16
        %v986 = vrot.slane %v984, 5
        %v987 = vsel %vm795, %v982, %v986
        %v989 = vshrl.u32 %v359, 16
        %v991 = vrot.slane %v989, 4
        %v992 = vshll.u32 %v359, 16
        %v994 = vrot.slane %v992, 5
        %v995 = vor.u32 %v991, %v994
        %v996 = vrot.slane %v995, 4
        %v998 = vshll.u32 %v360, 16
        %v1000 = vrot.slane %v998, 5
        %v1001 = vsel %vm795, %v996, %v1000
        %v1002 = vshrl.u32 %v360, 16
        %v1004 = vrot.slane %v1002, 4
        %v1005 = vor.u32 %v1004, %v1000
        %v1006 = vrot.slane %v1005, 4
        %v1008 = vshll.u32 %v361, 16
        %v1010 = vrot.slane %v1008, 5
        %v1011 = vsel %vm795, %v1006, %v1010
        %v1013 = vshrl.u32 %v362, 16
        %v1015 = vrot.slane %v1013, 4
        %v1016 = vshll.u32 %v362, 16
        %v1018 = vrot.slane %v1016, 5
        %v1019 = vor.u32 %v1015, %v1018
        %v1020 = vrot.slane %v1019, 4
        %v1022 = vshll.u32 %v363, 16
        %v1024 = vrot.slane %v1022, 5
        %v1025 = vsel %vm795, %v1020, %v1024
        %v1026 = vshrl.u32 %v363, 16
        %v1028 = vrot.slane %v1026, 4
        %v1029 = vor.u32 %v1028, %v1024
        %v1030 = vrot.slane %v1029, 4
        %v1032 = vshll.u32 %v364, 16
        %v1034 = vrot.slane %v1032, 5
        %v1035 = vsel %vm795, %v1030, %v1034
        %v1037 = vshrl.u32 %v365, 16
        %v1039 = vrot.slane %v1037, 4
        %v1040 = vshll.u32 %v365, 16
        %v1042 = vrot.slane %v1040, 5
        %v1043 = vor.u32 %v1039, %v1042
        %v1044 = vrot.slane %v1043, 4
        %v1046 = vshll.u32 %v366, 16
        %v1048 = vrot.slane %v1046, 5
        %v1049 = vsel %vm795, %v1044, %v1048
        %v1050 = vshrl.u32 %v366, 16
        %v1052 = vrot.slane %v1050, 4
        %v1053 = vor.u32 %v1052, %v1048
        %v1054 = vrot.slane %v1053, 4
        %v1056 = vshll.u32 %v367, 16
        %v1058 = vrot.slane %v1056, 5
        %v1059 = vsel %vm795, %v1054, %v1058
        %v1061 = vshrl.u32 %v368, 16
        %v1063 = vrot.slane %v1061, 4
        %v1064 = vshll.u32 %v368, 16
        %v1066 = vrot.slane %v1064, 5
        %v1067 = vor.u32 %v1063, %v1066
        %v1068 = vrot.slane %v1067, 4
        %v1070 = vshll.u32 %v369, 16
        %v1072 = vrot.slane %v1070, 5
        %v1073 = vsel %vm795, %v1068, %v1072
        %v1074 = vshrl.u32 %v369, 16
        %v1076 = vrot.slane %v1074, 4
        %v1077 = vor.u32 %v1076, %v1072
        %v1078 = vrot.slane %v1077, 4
        %v1080 = vshll.u32 %v370, 16
        %v1082 = vrot.slane %v1080, 5
        %v1083 = vsel %vm795, %v1078, %v1082
        %v1085 = vshrl.u32 %v371, 16
        %v1087 = vrot.slane %v1085, 4
        %v1088 = vshll.u32 %v371, 16
        %v1090 = vrot.slane %v1088, 5
        %v1091 = vor.u32 %v1087, %v1090
        %v1092 = vrot.slane %v1091, 4
        %v1094 = vshll.u32 %v372, 16
        %v1096 = vrot.slane %v1094, 5
        %v1097 = vsel %vm795, %v1092, %v1096
        %v1098 = vshrl.u32 %v372, 16
        %v1100 = vrot.slane %v1098, 4
        %v1101 = vor.u32 %v1100, %v1096
        %v1102 = vrot.slane %v1101, 4
        %v1104 = vshll.u32 %v373, 16
        %v1106 = vrot.slane %v1104, 5
        %v1107 = vsel %vm795, %v1102, %v1106
        %v1109 = vshrl.u32 %v374, 16
        %v1111 = vrot.slane %v1109, 4
        %v1112 = vshll.u32 %v374, 16
        %v1114 = vrot.slane %v1112, 5
        %v1115 = vor.u32 %v1111, %v1114
        %v1116 = vrot.slane %v1115, 4
        %v1118 = vshll.u32 %v375, 16
        %v1120 = vrot.slane %v1118, 5
        %v1121 = vsel %vm795, %v1116, %v1120
        %v1122 = vshrl.u32 %v375, 16
        %v1124 = vrot.slane %v1122, 4
        %v1125 = vor.u32 %v1124, %v1120
        %v1126 = vrot.slane %v1125, 4
        %v1128 = vshll.u32 %v376, 16
        %v1130 = vrot.slane %v1128, 5
        %v1131 = vsel %vm795, %v1126, %v1130
        %v1133 = vshrl.u32 %v377, 16
        %v1135 = vrot.slane %v1133, 4
        %v1136 = vshll.u32 %v377, 16
        %v1138 = vrot.slane %v1136, 5
        %v1139 = vor.u32 %v1135, %v1138
        %v1140 = vrot.slane %v1139, 4
        %v1142 = vshll.u32 %v378, 16
        %v1144 = vrot.slane %v1142, 5
        %v1145 = vsel %vm795, %v1140, %v1144
        %v1146 = vshrl.u32 %v378, 16
        %v1148 = vrot.slane %v1146, 4
        %v1149 = vor.u32 %v1148, %v1144
        %v1150 = vrot.slane %v1149, 4
        %v1152 = vshll.u32 %v379, 16
        %v1154 = vrot.slane %v1152, 5
        %v1155 = vsel %vm795, %v1150, %v1154
        %v1157 = vshrl.u32 %v380, 16
        %v1159 = vrot.slane %v1157, 4
        %v1160 = vshll.u32 %v380, 16
        %v1162 = vrot.slane %v1160, 5
        %v1163 = vor.u32 %v1159, %v1162
        %v1164 = vrot.slane %v1163, 4
        %v1166 = vshll.u32 %v381, 16
        %v1168 = vrot.slane %v1166, 5
        %v1169 = vsel %vm795, %v1164, %v1168
        %v1170 = vshrl.u32 %v381, 16
        %v1172 = vrot.slane %v1170, 4
        %v1173 = vor.u32 %v1172, %v1168
        %v1174 = vrot.slane %v1173, 4
        %v1176 = vshll.u32 %v382, 16
        %v1178 = vrot.slane %v1176, 5
        %v1179 = vsel %vm795, %v1174, %v1178
        %v1180 = vld [vmem:[#allocation2] sm:$0xff]
        %v1181 = vld [vmem:[#allocation2 + $0x8] sm:$0xff]
        %v1182 = vld [vmem:[#allocation2 + $0x10] sm:$0xff]
        %v1183 = vld [vmem:[#allocation2 + $0x18] sm:$0xff]
        %v1184 = vld [vmem:[#allocation2 + $0x20] sm:$0xff]
        %v1185 = vld [vmem:[#allocation2 + $0x28] sm:$0xff]
        %v1186 = vld [vmem:[#allocation2 + $0x30] sm:$0xff]
        %v1187 = vld [vmem:[#allocation2 + $0x38] sm:$0xff]
        %v1188 = vld [vmem:[#allocation2 + $0x40] sm:$0xff]
        %v1189 = vld [vmem:[#allocation2 + $0x48] sm:$0xff]
        %v1190 = vld [vmem:[#allocation2 + $0x50] sm:$0xff]
        %v1191 = vld [vmem:[#allocation2 + $0x58] sm:$0xff]
        %v1192 = vld [vmem:[#allocation2 + $0x60] sm:$0xff]
        %v1193 = vld [vmem:[#allocation2 + $0x68] sm:$0xff]
        %v1194 = vld [vmem:[#allocation2 + $0x70] sm:$0xff]
        %v1195 = vld [vmem:[#allocation2 + $0x78] sm:$0xff]
        %v1196 = vld [vmem:[#allocation2 + $0x80] sm:$0xff]
        %v1197 = vld [vmem:[#allocation2 + $0x88] sm:$0xff]
        %v1198 = vld [vmem:[#allocation2 + $0x90] sm:$0xff]
        %v1199 = vld [vmem:[#allocation2 + $0x98] sm:$0xff]
        %v1200 = vld [vmem:[#allocation2 + $0xa0] sm:$0xff]
        %v1201 = vld [vmem:[#allocation2 + $0xa8] sm:$0xff]
        %v1202 = vld [vmem:[#allocation2 + $0xb0] sm:$0xff]
        %v1203 = vld [vmem:[#allocation2 + $0xb8] sm:$0xff]
        %v1204 = vld [vmem:[#allocation2 + $0xc0] sm:$0xff]
        %v1205 = vld [vmem:[#allocation2 + $0xc8] sm:$0xff]
        %v1206 = vld [vmem:[#allocation2 + $0xd0] sm:$0xff]
        %v1207 = vld [vmem:[#allocation2 + $0xd8] sm:$0xff]
        %v1208 = vld [vmem:[#allocation2 + $0xe0] sm:$0xff]
        %v1209 = vld [vmem:[#allocation2 + $0xe8] sm:$0xff]
        %v1210 = vld [vmem:[#allocation2 + $0xf0] sm:$0xff]
        %v1211 = vld [vmem:[#allocation2 + $0xf8] sm:$0xff]
        %s1212 = scalar_lea.vmem %s2, 20
        %v1213 = vld [vmem:[%s1212] sm:$0xf]
        %v1214 = vld [vmem:[%s1212 + $0x4] sm:$0xf]
        %v1215 = vld [vmem:[%s1212 + $0x8] sm:$0xf]
        %v1216 = vld [vmem:[%s1212 + $0xc] sm:$0xf]
        %v1217 = vld [vmem:[%s1212 + $0x10] sm:$0x3]
        %v1218 = vunpack.c.l.b16 %v809
        %v1219 = vunpack.c.l.b16 %v819
        %v1220 = vunpack.c.l.b16 %v833
        %v1221 = vunpack.c.l.b16 %v843
        %v1222 = vunpack.c.l.b16 %v857
        %v1223 = vunpack.c.l.b16 %v867
        %v1224 = vunpack.c.l.b16 %v881
        %v1225 = vunpack.c.l.b16 %v891
        %v1226 = vunpack.c.l.b16 %v905
        %v1227 = vunpack.c.l.b16 %v915
        %v1228 = vunpack.c.l.b16 %v929
        %v1229 = vunpack.c.l.b16 %v939
        %v1230 = vunpack.c.l.b16 %v953
        %v1231 = vunpack.c.l.b16 %v963
        %v1232 = vunpack.c.l.b16 %v977
        %v1233 = vunpack.c.l.b16 %v987
        %v1234 = vunpack.c.l.b16 %v1001
        %v1235 = vunpack.c.l.b16 %v1011
        %v1236 = vunpack.c.l.b16 %v1025
        %v1237 = vunpack.c.l.b16 %v1035
        %v1238 = vunpack.c.l.b16 %v1049
        %v1239 = vunpack.c.l.b16 %v1059
        %v1240 = vunpack.c.l.b16 %v1073
        %v1241 = vunpack.c.l.b16 %v1083
        %v1242 = vunpack.c.l.b16 %v1097
        %v1243 = vunpack.c.l.b16 %v1107
        %v1244 = vunpack.c.l.b16 %v1121
        %v1245 = vunpack.c.l.b16 %v1131
        %v1246 = vunpack.c.l.b16 %v1145
        %v1247 = vunpack.c.l.b16 %v1155
        %v1248 = vunpack.c.l.b16 %v1169
        %v1249 = vunpack.c.l.b16 %v1179
        %v1250 = vpack.c.b16 %v1219, %v1218
        %v1251 = vpack.c.b16 %v1221, %v1220
        %v1252 = vpack.c.b16 %v1223, %v1222
        %v1253 = vpack.c.b16 %v1225, %v1224
        %v1254 = vpack.c.b16 %v1227, %v1226
        %v1255 = vpack.c.b16 %v1229, %v1228
        %v1256 = vpack.c.b16 %v1231, %v1230
        %v1257 = vpack.c.b16 %v1233, %v1232
        %v1258 = vpack.c.b16 %v1235, %v1234
        %v1259 = vpack.c.b16 %v1237, %v1236
        %v1260 = vpack.c.b16 %v1239, %v1238
        %v1261 = vpack.c.b16 %v1241, %v1240
        %v1262 = vpack.c.b16 %v1243, %v1242
        %v1263 = vpack.c.b16 %v1245, %v1244
        %v1264 = vpack.c.b16 %v1247, %v1246
        %v1265 = vpack.c.b16 %v1249, %v1248
        %v1271 = vunpack.c.l.b16 %v1213
        %v1272 = vunpack.c.l.b16 %v1214
        %v1273 = vunpack.c.l.b16 %v1215
        %v1274 = vunpack.c.l.b16 %v1216
        %v1275 = vunpack.c.l.b16 %v1217
        %v1276 = vpack.c.b16 %v1272, %v1271
        %v1277 = vpack.c.b16 %v1274, %v1273
        %v1278 = vpack.c.b16 %v1275, %v1275
        %v1282 = vsel %vm515, %v1250, 0
        %v1285 = vsel %vm515, %v1251, 0
        %v1288 = vsel %vm515, %v1252, 0
        %v1291 = vsel %vm515, %v1253, 0
        %v1294 = vsel %vm515, %v1254, 0
        %v1297 = vsel %vm515, %v1255, 0
        %v1300 = vsel %vm515, %v1256, 0
        %v1303 = vsel %vm515, %v1257, 0
        %v1306 = vsel %vm515, %v1258, 0
        %v1309 = vsel %vm515, %v1259, 0
        %v1312 = vsel %vm515, %v1260, 0
        %v1315 = vsel %vm515, %v1261, 0
        %v1318 = vsel %vm515, %v1262, 0
        %v1321 = vsel %vm515, %v1263, 0
        %v1324 = vsel %vm515, %v1264, 0
        %v1327 = vsel %vm515, %v1265, 0
        %v1330 = vsel %vm564, %v1278, 0
        %1332 = vmatprep.subr.bf16.mxu0 0
        %1333 = vmatpush1.bf16.msra.mxu0 %v1276
        %1334 = vmatprep.subr.bf16.mxu0 0
        %1335 = vmatpush1.bf16.msra.mxu0 %v1277
        %1336 = vmatprep.subr.bf16.mxu0 0
        %1337 = vmatpush1.bf16.msra.mxu0 %v1330
        %1338 = vmatprep.subr.bf16.mxu0 0
        %1339 = vmatpush1.bf16.msra.mxu0 0
        %1340 = vmatprep.subr.bf16.mxu0 0
        %1341 = vmatpush1.bf16.msra.mxu0 0
        %1342 = vmatprep.subr.bf16.mxu0 0
        %1343 = vmatpush1.bf16.msra.mxu0 0
        %1344 = vmatprep.subr.bf16.mxu0 0
        %1345 = vmatpush1.bf16.msra.mxu0 0
        %1346 = vmatprep.subr.bf16.mxu0 0
        %1347 = vmatpush1.bf16.msra.mxu0 0
        %1348 = vmatprep.subr.bf16.mxu0 0
        %1349 = vmatpush1.bf16.msra.mxu0 0
        %1350 = vmatprep.subr.bf16.mxu0 0
        %1351 = vmatpush1.bf16.msra.mxu0 0
        %1352 = vmatprep.subr.bf16.mxu0 0
        %1353 = vmatpush1.bf16.msra.mxu0 0
        %1354 = vmatprep.subr.bf16.mxu0 0
        %1355 = vmatpush1.bf16.msra.mxu0 0
        %1356 = vmatprep.subr.bf16.mxu0 0
        %1357 = vmatpush1.bf16.msra.mxu0 0
        %1358 = vmatprep.subr.bf16.mxu0 0
        %1359 = vmatpush1.bf16.msra.mxu0 0
        %1360 = vmatprep.subr.bf16.mxu0 0
        %1361 = vmatpush1.bf16.msra.mxu0 0
        %1362 = vmatprep.subr.bf16.mxu0 0
        %1363 = vmatpush1.bf16.msra.mxu0 0
        %1364 = vmatprep.mubr.bf16.mxu0 0
        %1365 = vmatmul.mubr.bf16.gmra.mrb[0].mxu0 %v1282
        %v1366 = vpop.f32.mrb[0].mxu0
        %v1367 = vadd.f32 0.0, %v1366
        %v1368 = vpop.f32.mrb[0].mxu0
        %v1369 = vpop.f32.mrb[0].mxu0
        %v1370 = vadd.f32 0.0, %v1369
        %v1371 = vpop.f32.mrb[0].mxu0
        %1372 = vmatprep.mubr.bf16.mxu0 0
        %1373 = vmatmul.mubr.bf16.gmra.mrb[0].mxu0 %v1285
        %v1374 = vpop.f32.mrb[0].mxu0
        %v1375 = vadd.f32 0.0, %v1374
        %v1376 = vpop.f32.mrb[0].mxu0
        %v1377 = vpop.f32.mrb[0].mxu0
        %v1378 = vadd.f32 0.0, %v1377
        %v1379 = vpop.f32.mrb[0].mxu0
        %1380 = vmatprep.mubr.bf16.mxu0 0
        %1381 = vmatmul.mubr.bf16.gmra.mrb[0].mxu0 %v1288
        %v1382 = vpop.f32.mrb[0].mxu0
        %v1383 = vadd.f32 0.0, %v1382
        %v1384 = vpop.f32.mrb[0].mxu0
        %v1385 = vpop.f32.mrb[0].mxu0
        %v1386 = vadd.f32 0.0, %v1385
        %v1387 = vpop.f32.mrb[0].mxu0
        %1388 = vmatprep.mubr.bf16.mxu0 0
        %1389 = vmatmul.mubr.bf16.gmra.mrb[0].mxu0 %v1291
        %v1390 = vpop.f32.mrb[0].mxu0
        %v1391 = vadd.f32 0.0, %v1390
        %v1392 = vpop.f32.mrb[0].mxu0
        %v1393 = vpop.f32.mrb[0].mxu0
        %v1394 = vadd.f32 0.0, %v1393
        %v1395 = vpop.f32.mrb[0].mxu0
        %1396 = vmatprep.mubr.bf16.mxu0 0
        %1397 = vmatmul.mubr.bf16.gmra.mrb[0].mxu0 %v1294
        %v1398 = vpop.f32.mrb[0].mxu0
        %v1399 = vadd.f32 0.0, %v1398
        %v1400 = vpop.f32.mrb[0].mxu0
        %v1401 = vpop.f32.mrb[0].mxu0
        %v1402 = vadd.f32 0.0, %v1401
        %v1403 = vpop.f32.mrb[0].mxu0
        %1404 = vmatprep.mubr.bf16.mxu0 0
        %1405 = vmatmul.mubr.bf16.gmra.mrb[0].mxu0 %v1297
        %v1406 = vpop.f32.mrb[0].mxu0
        %v1407 = vadd.f32 0.0, %v1406
        %v1408 = vpop.f32.mrb[0].mxu0
        %v1409 = vpop.f32.mrb[0].mxu0
        %v1410 = vadd.f32 0.0, %v1409
        %v1411 = vpop.f32.mrb[0].mxu0
        %1412 = vmatprep.mubr.bf16.mxu0 0
        %1413 = vmatmul.mubr.bf16.gmra.mrb[0].mxu0 %v1300
        %v1414 = vpop.f32.mrb[0].mxu0
        %v1415 = vadd.f32 0.0, %v1414
        %v1416 = vpop.f32.mrb[0].mxu0
        %v1417 = vpop.f32.mrb[0].mxu0
        %v1418 = vadd.f32 0.0, %v1417
        %v1419 = vpop.f32.mrb[0].mxu0
        %1420 = vmatprep.mubr.bf16.mxu0 0
        %1421 = vmatmul.mubr.bf16.gmra.mrb[0].mxu0 %v1303
        %v1422 = vpop.f32.mrb[0].mxu0
        %v1423 = vadd.f32 0.0, %v1422
        %v1424 = vpop.f32.mrb[0].mxu0
        %v1425 = vpop.f32.mrb[0].mxu0
        %v1426 = vadd.f32 0.0, %v1425
        %v1427 = vpop.f32.mrb[0].mxu0
        %1428 = vmatprep.mubr.bf16.mxu0 0
        %1429 = vmatmul.mubr.bf16.gmra.mrb[0].mxu0 %v1306
        %v1430 = vpop.f32.mrb[0].mxu0
        %v1431 = vadd.f32 0.0, %v1430
        %v1432 = vpop.f32.mrb[0].mxu0
        %v1433 = vpop.f32.mrb[0].mxu0
        %v1434 = vadd.f32 0.0, %v1433
        %v1435 = vpop.f32.mrb[0].mxu0
        %1436 = vmatprep.mubr.bf16.mxu0 0
        %1437 = vmatmul.mubr.bf16.gmra.mrb[0].mxu0 %v1309
        %v1438 = vpop.f32.mrb[0].mxu0
        %v1439 = vadd.f32 0.0, %v1438
        %v1440 = vpop.f32.mrb[0].mxu0
        %v1441 = vpop.f32.mrb[0].mxu0
        %v1442 = vadd.f32 0.0, %v1441
        %v1443 = vpop.f32.mrb[0].mxu0
        %1444 = vmatprep.mubr.bf16.mxu0 0
        %1445 = vmatmul.mubr.bf16.gmra.mrb[0].mxu0 %v1312
        %v1446 = vpop.f32.mrb[0].mxu0
        %v1447 = vadd.f32 0.0, %v1446
        %v1448 = vpop.f32.mrb[0].mxu0
        %v1449 = vpop.f32.mrb[0].mxu0
        %v1450 = vadd.f32 0.0, %v1449
        %v1451 = vpop.f32.mrb[0].mxu0
        %1452 = vmatprep.mubr.bf16.mxu0 0
        %1453 = vmatmul.mubr.bf16.gmra.mrb[0].mxu0 %v1315
        %v1454 = vpop.f32.mrb[0].mxu0
        %v1455 = vadd.f32 0.0, %v1454
        %v1456 = vpop.f32.mrb[0].mxu0
        %v1457 = vpop.f32.mrb[0].mxu0
        %v1458 = vadd.f32 0.0, %v1457
        %v1459 = vpop.f32.mrb[0].mxu0
        %1460 = vmatprep.mubr.bf16.mxu0 0
        %1461 = vmatmul.mubr.bf16.gmra.mrb[0].mxu0 %v1318
        %v1462 = vpop.f32.mrb[0].mxu0
        %v1463 = vadd.f32 0.0, %v1462
        %v1464 = vpop.f32.mrb[0].mxu0
        %v1465 = vpop.f32.mrb[0].mxu0
        %v1466 = vadd.f32 0.0, %v1465
        %v1467 = vpop.f32.mrb[0].mxu0
        %1468 = vmatprep.mubr.bf16.mxu0 0
        %1469 = vmatmul.mubr.bf16.gmra.mrb[0].mxu0 %v1321
        %v1470 = vpop.f32.mrb[0].mxu0
        %v1471 = vadd.f32 0.0, %v1470
        %v1472 = vpop.f32.mrb[0].mxu0
        %v1473 = vpop.f32.mrb[0].mxu0
        %v1474 = vadd.f32 0.0, %v1473
        %v1475 = vpop.f32.mrb[0].mxu0
        %1476 = vmatprep.mubr.bf16.mxu0 0
        %1477 = vmatmul.mubr.bf16.gmra.mrb[0].mxu0 %v1324
        %v1478 = vpop.f32.mrb[0].mxu0
        %v1479 = vadd.f32 0.0, %v1478
        %v1480 = vpop.f32.mrb[0].mxu0
        %v1481 = vpop.f32.mrb[0].mxu0
        %v1482 = vadd.f32 0.0, %v1481
        %v1483 = vpop.f32.mrb[0].mxu0
        %1484 = vmatprep.mubr.bf16.mxu0 0
        %1485 = vmatmul.mubr.bf16.gmra.mrb[0].mxu0 %v1327
        %v1486 = vpop.f32.mrb[0].mxu0
        %v1487 = vadd.f32 0.0, %v1486
        %v1488 = vpop.f32.mrb[0].mxu0
        %v1489 = vpop.f32.mrb[0].mxu0
        %v1490 = vadd.f32 0.0, %v1489
        %v1491 = vpop.f32.mrb[0].mxu0
        %1492 = vdwg.mxu0
        %v1493 = vadd.f32 %v1180, %v1367
        %v1494 = vadd.f32 %v1181, %v1370
        %v1495 = vadd.f32 %v1182, %v1375
        %v1496 = vadd.f32 %v1183, %v1378
        %v1497 = vadd.f32 %v1184, %v1383
        %v1498 = vadd.f32 %v1185, %v1386
        %v1499 = vadd.f32 %v1186, %v1391
        %v1500 = vadd.f32 %v1187, %v1394
        %v1501 = vadd.f32 %v1188, %v1399
        %v1502 = vadd.f32 %v1189, %v1402
        %v1503 = vadd.f32 %v1190, %v1407
        %v1504 = vadd.f32 %v1191, %v1410
        %v1505 = vadd.f32 %v1192, %v1415
        %v1506 = vadd.f32 %v1193, %v1418
        %v1507 = vadd.f32 %v1194, %v1423
        %v1508 = vadd.f32 %v1195, %v1426
        %v1509 = vadd.f32 %v1196, %v1431
        %v1510 = vadd.f32 %v1197, %v1434
        %v1511 = vadd.f32 %v1198, %v1439
        %v1512 = vadd.f32 %v1199, %v1442
        %v1513 = vadd.f32 %v1200, %v1447
        %v1514 = vadd.f32 %v1201, %v1450
        %v1515 = vadd.f32 %v1202, %v1455
        %v1516 = vadd.f32 %v1203, %v1458
        %v1517 = vadd.f32 %v1204, %v1463
        %v1518 = vadd.f32 %v1205, %v1466
        %v1519 = vadd.f32 %v1206, %v1471
        %v1520 = vadd.f32 %v1207, %v1474
        %v1521 = vadd.f32 %v1208, %v1479
        %v1522 = vadd.f32 %v1209, %v1482
        %v1523 = vadd.f32 %v1210, %v1487
        %v1524 = vadd.f32 %v1211, %v1490
        %1525 = vst [vmem:[#allocation2] sm:$0xff] %v1493
        %1526 = vst [vmem:[#allocation2 + $0x8] sm:$0xff] %v1494
        %1527 = vst [vmem:[#allocation2 + $0x10] sm:$0xff] %v1495
        %1528 = vst [vmem:[#allocation2 + $0x18] sm:$0xff] %v1496
        %1529 = vst [vmem:[#allocation2 + $0x20] sm:$0xff] %v1497
        %1530 = vst [vmem:[#allocation2 + $0x28] sm:$0xff] %v1498
        %1531 = vst [vmem:[#allocation2 + $0x30] sm:$0xff] %v1499
        %1532 = vst [vmem:[#allocation2 + $0x38] sm:$0xff] %v1500
        %1533 = vst [vmem:[#allocation2 + $0x40] sm:$0xff] %v1501
        %1534 = vst [vmem:[#allocation2 + $0x48] sm:$0xff] %v1502
        %1535 = vst [vmem:[#allocation2 + $0x50] sm:$0xff] %v1503
        %1536 = vst [vmem:[#allocation2 + $0x58] sm:$0xff] %v1504
        %1537 = vst [vmem:[#allocation2 + $0x60] sm:$0xff] %v1505
        %1538 = vst [vmem:[#allocation2 + $0x68] sm:$0xff] %v1506
        %1539 = vst [vmem:[#allocation2 + $0x70] sm:$0xff] %v1507
        %1540 = vst [vmem:[#allocation2 + $0x78] sm:$0xff] %v1508
        %1541 = vst [vmem:[#allocation2 + $0x80] sm:$0xff] %v1509
        %1542 = vst [vmem:[#allocation2 + $0x88] sm:$0xff] %v1510
        %1543 = vst [vmem:[#allocation2 + $0x90] sm:$0xff] %v1511
        %1544 = vst [vmem:[#allocation2 + $0x98] sm:$0xff] %v1512
        %1545 = vst [vmem:[#allocation2 + $0xa0] sm:$0xff] %v1513
        %1546 = vst [vmem:[#allocation2 + $0xa8] sm:$0xff] %v1514
        %1547 = vst [vmem:[#allocation2 + $0xb0] sm:$0xff] %v1515
        %1548 = vst [vmem:[#allocation2 + $0xb8] sm:$0xff] %v1516
        %1549 = vst [vmem:[#allocation2 + $0xc0] sm:$0xff] %v1517
        %1550 = vst [vmem:[#allocation2 + $0xc8] sm:$0xff] %v1518
        %1551 = vst [vmem:[#allocation2 + $0xd0] sm:$0xff] %v1519
        %1552 = vst [vmem:[#allocation2 + $0xd8] sm:$0xff] %v1520
        %1553 = vst [vmem:[#allocation2 + $0xe0] sm:$0xff] %v1521
        %1554 = vst [vmem:[#allocation2 + $0xe8] sm:$0xff] %v1522
        %1555 = vst [vmem:[#allocation2 + $0xf0] sm:$0xff] %v1523
        %1556 = vst [vmem:[#allocation2 + $0xf8] sm:$0xff] %v1524
        %vm1573 = vcmask 1042432
        %vm1574 = vcmask 1046532
        %vm1575 = vmor %vm1573, %vm1574
        %v1576 = vrot.slane %v335, 5
        %v1577 = vrot.slane %v1576, 4
        %v1578 = vrot.slane %v336, 5
        %v1579 = vsel %vm1575, %v1577, %v1578
        %v1580 = vrot.slane %v1578, 4
        %v1581 = vrot.slane %v337, 5
        %v1582 = vsel %vm1575, %v1580, %v1581
        %v1583 = vrot.slane %v338, 5
        %v1584 = vrot.slane %v1583, 4
        %v1585 = vrot.slane %v339, 5
        %v1586 = vsel %vm1575, %v1584, %v1585
        %v1587 = vrot.slane %v1585, 4
        %v1588 = vrot.slane %v340, 5
        %v1589 = vsel %vm1575, %v1587, %v1588
        %v1590 = vrot.slane %v341, 5
        %v1591 = vrot.slane %v1590, 4
        %v1592 = vrot.slane %v342, 5
        %v1593 = vsel %vm1575, %v1591, %v1592
        %v1594 = vrot.slane %v1592, 4
        %v1595 = vrot.slane %v343, 5
        %v1596 = vsel %vm1575, %v1594, %v1595
        %v1597 = vrot.slane %v344, 5
        %v1598 = vrot.slane %v1597, 4
        %v1599 = vrot.slane %v345, 5
        %v1600 = vsel %vm1575, %v1598, %v1599
        %v1601 = vrot.slane %v1599, 4
        %v1602 = vrot.slane %v346, 5
        %v1603 = vsel %vm1575, %v1601, %v1602
        %v1604 = vrot.slane %v347, 5
        %v1605 = vrot.slane %v1604, 4
        %v1606 = vrot.slane %v348, 5
        %v1607 = vsel %vm1575, %v1605, %v1606
        %v1608 = vrot.slane %v1606, 4
        %v1609 = vrot.slane %v349, 5
        %v1610 = vsel %vm1575, %v1608, %v1609
        %v1611 = vrot.slane %v350, 5
        %v1612 = vrot.slane %v1611, 4
        %v1613 = vrot.slane %v351, 5
        %v1614 = vsel %vm1575, %v1612, %v1613
        %v1615 = vrot.slane %v1613, 4
        %v1616 = vrot.slane %v352, 5
        %v1617 = vsel %vm1575, %v1615, %v1616
        %v1618 = vrot.slane %v353, 5
        %v1619 = vrot.slane %v1618, 4
        %v1620 = vrot.slane %v354, 5
        %v1621 = vsel %vm1575, %v1619, %v1620
        %v1622 = vrot.slane %v1620, 4
        %v1623 = vrot.slane %v355, 5
        %v1624 = vsel %vm1575, %v1622, %v1623
        %v1625 = vrot.slane %v356, 5
        %v1626 = vrot.slane %v1625, 4
        %v1627 = vrot.slane %v357, 5
        %v1628 = vsel %vm1575, %v1626, %v1627
        %v1629 = vrot.slane %v1627, 4
        %v1630 = vrot.slane %v358, 5
        %v1631 = vsel %vm1575, %v1629, %v1630
        %v1632 = vrot.slane %v359, 5
        %v1633 = vrot.slane %v1632, 4
        %v1634 = vrot.slane %v360, 5
        %v1635 = vsel %vm1575, %v1633, %v1634
        %v1636 = vrot.slane %v1634, 4
        %v1637 = vrot.slane %v361, 5
        %v1638 = vsel %vm1575, %v1636, %v1637
        %v1639 = vrot.slane %v362, 5
        %v1640 = vrot.slane %v1639, 4
        %v1641 = vrot.slane %v363, 5
        %v1642 = vsel %vm1575, %v1640, %v1641
        %v1643 = vrot.slane %v1641, 4
        %v1644 = vrot.slane %v364, 5
        %v1645 = vsel %vm1575, %v1643, %v1644
        %v1646 = vrot.slane %v365, 5
        %v1647 = vrot.slane %v1646, 4
        %v1648 = vrot.slane %v366, 5
        %v1649 = vsel %vm1575, %v1647, %v1648
        %v1650 = vrot.slane %v1648, 4
        %v1651 = vrot.slane %v367, 5
        %v1652 = vsel %vm1575, %v1650, %v1651
        %v1653 = vrot.slane %v368, 5
        %v1654 = vrot.slane %v1653, 4
        %v1655 = vrot.slane %v369, 5
        %v1656 = vsel %vm1575, %v1654, %v1655
        %v1657 = vrot.slane %v1655, 4
        %v1658 = vrot.slane %v370, 5
        %v1659 = vsel %vm1575, %v1657, %v1658
        %v1660 = vrot.slane %v371, 5
        %v1661 = vrot.slane %v1660, 4
        %v1662 = vrot.slane %v372, 5
        %v1663 = vsel %vm1575, %v1661, %v1662
        %v1664 = vrot.slane %v1662, 4
        %v1665 = vrot.slane %v373, 5
        %v1666 = vsel %vm1575, %v1664, %v1665
        %v1667 = vrot.slane %v374, 5
        %v1668 = vrot.slane %v1667, 4
        %v1669 = vrot.slane %v375, 5
        %v1670 = vsel %vm1575, %v1668, %v1669
        %v1671 = vrot.slane %v1669, 4
        %v1672 = vrot.slane %v376, 5
        %v1673 = vsel %vm1575, %v1671, %v1672
        %v1674 = vrot.slane %v377, 5
        %v1675 = vrot.slane %v1674, 4
        %v1676 = vrot.slane %v378, 5
        %v1677 = vsel %vm1575, %v1675, %v1676
        %v1678 = vrot.slane %v1676, 4
        %v1679 = vrot.slane %v379, 5
        %v1680 = vsel %vm1575, %v1678, %v1679
        %v1681 = vrot.slane %v380, 5
        %v1682 = vrot.slane %v1681, 4
        %v1683 = vrot.slane %v381, 5
        %v1684 = vsel %vm1575, %v1682, %v1683
        %v1685 = vrot.slane %v1683, 4
        %v1686 = vrot.slane %v382, 5
        %v1687 = vsel %vm1575, %v1685, %v1686
        %v1688 = vld [vmem:[#allocation2] sm:$0xff]
        %v1689 = vld [vmem:[#allocation2 + $0x8] sm:$0xff]
        %v1690 = vld [vmem:[#allocation2 + $0x10] sm:$0xff]
        %v1691 = vld [vmem:[#allocation2 + $0x18] sm:$0xff]
        %v1692 = vld [vmem:[#allocation2 + $0x20] sm:$0xff]
        %v1693 = vld [vmem:[#allocation2 + $0x28] sm:$0xff]
        %v1694 = vld [vmem:[#allocation2 + $0x30] sm:$0xff]
        %v1695 = vld [vmem:[#allocation2 + $0x38] sm:$0xff]
        %v1696 = vld [vmem:[#allocation2 + $0x40] sm:$0xff]
        %v1697 = vld [vmem:[#allocation2 + $0x48] sm:$0xff]
        %v1698 = vld [vmem:[#allocation2 + $0x50] sm:$0xff]
        %v1699 = vld [vmem:[#allocation2 + $0x58] sm:$0xff]
        %v1700 = vld [vmem:[#allocation2 + $0x60] sm:$0xff]
        %v1701 = vld [vmem:[#allocation2 + $0x68] sm:$0xff]
        %v1702 = vld [vmem:[#allocation2 + $0x70] sm:$0xff]
        %v1703 = vld [vmem:[#allocation2 + $0x78] sm:$0xff]
        %v1704 = vld [vmem:[#allocation2 + $0x80] sm:$0xff]
        %v1705 = vld [vmem:[#allocation2 + $0x88] sm:$0xff]
        %v1706 = vld [vmem:[#allocation2 + $0x90] sm:$0xff]
        %v1707 = vld [vmem:[#allocation2 + $0x98] sm:$0xff]
        %v1708 = vld [vmem:[#allocation2 + $0xa0] sm:$0xff]
        %v1709 = vld [vmem:[#allocation2 + $0xa8] sm:$0xff]
        %v1710 = vld [vmem:[#allocation2 + $0xb0] sm:$0xff]
        %v1711 = vld [vmem:[#allocation2 + $0xb8] sm:$0xff]
        %v1712 = vld [vmem:[#allocation2 + $0xc0] sm:$0xff]
        %v1713 = vld [vmem:[#allocation2 + $0xc8] sm:$0xff]
        %v1714 = vld [vmem:[#allocation2 + $0xd0] sm:$0xff]
        %v1715 = vld [vmem:[#allocation2 + $0xd8] sm:$0xff]
        %v1716 = vld [vmem:[#allocation2 + $0xe0] sm:$0xff]
        %v1717 = vld [vmem:[#allocation2 + $0xe8] sm:$0xff]
        %v1718 = vld [vmem:[#allocation2 + $0xf0] sm:$0xff]
        %v1719 = vld [vmem:[#allocation2 + $0xf8] sm:$0xff]
        %s1720 = scalar_lea.vmem %s2, 40
        %v1721 = vld [vmem:[%s1720] sm:$0xf]
        %v1722 = vld [vmem:[%s1720 + $0x4] sm:$0xf]
        %v1723 = vld [vmem:[%s1720 + $0x8] sm:$0xf]
        %v1724 = vld [vmem:[%s1720 + $0xc] sm:$0xf]
        %v1725 = vld [vmem:[%s1720 + $0x10] sm:$0x3]
        %v1726 = vunpack.c.l.b16 %v1579
        %v1727 = vunpack.c.l.b16 %v1582
        %v1728 = vunpack.c.l.b16 %v1586
        %v1729 = vunpack.c.l.b16 %v1589
        %v1730 = vunpack.c.l.b16 %v1593
        %v1731 = vunpack.c.l.b16 %v1596
        %v1732 = vunpack.c.l.b16 %v1600
        %v1733 = vunpack.c.l.b16 %v1603
        %v1734 = vunpack.c.l.b16 %v1607
        %v1735 = vunpack.c.l.b16 %v1610
        %v1736 = vunpack.c.l.b16 %v1614
        %v1737 = vunpack.c.l.b16 %v1617
        %v1738 = vunpack.c.l.b16 %v1621
        %v1739 = vunpack.c.l.b16 %v1624
        %v1740 = vunpack.c.l.b16 %v1628
        %v1741 = vunpack.c.l.b16 %v1631
        %v1742 = vunpack.c.l.b16 %v1635
        %v1743 = vunpack.c.l.b16 %v1638
        %v1744 = vunpack.c.l.b16 %v1642
        %v1745 = vunpack.c.l.b16 %v1645
        %v1746 = vunpack.c.l.b16 %v1649
        %v1747 = vunpack.c.l.b16 %v1652
        %v1748 = vunpack.c.l.b16 %v1656
        %v1749 = vunpack.c.l.b16 %v1659
        %v1750 = vunpack.c.l.b16 %v1663
        %v1751 = vunpack.c.l.b16 %v1666
        %v1752 = vunpack.c.l.b16 %v1670
        %v1753 = vunpack.c.l.b16 %v1673
        %v1754 = vunpack.c.l.b16 %v1677
        %v1755 = vunpack.c.l.b16 %v1680
        %v1756 = vunpack.c.l.b16 %v1684
        %v1757 = vunpack.c.l.b16 %v1687
        %v1758 = vpack.c.b16 %v1727, %v1726
        %v1759 = vpack.c.b16 %v1729, %v1728
        %v1760 = vpack.c.b16 %v1731, %v1730
        %v1761 = vpack.c.b16 %v1733, %v1732
        %v1762 = vpack.c.b16 %v1735, %v1734
        %v1763 = vpack.c.b16 %v1737, %v1736
        %v1764 = vpack.c.b16 %v1739, %v1738
        %v1765 = vpack.c.b16 %v1741, %v1740
        %v1766 = vpack.c.b16 %v1743, %v1742
        %v1767 = vpack.c.b16 %v1745, %v1744
        %v1768 = vpack.c.b16 %v1747, %v1746
        %v1769 = vpack.c.b16 %v1749, %v1748
        %v1770 = vpack.c.b16 %v1751, %v1750
        %v1771 = vpack.c.b16 %v1753, %v1752
        %v1772 = vpack.c.b16 %v1755, %v1754
        %v1773 = vpack.c.b16 %v1757, %v1756
        %v1779 = vunpack.c.l.b16 %v1721
        %v1780 = vunpack.c.l.b16 %v1722
        %v1781 = vunpack.c.l.b16 %v1723
        %v1782 = vunpack.c.l.b16 %v1724
        %v1783 = vunpack.c.l.b16 %v1725
        %v1784 = vpack.c.b16 %v1780, %v1779
        %v1785 = vpack.c.b16 %v1782, %v1781
        %v1786 = vpack.c.b16 %v1783, %v1783
        %v1790 = vsel %vm515, %v1758, 0
        %v1793 = vsel %vm515, %v1759, 0
        %v1796 = vsel %vm515, %v1760, 0
        %v1799 = vsel %vm515, %v1761, 0
        %v1802 = vsel %vm515, %v1762, 0
        %v1805 = vsel %vm515, %v1763, 0
        %v1808 = vsel %vm515, %v1764, 0
        %v1811 = vsel %vm515, %v1765, 0
        %v1814 = vsel %vm515, %v1766, 0
        %v1817 = vsel %vm515, %v1767, 0
        %v1820 = vsel %vm515, %v1768, 0
        %v1823 = vsel %vm515, %v1769, 0
        %v1826 = vsel %vm515, %v1770, 0
        %v1829 = vsel %vm515, %v1771, 0
        %v1832 = vsel %vm515, %v1772, 0
        %v1835 = vsel %vm515, %v1773, 0
        %v1838 = vsel %vm564, %v1786, 0
        %1840 = vmatprep.subr.bf16.mxu0 0
        %1841 = vmatpush1.bf16.msra.mxu0 %v1784
        %1842 = vmatprep.subr.bf16.mxu0 0
        %1843 = vmatpush1.bf16.msra.mxu0 %v1785
        %1844 = vmatprep.subr.bf16.mxu0 0
        %1845 = vmatpush1.bf16.msra.mxu0 %v1838
        %1846 = vmatprep.subr.bf16.mxu0 0
        %1847 = vmatpush1.bf16.msra.mxu0 0
        %1848 = vmatprep.subr.bf16.mxu0 0
        %1849 = vmatpush1.bf16.msra.mxu0 0
        %1850 = vmatprep.subr.bf16.mxu0 0
        %1851 = vmatpush1.bf16.msra.mxu0 0
        %1852 = vmatprep.subr.bf16.mxu0 0
        %1853 = vmatpush1.bf16.msra.mxu0 0
        %1854 = vmatprep.subr.bf16.mxu0 0
        %1855 = vmatpush1.bf16.msra.mxu0 0
        %1856 = vmatprep.subr.bf16.mxu0 0
        %1857 = vmatpush1.bf16.msra.mxu0 0
        %1858 = vmatprep.subr.bf16.mxu0 0
        %1859 = vmatpush1.bf16.msra.mxu0 0
        %1860 = vmatprep.subr.bf16.mxu0 0
        %1861 = vmatpush1.bf16.msra.mxu0 0
        %1862 = vmatprep.subr.bf16.mxu0 0
        %1863 = vmatpush1.bf16.msra.mxu0 0
        %1864 = vmatprep.subr.bf16.mxu0 0
        %1865 = vmatpush1.bf16.msra.mxu0 0
        %1866 = vmatprep.subr.bf16.mxu0 0
        %1867 = vmatpush1.bf16.msra.mxu0 0
        %1868 = vmatprep.subr.bf16.mxu0 0
        %1869 = vmatpush1.bf16.msra.mxu0 0
        %1870 = vmatprep.subr.bf16.mxu0 0
        %1871 = vmatpush1.bf16.msra.mxu0 0
        %1872 = vmatprep.mubr.bf16.mxu0 0
        %1873 = vmatmul.mubr.bf16.gmra.mrb[0].mxu0 %v1790
        %v1874 = vpop.f32.mrb[0].mxu0
        %v1875 = vadd.f32 0.0, %v1874
        %v1876 = vpop.f32.mrb[0].mxu0
        %v1877 = vpop.f32.mrb[0].mxu0
        %v1878 = vadd.f32 0.0, %v1877
        %v1879 = vpop.f32.mrb[0].mxu0
        %1880 = vmatprep.mubr.bf16.mxu0 0
        %1881 = vmatmul.mubr.bf16.gmra.mrb[0].mxu0 %v1793
        %v1882 = vpop.f32.mrb[0].mxu0
        %v1883 = vadd.f32 0.0, %v1882
        %v1884 = vpop.f32.mrb[0].mxu0
        %v1885 = vpop.f32.mrb[0].mxu0
        %v1886 = vadd.f32 0.0, %v1885
        %v1887 = vpop.f32.mrb[0].mxu0
        %1888 = vmatprep.mubr.bf16.mxu0 0
        %1889 = vmatmul.mubr.bf16.gmra.mrb[0].mxu0 %v1796
        %v1890 = vpop.f32.mrb[0].mxu0
        %v1891 = vadd.f32 0.0, %v1890
        %v1892 = vpop.f32.mrb[0].mxu0
        %v1893 = vpop.f32.mrb[0].mxu0
        %v1894 = vadd.f32 0.0, %v1893
        %v1895 = vpop.f32.mrb[0].mxu0
        %1896 = vmatprep.mubr.bf16.mxu0 0
        %1897 = vmatmul.mubr.bf16.gmra.mrb[0].mxu0 %v1799
        %v1898 = vpop.f32.mrb[0].mxu0
        %v1899 = vadd.f32 0.0, %v1898
        %v1900 = vpop.f32.mrb[0].mxu0
        %v1901 = vpop.f32.mrb[0].mxu0
        %v1902 = vadd.f32 0.0, %v1901
        %v1903 = vpop.f32.mrb[0].mxu0
        %1904 = vmatprep.mubr.bf16.mxu0 0
        %1905 = vmatmul.mubr.bf16.gmra.mrb[0].mxu0 %v1802
        %v1906 = vpop.f32.mrb[0].mxu0
        %v1907 = vadd.f32 0.0, %v1906
        %v1908 = vpop.f32.mrb[0].mxu0
        %v1909 = vpop.f32.mrb[0].mxu0
        %v1910 = vadd.f32 0.0, %v1909
        %v1911 = vpop.f32.mrb[0].mxu0
        %1912 = vmatprep.mubr.bf16.mxu0 0
        %1913 = vmatmul.mubr.bf16.gmra.mrb[0].mxu0 %v1805
        %v1914 = vpop.f32.mrb[0].mxu0
        %v1915 = vadd.f32 0.0, %v1914
        %v1916 = vpop.f32.mrb[0].mxu0
        %v1917 = vpop.f32.mrb[0].mxu0
        %v1918 = vadd.f32 0.0, %v1917
        %v1919 = vpop.f32.mrb[0].mxu0
        %1920 = vmatprep.mubr.bf16.mxu0 0
        %1921 = vmatmul.mubr.bf16.gmra.mrb[0].mxu0 %v1808
        %v1922 = vpop.f32.mrb[0].mxu0
        %v1923 = vadd.f32 0.0, %v1922
        %v1924 = vpop.f32.mrb[0].mxu0
        %v1925 = vpop.f32.mrb[0].mxu0
        %v1926 = vadd.f32 0.0, %v1925
        %v1927 = vpop.f32.mrb[0].mxu0
        %1928 = vmatprep.mubr.bf16.mxu0 0
        %1929 = vmatmul.mubr.bf16.gmra.mrb[0].mxu0 %v1811
        %v1930 = vpop.f32.mrb[0].mxu0
        %v1931 = vadd.f32 0.0, %v1930
        %v1932 = vpop.f32.mrb[0].mxu0
        %v1933 = vpop.f32.mrb[0].mxu0
        %v1934 = vadd.f32 0.0, %v1933
        %v1935 = vpop.f32.mrb[0].mxu0
        %1936 = vmatprep.mubr.bf16.mxu0 0
        %1937 = vmatmul.mubr.bf16.gmra.mrb[0].mxu0 %v1814
        %v1938 = vpop.f32.mrb[0].mxu0
        %v1939 = vadd.f32 0.0, %v1938
        %v1940 = vpop.f32.mrb[0].mxu0
        %v1941 = vpop.f32.mrb[0].mxu0
        %v1942 = vadd.f32 0.0, %v1941
        %v1943 = vpop.f32.mrb[0].mxu0
        %1944 = vmatprep.mubr.bf16.mxu0 0
        %1945 = vmatmul.mubr.bf16.gmra.mrb[0].mxu0 %v1817
        %v1946 = vpop.f32.mrb[0].mxu0
        %v1947 = vadd.f32 0.0, %v1946
        %v1948 = vpop.f32.mrb[0].mxu0
        %v1949 = vpop.f32.mrb[0].mxu0
        %v1950 = vadd.f32 0.0, %v1949
        %v1951 = vpop.f32.mrb[0].mxu0
        %1952 = vmatprep.mubr.bf16.mxu0 0
        %1953 = vmatmul.mubr.bf16.gmra.mrb[0].mxu0 %v1820
        %v1954 = vpop.f32.mrb[0].mxu0
        %v1955 = vadd.f32 0.0, %v1954
        %v1956 = vpop.f32.mrb[0].mxu0
        %v1957 = vpop.f32.mrb[0].mxu0
        %v1958 = vadd.f32 0.0, %v1957
        %v1959 = vpop.f32.mrb[0].mxu0
        %1960 = vmatprep.mubr.bf16.mxu0 0
        %1961 = vmatmul.mubr.bf16.gmra.mrb[0].mxu0 %v1823
        %v1962 = vpop.f32.mrb[0].mxu0
        %v1963 = vadd.f32 0.0, %v1962
        %v1964 = vpop.f32.mrb[0].mxu0
        %v1965 = vpop.f32.mrb[0].mxu0
        %v1966 = vadd.f32 0.0, %v1965
        %v1967 = vpop.f32.mrb[0].mxu0
        %1968 = vmatprep.mubr.bf16.mxu0 0
        %1969 = vmatmul.mubr.bf16.gmra.mrb[0].mxu0 %v1826
        %v1970 = vpop.f32.mrb[0].mxu0
        %v1971 = vadd.f32 0.0, %v1970
        %v1972 = vpop.f32.mrb[0].mxu0
        %v1973 = vpop.f32.mrb[0].mxu0
        %v1974 = vadd.f32 0.0, %v1973
        %v1975 = vpop.f32.mrb[0].mxu0
        %1976 = vmatprep.mubr.bf16.mxu0 0
        %1977 = vmatmul.mubr.bf16.gmra.mrb[0].mxu0 %v1829
        %v1978 = vpop.f32.mrb[0].mxu0
        %v1979 = vadd.f32 0.0, %v1978
        %v1980 = vpop.f32.mrb[0].mxu0
        %v1981 = vpop.f32.mrb[0].mxu0
        %v1982 = vadd.f32 0.0, %v1981
        %v1983 = vpop.f32.mrb[0].mxu0
        %1984 = vmatprep.mubr.bf16.mxu0 0
        %1985 = vmatmul.mubr.bf16.gmra.mrb[0].mxu0 %v1832
        %v1986 = vpop.f32.mrb[0].mxu0
        %v1987 = vadd.f32 0.0, %v1986
        %v1988 = vpop.f32.mrb[0].mxu0
        %v1989 = vpop.f32.mrb[0].mxu0
        %v1990 = vadd.f32 0.0, %v1989
        %v1991 = vpop.f32.mrb[0].mxu0
        %1992 = vmatprep.mubr.bf16.mxu0 0
        %1993 = vmatmul.mubr.bf16.gmra.mrb[0].mxu0 %v1835
        %v1994 = vpop.f32.mrb[0].mxu0
        %v1995 = vadd.f32 0.0, %v1994
        %v1996 = vpop.f32.mrb[0].mxu0
        %v1997 = vpop.f32.mrb[0].mxu0
        %v1998 = vadd.f32 0.0, %v1997
        %v1999 = vpop.f32.mrb[0].mxu0
        %2000 = vdwg.mxu0
        %v2001 = vadd.f32 %v1688, %v1875
        %v2002 = vadd.f32 %v1689, %v1878
        %v2003 = vadd.f32 %v1690, %v1883
        %v2004 = vadd.f32 %v1691, %v1886
        %v2005 = vadd.f32 %v1692, %v1891
        %v2006 = vadd.f32 %v1693, %v1894
        %v2007 = vadd.f32 %v1694, %v1899
        %v2008 = vadd.f32 %v1695, %v1902
        %v2009 = vadd.f32 %v1696, %v1907
        %v2010 = vadd.f32 %v1697, %v1910
        %v2011 = vadd.f32 %v1698, %v1915
        %v2012 = vadd.f32 %v1699, %v1918
        %v2013 = vadd.f32 %v1700, %v1923
        %v2014 = vadd.f32 %v1701, %v1926
        %v2015 = vadd.f32 %v1702, %v1931
        %v2016 = vadd.f32 %v1703, %v1934
        %v2017 = vadd.f32 %v1704, %v1939
        %v2018 = vadd.f32 %v1705, %v1942
        %v2019 = vadd.f32 %v1706, %v1947
        %v2020 = vadd.f32 %v1707, %v1950
        %v2021 = vadd.f32 %v1708, %v1955
        %v2022 = vadd.f32 %v1709, %v1958
        %v2023 = vadd.f32 %v1710, %v1963
        %v2024 = vadd.f32 %v1711, %v1966
        %v2025 = vadd.f32 %v1712, %v1971
        %v2026 = vadd.f32 %v1713, %v1974
        %v2027 = vadd.f32 %v1714, %v1979
        %v2028 = vadd.f32 %v1715, %v1982
        %v2029 = vadd.f32 %v1716, %v1987
        %v2030 = vadd.f32 %v1717, %v1990
        %v2031 = vadd.f32 %v1718, %v1995
        %v2032 = vadd.f32 %v1719, %v1998
        %2033 = vst [vmem:[#allocation2] sm:$0xff] %v2001
        %2034 = vst [vmem:[#allocation2 + $0x8] sm:$0xff] %v2002
        %2035 = vst [vmem:[#allocation2 + $0x10] sm:$0xff] %v2003
        %2036 = vst [vmem:[#allocation2 + $0x18] sm:$0xff] %v2004
        %2037 = vst [vmem:[#allocation2 + $0x20] sm:$0xff] %v2005
        %2038 = vst [vmem:[#allocation2 + $0x28] sm:$0xff] %v2006
        %2039 = vst [vmem:[#allocation2 + $0x30] sm:$0xff] %v2007
        %2040 = vst [vmem:[#allocation2 + $0x38] sm:$0xff] %v2008
        %2041 = vst [vmem:[#allocation2 + $0x40] sm:$0xff] %v2009
        %2042 = vst [vmem:[#allocation2 + $0x48] sm:$0xff] %v2010
        %2043 = vst [vmem:[#allocation2 + $0x50] sm:$0xff] %v2011
        %2044 = vst [vmem:[#allocation2 + $0x58] sm:$0xff] %v2012
        %2045 = vst [vmem:[#allocation2 + $0x60] sm:$0xff] %v2013
        %2046 = vst [vmem:[#allocation2 + $0x68] sm:$0xff] %v2014
        %2047 = vst [vmem:[#allocation2 + $0x70] sm:$0xff] %v2015
        %2048 = vst [vmem:[#allocation2 + $0x78] sm:$0xff] %v2016
        %2049 = vst [vmem:[#allocation2 + $0x80] sm:$0xff] %v2017
        %2050 = vst [vmem:[#allocation2 + $0x88] sm:$0xff] %v2018
        %2051 = vst [vmem:[#allocation2 + $0x90] sm:$0xff] %v2019
        %2052 = vst [vmem:[#allocation2 + $0x98] sm:$0xff] %v2020
        %2053 = vst [vmem:[#allocation2 + $0xa0] sm:$0xff] %v2021
        %2054 = vst [vmem:[#allocation2 + $0xa8] sm:$0xff] %v2022
        %2055 = vst [vmem:[#allocation2 + $0xb0] sm:$0xff] %v2023
        %2056 = vst [vmem:[#allocation2 + $0xb8] sm:$0xff] %v2024
        %2057 = vst [vmem:[#allocation2 + $0xc0] sm:$0xff] %v2025
        %2058 = vst [vmem:[#allocation2 + $0xc8] sm:$0xff] %v2026
        %2059 = vst [vmem:[#allocation2 + $0xd0] sm:$0xff] %v2027
        %2060 = vst [vmem:[#allocation2 + $0xd8] sm:$0xff] %v2028
        %2061 = vst [vmem:[#allocation2 + $0xe0] sm:$0xff] %v2029
        %2062 = vst [vmem:[#allocation2 + $0xe8] sm:$0xff] %v2030
        %2063 = vst [vmem:[#allocation2 + $0xf0] sm:$0xff] %v2031
        %2064 = vst [vmem:[#allocation2 + $0xf8] sm:$0xff] %v2032
        %s2065 = sadd.s32 %s292, 1
        %s2066 = smul.u32 %s2065, 3
        %s2067 = smul.addr %s2066, 4
        %s2068 = scalar_lea.vmem %s277, %s2067
        %v2069 = vld [vmem:[%s2068] sm:$0xf]
        %v2070 = vld [vmem:[%s2068 + $0x4] sm:$0xf]
        %v2071 = vld [vmem:[%s2068 + $0x8] sm:$0x1]
        %v2072 = vld [vmem:[%s2068 + $0xc] sm:$0xf]
        %v2073 = vld [vmem:[%s2068 + $0x10] sm:$0xf]
        %v2074 = vld [vmem:[%s2068 + $0x14] sm:$0x1]
        %v2075 = vld [vmem:[%s2068 + $0x18] sm:$0xf]
        %v2076 = vld [vmem:[%s2068 + $0x1c] sm:$0xf]
        %v2077 = vld [vmem:[%s2068 + $0x20] sm:$0x1]
        %v2078 = vld [vmem:[%s2068 + $0x24] sm:$0xf]
        %v2079 = vld [vmem:[%s2068 + $0x28] sm:$0xf]
        %v2080 = vld [vmem:[%s2068 + $0x2c] sm:$0x1]
        %v2081 = vld [vmem:[%s2068 + $0x30] sm:$0xf]
        %v2082 = vld [vmem:[%s2068 + $0x34] sm:$0xf]
        %v2083 = vld [vmem:[%s2068 + $0x38] sm:$0x1]
        %v2084 = vld [vmem:[%s2068 + $0x3c] sm:$0xf]
        %v2085 = vld [vmem:[%s2068 + $0x40] sm:$0xf]
        %v2086 = vld [vmem:[%s2068 + $0x44] sm:$0x1]
        %v2087 = vld [vmem:[%s2068 + $0x48] sm:$0xf]
        %v2088 = vld [vmem:[%s2068 + $0x4c] sm:$0xf]
        %v2089 = vld [vmem:[%s2068 + $0x50] sm:$0x1]
        %v2090 = vld [vmem:[%s2068 + $0x54] sm:$0xf]
        %v2091 = vld [vmem:[%s2068 + $0x58] sm:$0xf]
        %v2092 = vld [vmem:[%s2068 + $0x5c] sm:$0x1]
        %v2093 = vld [vmem:[%s2068 + $0x60] sm:$0xf]
        %v2094 = vld [vmem:[%s2068 + $0x64] sm:$0xf]
        %v2095 = vld [vmem:[%s2068 + $0x68] sm:$0x1]
        %v2096 = vld [vmem:[%s2068 + $0x6c] sm:$0xf]
        %v2097 = vld [vmem:[%s2068 + $0x70] sm:$0xf]
        %v2098 = vld [vmem:[%s2068 + $0x74] sm:$0x1]
        %v2099 = vld [vmem:[%s2068 + $0x78] sm:$0xf]
        %v2100 = vld [vmem:[%s2068 + $0x7c] sm:$0xf]
        %v2101 = vld [vmem:[%s2068 + $0x80] sm:$0x1]
        %v2102 = vld [vmem:[%s2068 + $0x84] sm:$0xf]
        %v2103 = vld [vmem:[%s2068 + $0x88] sm:$0xf]
        %v2104 = vld [vmem:[%s2068 + $0x8c] sm:$0x1]
        %v2105 = vld [vmem:[%s2068 + $0x90] sm:$0xf]
        %v2106 = vld [vmem:[%s2068 + $0x94] sm:$0xf]
        %v2107 = vld [vmem:[%s2068 + $0x98] sm:$0x1]
        %v2108 = vld [vmem:[%s2068 + $0x9c] sm:$0xf]
        %v2109 = vld [vmem:[%s2068 + $0xa0] sm:$0xf]
        %v2110 = vld [vmem:[%s2068 + $0xa4] sm:$0x1]
        %v2111 = vld [vmem:[%s2068 + $0xa8] sm:$0xf]
        %v2112 = vld [vmem:[%s2068 + $0xac] sm:$0xf]
        %v2113 = vld [vmem:[%s2068 + $0xb0] sm:$0x1]
        %v2114 = vld [vmem:[%s2068 + $0xb4] sm:$0xf]
        %v2115 = vld [vmem:[%s2068 + $0xb8] sm:$0xf]
        %v2116 = vld [vmem:[%s2068 + $0xbc] sm:$0x1]
        %v2117 = vld [vmem:[#allocation2] sm:$0xff]
        %v2118 = vld [vmem:[#allocation2 + $0x8] sm:$0xff]
        %v2119 = vld [vmem:[#allocation2 + $0x10] sm:$0xff]
        %v2120 = vld [vmem:[#allocation2 + $0x18] sm:$0xff]
        %v2121 = vld [vmem:[#allocation2 + $0x20] sm:$0xff]
        %v2122 = vld [vmem:[#allocation2 + $0x28] sm:$0xff]
        %v2123 = vld [vmem:[#allocation2 + $0x30] sm:$0xff]
        %v2124 = vld [vmem:[#allocation2 + $0x38] sm:$0xff]
        %v2125 = vld [vmem:[#allocation2 + $0x40] sm:$0xff]
        %v2126 = vld [vmem:[#allocation2 + $0x48] sm:$0xff]
        %v2127 = vld [vmem:[#allocation2 + $0x50] sm:$0xff]
        %v2128 = vld [vmem:[#allocation2 + $0x58] sm:$0xff]
        %v2129 = vld [vmem:[#allocation2 + $0x60] sm:$0xff]
        %v2130 = vld [vmem:[#allocation2 + $0x68] sm:$0xff]
        %v2131 = vld [vmem:[#allocation2 + $0x70] sm:$0xff]
        %v2132 = vld [vmem:[#allocation2 + $0x78] sm:$0xff]
        %v2133 = vld [vmem:[#allocation2 + $0x80] sm:$0xff]
        %v2134 = vld [vmem:[#allocation2 + $0x88] sm:$0xff]
        %v2135 = vld [vmem:[#allocation2 + $0x90] sm:$0xff]
        %v2136 = vld [vmem:[#allocation2 + $0x98] sm:$0xff]
        %v2137 = vld [vmem:[#allocation2 + $0xa0] sm:$0xff]
        %v2138 = vld [vmem:[#allocation2 + $0xa8] sm:$0xff]
        %v2139 = vld [vmem:[#allocation2 + $0xb0] sm:$0xff]
        %v2140 = vld [vmem:[#allocation2 + $0xb8] sm:$0xff]
        %v2141 = vld [vmem:[#allocation2 + $0xc0] sm:$0xff]
        %v2142 = vld [vmem:[#allocation2 + $0xc8] sm:$0xff]
        %v2143 = vld [vmem:[#allocation2 + $0xd0] sm:$0xff]
        %v2144 = vld [vmem:[#allocation2 + $0xd8] sm:$0xff]
        %v2145 = vld [vmem:[#allocation2 + $0xe0] sm:$0xff]
        %v2146 = vld [vmem:[#allocation2 + $0xe8] sm:$0xff]
        %v2147 = vld [vmem:[#allocation2 + $0xf0] sm:$0xff]
        %v2148 = vld [vmem:[#allocation2 + $0xf8] sm:$0xff]
        %s2149 = scalar_lea.vmem %s2, 60
        %v2150 = vld [vmem:[%s2149] sm:$0xf]
        %v2151 = vld [vmem:[%s2149 + $0x4] sm:$0xf]
        %v2152 = vld [vmem:[%s2149 + $0x8] sm:$0xf]
        %v2153 = vld [vmem:[%s2149 + $0xc] sm:$0xf]
        %v2154 = vld [vmem:[%s2149 + $0x10] sm:$0x3]
        %v2187 = vunpack.c.l.b16 %v2069
        %v2188 = vunpack.c.l.b16 %v2070
        %v2189 = vunpack.c.l.b16 %v2072
        %v2190 = vunpack.c.l.b16 %v2073
        %v2191 = vunpack.c.l.b16 %v2075
        %v2192 = vunpack.c.l.b16 %v2076
        %v2193 = vunpack.c.l.b16 %v2078
        %v2194 = vunpack.c.l.b16 %v2079
        %v2195 = vunpack.c.l.b16 %v2081
        %v2196 = vunpack.c.l.b16 %v2082
        %v2197 = vunpack.c.l.b16 %v2084
        %v2198 = vunpack.c.l.b16 %v2085
        %v2199 = vunpack.c.l.b16 %v2087
        %v2200 = vunpack.c.l.b16 %v2088
        %v2201 = vunpack.c.l.b16 %v2090
        %v2202 = vunpack.c.l.b16 %v2091
        %v2203 = vunpack.c.l.b16 %v2093
        %v2204 = vunpack.c.l.b16 %v2094
        %v2205 = vunpack.c.l.b16 %v2096
        %v2206 = vunpack.c.l.b16 %v2097
        %v2207 = vunpack.c.l.b16 %v2099
        %v2208 = vunpack.c.l.b16 %v2100
        %v2209 = vunpack.c.l.b16 %v2102
        %v2210 = vunpack.c.l.b16 %v2103
        %v2211 = vunpack.c.l.b16 %v2105
        %v2212 = vunpack.c.l.b16 %v2106
        %v2213 = vunpack.c.l.b16 %v2108
        %v2214 = vunpack.c.l.b16 %v2109
        %v2215 = vunpack.c.l.b16 %v2111
        %v2216 = vunpack.c.l.b16 %v2112
        %v2217 = vunpack.c.l.b16 %v2114
        %v2218 = vunpack.c.l.b16 %v2115
        %v2219 = vpack.c.b16 %v2188, %v2187
        %v2220 = vpack.c.b16 %v2190, %v2189
        %v2221 = vpack.c.b16 %v2192, %v2191
        %v2222 = vpack.c.b16 %v2194, %v2193
        %v2223 = vpack.c.b16 %v2196, %v2195
        %v2224 = vpack.c.b16 %v2198, %v2197
        %v2225 = vpack.c.b16 %v2200, %v2199
        %v2226 = vpack.c.b16 %v2202, %v2201
        %v2227 = vpack.c.b16 %v2204, %v2203
        %v2228 = vpack.c.b16 %v2206, %v2205
        %v2229 = vpack.c.b16 %v2208, %v2207
        %v2230 = vpack.c.b16 %v2210, %v2209
        %v2231 = vpack.c.b16 %v2212, %v2211
        %v2232 = vpack.c.b16 %v2214, %v2213
        %v2233 = vpack.c.b16 %v2216, %v2215
        %v2234 = vpack.c.b16 %v2218, %v2217
        %v2240 = vunpack.c.l.b16 %v2150
        %v2241 = vunpack.c.l.b16 %v2151
        %v2242 = vunpack.c.l.b16 %v2152
        %v2243 = vunpack.c.l.b16 %v2153
        %v2244 = vunpack.c.l.b16 %v2154
        %v2245 = vpack.c.b16 %v2241, %v2240
        %v2246 = vpack.c.b16 %v2243, %v2242
        %v2247 = vpack.c.b16 %v2244, %v2244
        %v2251 = vsel %vm515, %v2219, 0
        %v2254 = vsel %vm515, %v2220, 0
        %v2257 = vsel %vm515, %v2221, 0
        %v2260 = vsel %vm515, %v2222, 0
        %v2263 = vsel %vm515, %v2223, 0
        %v2266 = vsel %vm515, %v2224, 0
        %v2269 = vsel %vm515, %v2225, 0
        %v2272 = vsel %vm515, %v2226, 0
        %v2275 = vsel %vm515, %v2227, 0
        %v2278 = vsel %vm515, %v2228, 0
        %v2281 = vsel %vm515, %v2229, 0
        %v2284 = vsel %vm515, %v2230, 0
        %v2287 = vsel %vm515, %v2231, 0
        %v2290 = vsel %vm515, %v2232, 0
        %v2293 = vsel %vm515, %v2233, 0
        %v2296 = vsel %vm515, %v2234, 0
        %v2299 = vsel %vm564, %v2247, 0
        %2301 = vmatprep.subr.bf16.mxu0 0
        %2302 = vmatpush1.bf16.msra.mxu0 %v2245
        %2303 = vmatprep.subr.bf16.mxu0 0
        %2304 = vmatpush1.bf16.msra.mxu0 %v2246
        %2305 = vmatprep.subr.bf16.mxu0 0
        %2306 = vmatpush1.bf16.msra.mxu0 %v2299
        %2307 = vmatprep.subr.bf16.mxu0 0
        %2308 = vmatpush1.bf16.msra.mxu0 0
        %2309 = vmatprep.subr.bf16.mxu0 0
        %2310 = vmatpush1.bf16.msra.mxu0 0
        %2311 = vmatprep.subr.bf16.mxu0 0
        %2312 = vmatpush1.bf16.msra.mxu0 0
        %2313 = vmatprep.subr.bf16.mxu0 0
        %2314 = vmatpush1.bf16.msra.mxu0 0
        %2315 = vmatprep.subr.bf16.mxu0 0
        %2316 = vmatpush1.bf16.msra.mxu0 0
        %2317 = vmatprep.subr.bf16.mxu0 0
        %2318 = vmatpush1.bf16.msra.mxu0 0
        %2319 = vmatprep.subr.bf16.mxu0 0
        %2320 = vmatpush1.bf16.msra.mxu0 0
        %2321 = vmatprep.subr.bf16.mxu0 0
        %2322 = vmatpush1.bf16.msra.mxu0 0
        %2323 = vmatprep.subr.bf16.mxu0 0
        %2324 = vmatpush1.bf16.msra.mxu0 0
        %2325 = vmatprep.subr.bf16.mxu0 0
        %2326 = vmatpush1.bf16.msra.mxu0 0
        %2327 = vmatprep.subr.bf16.mxu0 0
        %2328 = vmatpush1.bf16.msra.mxu0 0
        %2329 = vmatprep.subr.bf16.mxu0 0
        %2330 = vmatpush1.bf16.msra.mxu0 0
        %2331 = vmatprep.subr.bf16.mxu0 0
        %2332 = vmatpush1.bf16.msra.mxu0 0
        %2333 = vmatprep.mubr.bf16.mxu0 0
        %2334 = vmatmul.mubr.bf16.gmra.mrb[0].mxu0 %v2251
        %v2335 = vpop.f32.mrb[0].mxu0
        %v2336 = vadd.f32 0.0, %v2335
        %v2337 = vpop.f32.mrb[0].mxu0
        %v2338 = vpop.f32.mrb[0].mxu0
        %v2339 = vadd.f32 0.0, %v2338
        %v2340 = vpop.f32.mrb[0].mxu0
        %2341 = vmatprep.mubr.bf16.mxu0 0
        %2342 = vmatmul.mubr.bf16.gmra.mrb[0].mxu0 %v2254
        %v2343 = vpop.f32.mrb[0].mxu0
        %v2344 = vadd.f32 0.0, %v2343
        %v2345 = vpop.f32.mrb[0].mxu0
        %v2346 = vpop.f32.mrb[0].mxu0
        %v2347 = vadd.f32 0.0, %v2346
        %v2348 = vpop.f32.mrb[0].mxu0
        %2349 = vmatprep.mubr.bf16.mxu0 0
        %2350 = vmatmul.mubr.bf16.gmra.mrb[0].mxu0 %v2257
        %v2351 = vpop.f32.mrb[0].mxu0
        %v2352 = vadd.f32 0.0, %v2351
        %v2353 = vpop.f32.mrb[0].mxu0
        %v2354 = vpop.f32.mrb[0].mxu0
        %v2355 = vadd.f32 0.0, %v2354
        %v2356 = vpop.f32.mrb[0].mxu0
        %2357 = vmatprep.mubr.bf16.mxu0 0
        %2358 = vmatmul.mubr.bf16.gmra.mrb[0].mxu0 %v2260
        %v2359 = vpop.f32.mrb[0].mxu0
        %v2360 = vadd.f32 0.0, %v2359
        %v2361 = vpop.f32.mrb[0].mxu0
        %v2362 = vpop.f32.mrb[0].mxu0
        %v2363 = vadd.f32 0.0, %v2362
        %v2364 = vpop.f32.mrb[0].mxu0
        %2365 = vmatprep.mubr.bf16.mxu0 0
        %2366 = vmatmul.mubr.bf16.gmra.mrb[0].mxu0 %v2263
        %v2367 = vpop.f32.mrb[0].mxu0
        %v2368 = vadd.f32 0.0, %v2367
        %v2369 = vpop.f32.mrb[0].mxu0
        %v2370 = vpop.f32.mrb[0].mxu0
        %v2371 = vadd.f32 0.0, %v2370
        %v2372 = vpop.f32.mrb[0].mxu0
        %2373 = vmatprep.mubr.bf16.mxu0 0
        %2374 = vmatmul.mubr.bf16.gmra.mrb[0].mxu0 %v2266
        %v2375 = vpop.f32.mrb[0].mxu0
        %v2376 = vadd.f32 0.0, %v2375
        %v2377 = vpop.f32.mrb[0].mxu0
        %v2378 = vpop.f32.mrb[0].mxu0
        %v2379 = vadd.f32 0.0, %v2378
        %v2380 = vpop.f32.mrb[0].mxu0
        %2381 = vmatprep.mubr.bf16.mxu0 0
        %2382 = vmatmul.mubr.bf16.gmra.mrb[0].mxu0 %v2269
        %v2383 = vpop.f32.mrb[0].mxu0
        %v2384 = vadd.f32 0.0, %v2383
        %v2385 = vpop.f32.mrb[0].mxu0
        %v2386 = vpop.f32.mrb[0].mxu0
        %v2387 = vadd.f32 0.0, %v2386
        %v2388 = vpop.f32.mrb[0].mxu0
        %2389 = vmatprep.mubr.bf16.mxu0 0
        %2390 = vmatmul.mubr.bf16.gmra.mrb[0].mxu0 %v2272
        %v2391 = vpop.f32.mrb[0].mxu0
        %v2392 = vadd.f32 0.0, %v2391
        %v2393 = vpop.f32.mrb[0].mxu0
        %v2394 = vpop.f32.mrb[0].mxu0
        %v2395 = vadd.f32 0.0, %v2394
        %v2396 = vpop.f32.mrb[0].mxu0
        %2397 = vmatprep.mubr.bf16.mxu0 0
        %2398 = vmatmul.mubr.bf16.gmra.mrb[0].mxu0 %v2275
        %v2399 = vpop.f32.mrb[0].mxu0
        %v2400 = vadd.f32 0.0, %v2399
        %v2401 = vpop.f32.mrb[0].mxu0
        %v2402 = vpop.f32.mrb[0].mxu0
        %v2403 = vadd.f32 0.0, %v2402
        %v2404 = vpop.f32.mrb[0].mxu0
        %2405 = vmatprep.mubr.bf16.mxu0 0
        %2406 = vmatmul.mubr.bf16.gmra.mrb[0].mxu0 %v2278
        %v2407 = vpop.f32.mrb[0].mxu0
        %v2408 = vadd.f32 0.0, %v2407
        %v2409 = vpop.f32.mrb[0].mxu0
        %v2410 = vpop.f32.mrb[0].mxu0
        %v2411 = vadd.f32 0.0, %v2410
        %v2412 = vpop.f32.mrb[0].mxu0
        %2413 = vmatprep.mubr.bf16.mxu0 0
        %2414 = vmatmul.mubr.bf16.gmra.mrb[0].mxu0 %v2281
        %v2415 = vpop.f32.mrb[0].mxu0
        %v2416 = vadd.f32 0.0, %v2415
        %v2417 = vpop.f32.mrb[0].mxu0
        %v2418 = vpop.f32.mrb[0].mxu0
        %v2419 = vadd.f32 0.0, %v2418
        %v2420 = vpop.f32.mrb[0].mxu0
        %2421 = vmatprep.mubr.bf16.mxu0 0
        %2422 = vmatmul.mubr.bf16.gmra.mrb[0].mxu0 %v2284
        %v2423 = vpop.f32.mrb[0].mxu0
        %v2424 = vadd.f32 0.0, %v2423
        %v2425 = vpop.f32.mrb[0].mxu0
        %v2426 = vpop.f32.mrb[0].mxu0
        %v2427 = vadd.f32 0.0, %v2426
        %v2428 = vpop.f32.mrb[0].mxu0
        %2429 = vmatprep.mubr.bf16.mxu0 0
        %2430 = vmatmul.mubr.bf16.gmra.mrb[0].mxu0 %v2287
        %v2431 = vpop.f32.mrb[0].mxu0
        %v2432 = vadd.f32 0.0, %v2431
        %v2433 = vpop.f32.mrb[0].mxu0
        %v2434 = vpop.f32.mrb[0].mxu0
        %v2435 = vadd.f32 0.0, %v2434
        %v2436 = vpop.f32.mrb[0].mxu0
        %2437 = vmatprep.mubr.bf16.mxu0 0
        %2438 = vmatmul.mubr.bf16.gmra.mrb[0].mxu0 %v2290
        %v2439 = vpop.f32.mrb[0].mxu0
        %v2440 = vadd.f32 0.0, %v2439
        %v2441 = vpop.f32.mrb[0].mxu0
        %v2442 = vpop.f32.mrb[0].mxu0
        %v2443 = vadd.f32 0.0, %v2442
        %v2444 = vpop.f32.mrb[0].mxu0
        %2445 = vmatprep.mubr.bf16.mxu0 0
        %2446 = vmatmul.mubr.bf16.gmra.mrb[0].mxu0 %v2293
        %v2447 = vpop.f32.mrb[0].mxu0
        %v2448 = vadd.f32 0.0, %v2447
        %v2449 = vpop.f32.mrb[0].mxu0
        %v2450 = vpop.f32.mrb[0].mxu0
        %v2451 = vadd.f32 0.0, %v2450
        %v2452 = vpop.f32.mrb[0].mxu0
        %2453 = vmatprep.mubr.bf16.mxu0 0
        %2454 = vmatmul.mubr.bf16.gmra.mrb[0].mxu0 %v2296
        %v2455 = vpop.f32.mrb[0].mxu0
        %v2456 = vadd.f32 0.0, %v2455
        %v2457 = vpop.f32.mrb[0].mxu0
        %v2458 = vpop.f32.mrb[0].mxu0
        %v2459 = vadd.f32 0.0, %v2458
        %v2460 = vpop.f32.mrb[0].mxu0
        %2461 = vdwg.mxu0
        %v2462 = vadd.f32 %v2117, %v2336
        %v2463 = vadd.f32 %v2118, %v2339
        %v2464 = vadd.f32 %v2119, %v2344
        %v2465 = vadd.f32 %v2120, %v2347
        %v2466 = vadd.f32 %v2121, %v2352
        %v2467 = vadd.f32 %v2122, %v2355
        %v2468 = vadd.f32 %v2123, %v2360
        %v2469 = vadd.f32 %v2124, %v2363
        %v2470 = vadd.f32 %v2125, %v2368
        %v2471 = vadd.f32 %v2126, %v2371
        %v2472 = vadd.f32 %v2127, %v2376
        %v2473 = vadd.f32 %v2128, %v2379
        %v2474 = vadd.f32 %v2129, %v2384
        %v2475 = vadd.f32 %v2130, %v2387
        %v2476 = vadd.f32 %v2131, %v2392
        %v2477 = vadd.f32 %v2132, %v2395
        %v2478 = vadd.f32 %v2133, %v2400
        %v2479 = vadd.f32 %v2134, %v2403
        %v2480 = vadd.f32 %v2135, %v2408
        %v2481 = vadd.f32 %v2136, %v2411
        %v2482 = vadd.f32 %v2137, %v2416
        %v2483 = vadd.f32 %v2138, %v2419
        %v2484 = vadd.f32 %v2139, %v2424
        %v2485 = vadd.f32 %v2140, %v2427
        %v2486 = vadd.f32 %v2141, %v2432
        %v2487 = vadd.f32 %v2142, %v2435
        %v2488 = vadd.f32 %v2143, %v2440
        %v2489 = vadd.f32 %v2144, %v2443
        %v2490 = vadd.f32 %v2145, %v2448
        %v2491 = vadd.f32 %v2146, %v2451
        %v2492 = vadd.f32 %v2147, %v2456
        %v2493 = vadd.f32 %v2148, %v2459
        %2494 = vst [vmem:[#allocation2] sm:$0xff] %v2462
        %2495 = vst [vmem:[#allocation2 + $0x8] sm:$0xff] %v2463
        %2496 = vst [vmem:[#allocation2 + $0x10] sm:$0xff] %v2464
        %2497 = vst [vmem:[#allocation2 + $0x18] sm:$0xff] %v2465
        %2498 = vst [vmem:[#allocation2 + $0x20] sm:$0xff] %v2466
        %2499 = vst [vmem:[#allocation2 + $0x28] sm:$0xff] %v2467
        %2500 = vst [vmem:[#allocation2 + $0x30] sm:$0xff] %v2468
        %2501 = vst [vmem:[#allocation2 + $0x38] sm:$0xff] %v2469
        %2502 = vst [vmem:[#allocation2 + $0x40] sm:$0xff] %v2470
        %2503 = vst [vmem:[#allocation2 + $0x48] sm:$0xff] %v2471
        %2504 = vst [vmem:[#allocation2 + $0x50] sm:$0xff] %v2472
        %2505 = vst [vmem:[#allocation2 + $0x58] sm:$0xff] %v2473
        %2506 = vst [vmem:[#allocation2 + $0x60] sm:$0xff] %v2474
        %2507 = vst [vmem:[#allocation2 + $0x68] sm:$0xff] %v2475
        %2508 = vst [vmem:[#allocation2 + $0x70] sm:$0xff] %v2476
        %2509 = vst [vmem:[#allocation2 + $0x78] sm:$0xff] %v2477
        %2510 = vst [vmem:[#allocation2 + $0x80] sm:$0xff] %v2478
        %2511 = vst [vmem:[#allocation2 + $0x88] sm:$0xff] %v2479
        %2512 = vst [vmem:[#allocation2 + $0x90] sm:$0xff] %v2480
        %2513 = vst [vmem:[#allocation2 + $0x98] sm:$0xff] %v2481
        %2514 = vst [vmem:[#allocation2 + $0xa0] sm:$0xff] %v2482
        %2515 = vst [vmem:[#allocation2 + $0xa8] sm:$0xff] %v2483
        %2516 = vst [vmem:[#allocation2 + $0xb0] sm:$0xff] %v2484
        %2517 = vst [vmem:[#allocation2 + $0xb8] sm:$0xff] %v2485
        %2518 = vst [vmem:[#allocation2 + $0xc0] sm:$0xff] %v2486
        %2519 = vst [vmem:[#allocation2 + $0xc8] sm:$0xff] %v2487
        %2520 = vst [vmem:[#allocation2 + $0xd0] sm:$0xff] %v2488
        %2521 = vst [vmem:[#allocation2 + $0xd8] sm:$0xff] %v2489
        %2522 = vst [vmem:[#allocation2 + $0xe0] sm:$0xff] %v2490
        %2523 = vst [vmem:[#allocation2 + $0xe8] sm:$0xff] %v2491
        %2524 = vst [vmem:[#allocation2 + $0xf0] sm:$0xff] %v2492
        %2525 = vst [vmem:[#allocation2 + $0xf8] sm:$0xff] %v2493
        %v2527 = vshrl.u32 %v2069, 16
        %v2529 = vrot.slane %v2527, 4
        %v2530 = vshll.u32 %v2069, 16
        %v2532 = vrot.slane %v2530, 5
        %v2533 = vor.u32 %v2529, %v2532
        %v2534 = vrot.slane %v2533, 4
        %v2536 = vshll.u32 %v2070, 16
        %v2538 = vrot.slane %v2536, 5
        %v2539 = vsel %vm795, %v2534, %v2538
        %v2540 = vshrl.u32 %v2070, 16
        %v2542 = vrot.slane %v2540, 4
        %v2543 = vor.u32 %v2542, %v2538
        %v2544 = vrot.slane %v2543, 4
        %v2546 = vshll.u32 %v2071, 16
        %v2548 = vrot.slane %v2546, 5
        %v2549 = vsel %vm795, %v2544, %v2548
        %v2551 = vshrl.u32 %v2072, 16
        %v2553 = vrot.slane %v2551, 4
        %v2554 = vshll.u32 %v2072, 16
        %v2556 = vrot.slane %v2554, 5
        %v2557 = vor.u32 %v2553, %v2556
        %v2558 = vrot.slane %v2557, 4
        %v2560 = vshll.u32 %v2073, 16
        %v2562 = vrot.slane %v2560, 5
        %v2563 = vsel %vm795, %v2558, %v2562
        %v2564 = vshrl.u32 %v2073, 16
        %v2566 = vrot.slane %v2564, 4
        %v2567 = vor.u32 %v2566, %v2562
        %v2568 = vrot.slane %v2567, 4
        %v2570 = vshll.u32 %v2074, 16
        %v2572 = vrot.slane %v2570, 5
        %v2573 = vsel %vm795, %v2568, %v2572
        %v2575 = vshrl.u32 %v2075, 16
        %v2577 = vrot.slane %v2575, 4
        %v2578 = vshll.u32 %v2075, 16
        %v2580 = vrot.slane %v2578, 5
        %v2581 = vor.u32 %v2577, %v2580
        %v2582 = vrot.slane %v2581, 4
        %v2584 = vshll.u32 %v2076, 16
        %v2586 = vrot.slane %v2584, 5
        %v2587 = vsel %vm795, %v2582, %v2586
        %v2588 = vshrl.u32 %v2076, 16
        %v2590 = vrot.slane %v2588, 4
        %v2591 = vor.u32 %v2590, %v2586
        %v2592 = vrot.slane %v2591, 4
        %v2594 = vshll.u32 %v2077, 16
        %v2596 = vrot.slane %v2594, 5
        %v2597 = vsel %vm795, %v2592, %v2596
        %v2599 = vshrl.u32 %v2078, 16
        %v2601 = vrot.slane %v2599, 4
        %v2602 = vshll.u32 %v2078, 16
        %v2604 = vrot.slane %v2602, 5
        %v2605 = vor.u32 %v2601, %v2604
        %v2606 = vrot.slane %v2605, 4
        %v2608 = vshll.u32 %v2079, 16
        %v2610 = vrot.slane %v2608, 5
        %v2611 = vsel %vm795, %v2606, %v2610
        %v2612 = vshrl.u32 %v2079, 16
        %v2614 = vrot.slane %v2612, 4
        %v2615 = vor.u32 %v2614, %v2610
        %v2616 = vrot.slane %v2615, 4
        %v2618 = vshll.u32 %v2080, 16
        %v2620 = vrot.slane %v2618, 5
        %v2621 = vsel %vm795, %v2616, %v2620
        %v2623 = vshrl.u32 %v2081, 16
        %v2625 = vrot.slane %v2623, 4
        %v2626 = vshll.u32 %v2081, 16
        %v2628 = vrot.slane %v2626, 5
        %v2629 = vor.u32 %v2625, %v2628
        %v2630 = vrot.slane %v2629, 4
        %v2632 = vshll.u32 %v2082, 16
        %v2634 = vrot.slane %v2632, 5
        %v2635 = vsel %vm795, %v2630, %v2634
        %v2636 = vshrl.u32 %v2082, 16
        %v2638 = vrot.slane %v2636, 4
        %v2639 = vor.u32 %v2638, %v2634
        %v2640 = vrot.slane %v2639, 4
        %v2642 = vshll.u32 %v2083, 16
        %v2644 = vrot.slane %v2642, 5
        %v2645 = vsel %vm795, %v2640, %v2644
        %v2647 = vshrl.u32 %v2084, 16
        %v2649 = vrot.slane %v2647, 4
        %v2650 = vshll.u32 %v2084, 16
        %v2652 = vrot.slane %v2650, 5
        %v2653 = vor.u32 %v2649, %v2652
        %v2654 = vrot.slane %v2653, 4
        %v2656 = vshll.u32 %v2085, 16
        %v2658 = vrot.slane %v2656, 5
        %v2659 = vsel %vm795, %v2654, %v2658
        %v2660 = vshrl.u32 %v2085, 16
        %v2662 = vrot.slane %v2660, 4
        %v2663 = vor.u32 %v2662, %v2658
        %v2664 = vrot.slane %v2663, 4
        %v2666 = vshll.u32 %v2086, 16
        %v2668 = vrot.slane %v2666, 5
        %v2669 = vsel %vm795, %v2664, %v2668
        %v2671 = vshrl.u32 %v2087, 16
        %v2673 = vrot.slane %v2671, 4
        %v2674 = vshll.u32 %v2087, 16
        %v2676 = vrot.slane %v2674, 5
        %v2677 = vor.u32 %v2673, %v2676
        %v2678 = vrot.slane %v2677, 4
        %v2680 = vshll.u32 %v2088, 16
        %v2682 = vrot.slane %v2680, 5
        %v2683 = vsel %vm795, %v2678, %v2682
        %v2684 = vshrl.u32 %v2088, 16
        %v2686 = vrot.slane %v2684, 4
        %v2687 = vor.u32 %v2686, %v2682
        %v2688 = vrot.slane %v2687, 4
        %v2690 = vshll.u32 %v2089, 16
        %v2692 = vrot.slane %v2690, 5
        %v2693 = vsel %vm795, %v2688, %v2692
        %v2695 = vshrl.u32 %v2090, 16
        %v2697 = vrot.slane %v2695, 4
        %v2698 = vshll.u32 %v2090, 16
        %v2700 = vrot.slane %v2698, 5
        %v2701 = vor.u32 %v2697, %v2700
        %v2702 = vrot.slane %v2701, 4
        %v2704 = vshll.u32 %v2091, 16
        %v2706 = vrot.slane %v2704, 5
        %v2707 = vsel %vm795, %v2702, %v2706
        %v2708 = vshrl.u32 %v2091, 16
        %v2710 = vrot.slane %v2708, 4
        %v2711 = vor.u32 %v2710, %v2706
        %v2712 = vrot.slane %v2711, 4
        %v2714 = vshll.u32 %v2092, 16
        %v2716 = vrot.slane %v2714, 5
        %v2717 = vsel %vm795, %v2712, %v2716
        %v2719 = vshrl.u32 %v2093, 16
        %v2721 = vrot.slane %v2719, 4
        %v2722 = vshll.u32 %v2093, 16
        %v2724 = vrot.slane %v2722, 5
        %v2725 = vor.u32 %v2721, %v2724
        %v2726 = vrot.slane %v2725, 4
        %v2728 = vshll.u32 %v2094, 16
        %v2730 = vrot.slane %v2728, 5
        %v2731 = vsel %vm795, %v2726, %v2730
        %v2732 = vshrl.u32 %v2094, 16
        %v2734 = vrot.slane %v2732, 4
        %v2735 = vor.u32 %v2734, %v2730
        %v2736 = vrot.slane %v2735, 4
        %v2738 = vshll.u32 %v2095, 16
        %v2740 = vrot.slane %v2738, 5
        %v2741 = vsel %vm795, %v2736, %v2740
        %v2743 = vshrl.u32 %v2096, 16
        %v2745 = vrot.slane %v2743, 4
        %v2746 = vshll.u32 %v2096, 16
        %v2748 = vrot.slane %v2746, 5
        %v2749 = vor.u32 %v2745, %v2748
        %v2750 = vrot.slane %v2749, 4
        %v2752 = vshll.u32 %v2097, 16
        %v2754 = vrot.slane %v2752, 5
        %v2755 = vsel %vm795, %v2750, %v2754
        %v2756 = vshrl.u32 %v2097, 16
        %v2758 = vrot.slane %v2756, 4
        %v2759 = vor.u32 %v2758, %v2754
        %v2760 = vrot.slane %v2759, 4
        %v2762 = vshll.u32 %v2098, 16
        %v2764 = vrot.slane %v2762, 5
        %v2765 = vsel %vm795, %v2760, %v2764
        %v2767 = vshrl.u32 %v2099, 16
        %v2769 = vrot.slane %v2767, 4
        %v2770 = vshll.u32 %v2099, 16
        %v2772 = vrot.slane %v2770, 5
        %v2773 = vor.u32 %v2769, %v2772
        %v2774 = vrot.slane %v2773, 4
        %v2776 = vshll.u32 %v2100, 16
        %v2778 = vrot.slane %v2776, 5
        %v2779 = vsel %vm795, %v2774, %v2778
        %v2780 = vshrl.u32 %v2100, 16
        %v2782 = vrot.slane %v2780, 4
        %v2783 = vor.u32 %v2782, %v2778
        %v2784 = vrot.slane %v2783, 4
        %v2786 = vshll.u32 %v2101, 16
        %v2788 = vrot.slane %v2786, 5
        %v2789 = vsel %vm795, %v2784, %v2788
        %v2791 = vshrl.u32 %v2102, 16
        %v2793 = vrot.slane %v2791, 4
        %v2794 = vshll.u32 %v2102, 16
        %v2796 = vrot.slane %v2794, 5
        %v2797 = vor.u32 %v2793, %v2796
        %v2798 = vrot.slane %v2797, 4
        %v2800 = vshll.u32 %v2103, 16
        %v2802 = vrot.slane %v2800, 5
        %v2803 = vsel %vm795, %v2798, %v2802
        %v2804 = vshrl.u32 %v2103, 16
        %v2806 = vrot.slane %v2804, 4
        %v2807 = vor.u32 %v2806, %v2802
        %v2808 = vrot.slane %v2807, 4
        %v2810 = vshll.u32 %v2104, 16
        %v2812 = vrot.slane %v2810, 5
        %v2813 = vsel %vm795, %v2808, %v2812
        %v2815 = vshrl.u32 %v2105, 16
        %v2817 = vrot.slane %v2815, 4
        %v2818 = vshll.u32 %v2105, 16
        %v2820 = vrot.slane %v2818, 5
        %v2821 = vor.u32 %v2817, %v2820
        %v2822 = vrot.slane %v2821, 4
        %v2824 = vshll.u32 %v2106, 16
        %v2826 = vrot.slane %v2824, 5
        %v2827 = vsel %vm795, %v2822, %v2826
        %v2828 = vshrl.u32 %v2106, 16
        %v2830 = vrot.slane %v2828, 4
        %v2831 = vor.u32 %v2830, %v2826
        %v2832 = vrot.slane %v2831, 4
        %v2834 = vshll.u32 %v2107, 16
        %v2836 = vrot.slane %v2834, 5
        %v2837 = vsel %vm795, %v2832, %v2836
        %v2839 = vshrl.u32 %v2108, 16
        %v2841 = vrot.slane %v2839, 4
        %v2842 = vshll.u32 %v2108, 16
        %v2844 = vrot.slane %v2842, 5
        %v2845 = vor.u32 %v2841, %v2844
        %v2846 = vrot.slane %v2845, 4
        %v2848 = vshll.u32 %v2109, 16
        %v2850 = vrot.slane %v2848, 5
        %v2851 = vsel %vm795, %v2846, %v2850
        %v2852 = vshrl.u32 %v2109, 16
        %v2854 = vrot.slane %v2852, 4
        %v2855 = vor.u32 %v2854, %v2850
        %v2856 = vrot.slane %v2855, 4
        %v2858 = vshll.u32 %v2110, 16
        %v2860 = vrot.slane %v2858, 5
        %v2861 = vsel %vm795, %v2856, %v2860
        %v2863 = vshrl.u32 %v2111, 16
        %v2865 = vrot.slane %v2863, 4
        %v2866 = vshll.u32 %v2111, 16
        %v2868 = vrot.slane %v2866, 5
        %v2869 = vor.u32 %v2865, %v2868
        %v2870 = vrot.slane %v2869, 4
        %v2872 = vshll.u32 %v2112, 16
        %v2874 = vrot.slane %v2872, 5
        %v2875 = vsel %vm795, %v2870, %v2874
        %v2876 = vshrl.u32 %v2112, 16
        %v2878 = vrot.slane %v2876, 4
        %v2879 = vor.u32 %v2878, %v2874
        %v2880 = vrot.slane %v2879, 4
        %v2882 = vshll.u32 %v2113, 16
        %v2884 = vrot.slane %v2882, 5
        %v2885 = vsel %vm795, %v2880, %v2884
        %v2887 = vshrl.u32 %v2114, 16
        %v2889 = vrot.slane %v2887, 4
        %v2890 = vshll.u32 %v2114, 16
        %v2892 = vrot.slane %v2890, 5
        %v2893 = vor.u32 %v2889, %v2892
        %v2894 = vrot.slane %v2893, 4
        %v2896 = vshll.u32 %v2115, 16
        %v2898 = vrot.slane %v2896, 5
        %v2899 = vsel %vm795, %v2894, %v2898
        %v2900 = vshrl.u32 %v2115, 16
        %v2902 = vrot.slane %v2900, 4
        %v2903 = vor.u32 %v2902, %v2898
        %v2904 = vrot.slane %v2903, 4
        %v2906 = vshll.u32 %v2116, 16
        %v2908 = vrot.slane %v2906, 5
        %v2909 = vsel %vm795, %v2904, %v2908
        %v2910 = vld [vmem:[#allocation2] sm:$0xff]
        %v2911 = vld [vmem:[#allocation2 + $0x8] sm:$0xff]
        %v2912 = vld [vmem:[#allocation2 + $0x10] sm:$0xff]
        %v2913 = vld [vmem:[#allocation2 + $0x18] sm:$0xff]
        %v2914 = vld [vmem:[#allocation2 + $0x20] sm:$0xff]
        %v2915 = vld [vmem:[#allocation2 + $0x28] sm:$0xff]
        %v2916 = vld [vmem:[#allocation2 + $0x30] sm:$0xff]
        %v2917 = vld [vmem:[#allocation2 + $0x38] sm:$0xff]
        %v2918 = vld [vmem:[#allocation2 + $0x40] sm:$0xff]
        %v2919 = vld [vmem:[#allocation2 + $0x48] sm:$0xff]
        %v2920 = vld [vmem:[#allocation2 + $0x50] sm:$0xff]
        %v2921 = vld [vmem:[#allocation2 + $0x58] sm:$0xff]
        %v2922 = vld [vmem:[#allocation2 + $0x60] sm:$0xff]
        %v2923 = vld [vmem:[#allocation2 + $0x68] sm:$0xff]
        %v2924 = vld [vmem:[#allocation2 + $0x70] sm:$0xff]
        %v2925 = vld [vmem:[#allocation2 + $0x78] sm:$0xff]
        %v2926 = vld [vmem:[#allocation2 + $0x80] sm:$0xff]
        %v2927 = vld [vmem:[#allocation2 + $0x88] sm:$0xff]
        %v2928 = vld [vmem:[#allocation2 + $0x90] sm:$0xff]
        %v2929 = vld [vmem:[#allocation2 + $0x98] sm:$0xff]
        %v2930 = vld [vmem:[#allocation2 + $0xa0] sm:$0xff]
        %v2931 = vld [vmem:[#allocation2 + $0xa8] sm:$0xff]
        %v2932 = vld [vmem:[#allocation2 + $0xb0] sm:$0xff]
        %v2933 = vld [vmem:[#allocation2 + $0xb8] sm:$0xff]
        %v2934 = vld [vmem:[#allocation2 + $0xc0] sm:$0xff]
        %v2935 = vld [vmem:[#allocation2 + $0xc8] sm:$0xff]
        %v2936 = vld [vmem:[#allocation2 + $0xd0] sm:$0xff]
        %v2937 = vld [vmem:[#allocation2 + $0xd8] sm:$0xff]
        %v2938 = vld [vmem:[#allocation2 + $0xe0] sm:$0xff]
        %v2939 = vld [vmem:[#allocation2 + $0xe8] sm:$0xff]
        %v2940 = vld [vmem:[#allocation2 + $0xf0] sm:$0xff]
        %v2941 = vld [vmem:[#allocation2 + $0xf8] sm:$0xff]
        %s2942 = scalar_lea.vmem %s2, 80
        %v2943 = vld [vmem:[%s2942] sm:$0xf]
        %v2944 = vld [vmem:[%s2942 + $0x4] sm:$0xf]
        %v2945 = vld [vmem:[%s2942 + $0x8] sm:$0xf]
        %v2946 = vld [vmem:[%s2942 + $0xc] sm:$0xf]
        %v2947 = vld [vmem:[%s2942 + $0x10] sm:$0x3]
        %v2948 = vunpack.c.l.b16 %v2539
        %v2949 = vunpack.c.l.b16 %v2549
        %v2950 = vunpack.c.l.b16 %v2563
        %v2951 = vunpack.c.l.b16 %v2573
        %v2952 = vunpack.c.l.b16 %v2587
        %v2953 = vunpack.c.l.b16 %v2597
        %v2954 = vunpack.c.l.b16 %v2611
        %v2955 = vunpack.c.l.b16 %v2621
        %v2956 = vunpack.c.l.b16 %v2635
        %v2957 = vunpack.c.l.b16 %v2645
        %v2958 = vunpack.c.l.b16 %v2659
        %v2959 = vunpack.c.l.b16 %v2669
        %v2960 = vunpack.c.l.b16 %v2683
        %v2961 = vunpack.c.l.b16 %v2693
        %v2962 = vunpack.c.l.b16 %v2707
        %v2963 = vunpack.c.l.b16 %v2717
        %v2964 = vunpack.c.l.b16 %v2731
        %v2965 = vunpack.c.l.b16 %v2741
        %v2966 = vunpack.c.l.b16 %v2755
        %v2967 = vunpack.c.l.b16 %v2765
        %v2968 = vunpack.c.l.b16 %v2779
        %v2969 = vunpack.c.l.b16 %v2789
        %v2970 = vunpack.c.l.b16 %v2803
        %v2971 = vunpack.c.l.b16 %v2813
        %v2972 = vunpack.c.l.b16 %v2827
        %v2973 = vunpack.c.l.b16 %v2837
        %v2974 = vunpack.c.l.b16 %v2851
        %v2975 = vunpack.c.l.b16 %v2861
        %v2976 = vunpack.c.l.b16 %v2875
        %v2977 = vunpack.c.l.b16 %v2885
        %v2978 = vunpack.c.l.b16 %v2899
        %v2979 = vunpack.c.l.b16 %v2909
        %v2980 = vpack.c.b16 %v2949, %v2948
        %v2981 = vpack.c.b16 %v2951, %v2950
        %v2982 = vpack.c.b16 %v2953, %v2952
        %v2983 = vpack.c.b16 %v2955, %v2954
        %v2984 = vpack.c.b16 %v2957, %v2956
        %v2985 = vpack.c.b16 %v2959, %v2958
        %v2986 = vpack.c.b16 %v2961, %v2960
        %v2987 = vpack.c.b16 %v2963, %v2962
        %v2988 = vpack.c.b16 %v2965, %v2964
        %v2989 = vpack.c.b16 %v2967, %v2966
        %v2990 = vpack.c.b16 %v2969, %v2968
        %v2991 = vpack.c.b16 %v2971, %v2970
        %v2992 = vpack.c.b16 %v2973, %v2972
        %v2993 = vpack.c.b16 %v2975, %v2974
        %v2994 = vpack.c.b16 %v2977, %v2976
        %v2995 = vpack.c.b16 %v2979, %v2978
        %v3001 = vunpack.c.l.b16 %v2943
        %v3002 = vunpack.c.l.b16 %v2944
        %v3003 = vunpack.c.l.b16 %v2945
        %v3004 = vunpack.c.l.b16 %v2946
        %v3005 = vunpack.c.l.b16 %v2947
        %v3006 = vpack.c.b16 %v3002, %v3001
        %v3007 = vpack.c.b16 %v3004, %v3003
        %v3008 = vpack.c.b16 %v3005, %v3005
        %v3012 = vsel %vm515, %v2980, 0
        %v3015 = vsel %vm515, %v2981, 0
        %v3018 = vsel %vm515, %v2982, 0
        %v3021 = vsel %vm515, %v2983, 0
        %v3024 = vsel %vm515, %v2984, 0
        %v3027 = vsel %vm515, %v2985, 0
        %v3030 = vsel %vm515, %v2986, 0
        %v3033 = vsel %vm515, %v2987, 0
        %v3036 = vsel %vm515, %v2988, 0
        %v3039 = vsel %vm515, %v2989, 0
        %v3042 = vsel %vm515, %v2990, 0
        %v3045 = vsel %vm515, %v2991, 0
        %v3048 = vsel %vm515, %v2992, 0
        %v3051 = vsel %vm515, %v2993, 0
        %v3054 = vsel %vm515, %v2994, 0
        %v3057 = vsel %vm515, %v2995, 0
        %v3060 = vsel %vm564, %v3008, 0
        %3062 = vmatprep.subr.bf16.mxu0 0
        %3063 = vmatpush1.bf16.msra.mxu0 %v3006
        %3064 = vmatprep.subr.bf16.mxu0 0
        %3065 = vmatpush1.bf16.msra.mxu0 %v3007
        %3066 = vmatprep.subr.bf16.mxu0 0
        %3067 = vmatpush1.bf16.msra.mxu0 %v3060
        %3068 = vmatprep.subr.bf16.mxu0 0
        %3069 = vmatpush1.bf16.msra.mxu0 0
        %3070 = vmatprep.subr.bf16.mxu0 0
        %3071 = vmatpush1.bf16.msra.mxu0 0
        %3072 = vmatprep.subr.bf16.mxu0 0
        %3073 = vmatpush1.bf16.msra.mxu0 0
        %3074 = vmatprep.subr.bf16.mxu0 0
        %3075 = vmatpush1.bf16.msra.mxu0 0
        %3076 = vmatprep.subr.bf16.mxu0 0
        %3077 = vmatpush1.bf16.msra.mxu0 0
        %3078 = vmatprep.subr.bf16.mxu0 0
        %3079 = vmatpush1.bf16.msra.mxu0 0
        %3080 = vmatprep.subr.bf16.mxu0 0
        %3081 = vmatpush1.bf16.msra.mxu0 0
        %3082 = vmatprep.subr.bf16.mxu0 0
        %3083 = vmatpush1.bf16.msra.mxu0 0
        %3084 = vmatprep.subr.bf16.mxu0 0
        %3085 = vmatpush1.bf16.msra.mxu0 0
        %3086 = vmatprep.subr.bf16.mxu0 0
        %3087 = vmatpush1.bf16.msra.mxu0 0
        %3088 = vmatprep.subr.bf16.mxu0 0
        %3089 = vmatpush1.bf16.msra.mxu0 0
        %3090 = vmatprep.subr.bf16.mxu0 0
        %3091 = vmatpush1.bf16.msra.mxu0 0
        %3092 = vmatprep.subr.bf16.mxu0 0
        %3093 = vmatpush1.bf16.msra.mxu0 0
        %3094 = vmatprep.mubr.bf16.mxu0 0
        %3095 = vmatmul.mubr.bf16.gmra.mrb[0].mxu0 %v3012
        %v3096 = vpop.f32.mrb[0].mxu0
        %v3097 = vadd.f32 0.0, %v3096
        %v3098 = vpop.f32.mrb[0].mxu0
        %v3099 = vpop.f32.mrb[0].mxu0
        %v3100 = vadd.f32 0.0, %v3099
        %v3101 = vpop.f32.mrb[0].mxu0
        %3102 = vmatprep.mubr.bf16.mxu0 0
        %3103 = vmatmul.mubr.bf16.gmra.mrb[0].mxu0 %v3015
        %v3104 = vpop.f32.mrb[0].mxu0
        %v3105 = vadd.f32 0.0, %v3104
        %v3106 = vpop.f32.mrb[0].mxu0
        %v3107 = vpop.f32.mrb[0].mxu0
        %v3108 = vadd.f32 0.0, %v3107
        %v3109 = vpop.f32.mrb[0].mxu0
        %3110 = vmatprep.mubr.bf16.mxu0 0
        %3111 = vmatmul.mubr.bf16.gmra.mrb[0].mxu0 %v3018
        %v3112 = vpop.f32.mrb[0].mxu0
        %v3113 = vadd.f32 0.0, %v3112
        %v3114 = vpop.f32.mrb[0].mxu0
        %v3115 = vpop.f32.mrb[0].mxu0
        %v3116 = vadd.f32 0.0, %v3115
        %v3117 = vpop.f32.mrb[0].mxu0
        %3118 = vmatprep.mubr.bf16.mxu0 0
        %3119 = vmatmul.mubr.bf16.gmra.mrb[0].mxu0 %v3021
        %v3120 = vpop.f32.mrb[0].mxu0
        %v3121 = vadd.f32 0.0, %v3120
        %v3122 = vpop.f32.mrb[0].mxu0
        %v3123 = vpop.f32.mrb[0].mxu0
        %v3124 = vadd.f32 0.0, %v3123
        %v3125 = vpop.f32.mrb[0].mxu0
        %3126 = vmatprep.mubr.bf16.mxu0 0
        %3127 = vmatmul.mubr.bf16.gmra.mrb[0].mxu0 %v3024
        %v3128 = vpop.f32.mrb[0].mxu0
        %v3129 = vadd.f32 0.0, %v3128
        %v3130 = vpop.f32.mrb[0].mxu0
        %v3131 = vpop.f32.mrb[0].mxu0
        %v3132 = vadd.f32 0.0, %v3131
        %v3133 = vpop.f32.mrb[0].mxu0
        %3134 = vmatprep.mubr.bf16.mxu0 0
        %3135 = vmatmul.mubr.bf16.gmra.mrb[0].mxu0 %v3027
        %v3136 = vpop.f32.mrb[0].mxu0
        %v3137 = vadd.f32 0.0, %v3136
        %v3138 = vpop.f32.mrb[0].mxu0
        %v3139 = vpop.f32.mrb[0].mxu0
        %v3140 = vadd.f32 0.0, %v3139
        %v3141 = vpop.f32.mrb[0].mxu0
        %3142 = vmatprep.mubr.bf16.mxu0 0
        %3143 = vmatmul.mubr.bf16.gmra.mrb[0].mxu0 %v3030
        %v3144 = vpop.f32.mrb[0].mxu0
        %v3145 = vadd.f32 0.0, %v3144
        %v3146 = vpop.f32.mrb[0].mxu0
        %v3147 = vpop.f32.mrb[0].mxu0
        %v3148 = vadd.f32 0.0, %v3147
        %v3149 = vpop.f32.mrb[0].mxu0
        %3150 = vmatprep.mubr.bf16.mxu0 0
        %3151 = vmatmul.mubr.bf16.gmra.mrb[0].mxu0 %v3033
        %v3152 = vpop.f32.mrb[0].mxu0
        %v3153 = vadd.f32 0.0, %v3152
        %v3154 = vpop.f32.mrb[0].mxu0
        %v3155 = vpop.f32.mrb[0].mxu0
        %v3156 = vadd.f32 0.0, %v3155
        %v3157 = vpop.f32.mrb[0].mxu0
        %3158 = vmatprep.mubr.bf16.mxu0 0
        %3159 = vmatmul.mubr.bf16.gmra.mrb[0].mxu0 %v3036
        %v3160 = vpop.f32.mrb[0].mxu0
        %v3161 = vadd.f32 0.0, %v3160
        %v3162 = vpop.f32.mrb[0].mxu0
        %v3163 = vpop.f32.mrb[0].mxu0
        %v3164 = vadd.f32 0.0, %v3163
        %v3165 = vpop.f32.mrb[0].mxu0
        %3166 = vmatprep.mubr.bf16.mxu0 0
        %3167 = vmatmul.mubr.bf16.gmra.mrb[0].mxu0 %v3039
        %v3168 = vpop.f32.mrb[0].mxu0
        %v3169 = vadd.f32 0.0, %v3168
        %v3170 = vpop.f32.mrb[0].mxu0
        %v3171 = vpop.f32.mrb[0].mxu0
        %v3172 = vadd.f32 0.0, %v3171
        %v3173 = vpop.f32.mrb[0].mxu0
        %3174 = vmatprep.mubr.bf16.mxu0 0
        %3175 = vmatmul.mubr.bf16.gmra.mrb[0].mxu0 %v3042
        %v3176 = vpop.f32.mrb[0].mxu0
        %v3177 = vadd.f32 0.0, %v3176
        %v3178 = vpop.f32.mrb[0].mxu0
        %v3179 = vpop.f32.mrb[0].mxu0
        %v3180 = vadd.f32 0.0, %v3179
        %v3181 = vpop.f32.mrb[0].mxu0
        %3182 = vmatprep.mubr.bf16.mxu0 0
        %3183 = vmatmul.mubr.bf16.gmra.mrb[0].mxu0 %v3045
        %v3184 = vpop.f32.mrb[0].mxu0
        %v3185 = vadd.f32 0.0, %v3184
        %v3186 = vpop.f32.mrb[0].mxu0
        %v3187 = vpop.f32.mrb[0].mxu0
        %v3188 = vadd.f32 0.0, %v3187
        %v3189 = vpop.f32.mrb[0].mxu0
        %3190 = vmatprep.mubr.bf16.mxu0 0
        %3191 = vmatmul.mubr.bf16.gmra.mrb[0].mxu0 %v3048
        %v3192 = vpop.f32.mrb[0].mxu0
        %v3193 = vadd.f32 0.0, %v3192
        %v3194 = vpop.f32.mrb[0].mxu0
        %v3195 = vpop.f32.mrb[0].mxu0
        %v3196 = vadd.f32 0.0, %v3195
        %v3197 = vpop.f32.mrb[0].mxu0
        %3198 = vmatprep.mubr.bf16.mxu0 0
        %3199 = vmatmul.mubr.bf16.gmra.mrb[0].mxu0 %v3051
        %v3200 = vpop.f32.mrb[0].mxu0
        %v3201 = vadd.f32 0.0, %v3200
        %v3202 = vpop.f32.mrb[0].mxu0
        %v3203 = vpop.f32.mrb[0].mxu0
        %v3204 = vadd.f32 0.0, %v3203
        %v3205 = vpop.f32.mrb[0].mxu0
        %3206 = vmatprep.mubr.bf16.mxu0 0
        %3207 = vmatmul.mubr.bf16.gmra.mrb[0].mxu0 %v3054
        %v3208 = vpop.f32.mrb[0].mxu0
        %v3209 = vadd.f32 0.0, %v3208
        %v3210 = vpop.f32.mrb[0].mxu0
        %v3211 = vpop.f32.mrb[0].mxu0
        %v3212 = vadd.f32 0.0, %v3211
        %v3213 = vpop.f32.mrb[0].mxu0
        %3214 = vmatprep.mubr.bf16.mxu0 0
        %3215 = vmatmul.mubr.bf16.gmra.mrb[0].mxu0 %v3057
        %v3216 = vpop.f32.mrb[0].mxu0
        %v3217 = vadd.f32 0.0, %v3216
        %v3218 = vpop.f32.mrb[0].mxu0
        %v3219 = vpop.f32.mrb[0].mxu0
        %v3220 = vadd.f32 0.0, %v3219
        %v3221 = vpop.f32.mrb[0].mxu0
        %3222 = vdwg.mxu0
        %v3223 = vadd.f32 %v2910, %v3097
        %v3224 = vadd.f32 %v2911, %v3100
        %v3225 = vadd.f32 %v2912, %v3105
        %v3226 = vadd.f32 %v2913, %v3108
        %v3227 = vadd.f32 %v2914, %v3113
        %v3228 = vadd.f32 %v2915, %v3116
        %v3229 = vadd.f32 %v2916, %v3121
        %v3230 = vadd.f32 %v2917, %v3124
        %v3231 = vadd.f32 %v2918, %v3129
        %v3232 = vadd.f32 %v2919, %v3132
        %v3233 = vadd.f32 %v2920, %v3137
        %v3234 = vadd.f32 %v2921, %v3140
        %v3235 = vadd.f32 %v2922, %v3145
        %v3236 = vadd.f32 %v2923, %v3148
        %v3237 = vadd.f32 %v2924, %v3153
        %v3238 = vadd.f32 %v2925, %v3156
        %v3239 = vadd.f32 %v2926, %v3161
        %v3240 = vadd.f32 %v2927, %v3164
        %v3241 = vadd.f32 %v2928, %v3169
        %v3242 = vadd.f32 %v2929, %v3172
        %v3243 = vadd.f32 %v2930, %v3177
        %v3244 = vadd.f32 %v2931, %v3180
        %v3245 = vadd.f32 %v2932, %v3185
        %v3246 = vadd.f32 %v2933, %v3188
        %v3247 = vadd.f32 %v2934, %v3193
        %v3248 = vadd.f32 %v2935, %v3196
        %v3249 = vadd.f32 %v2936, %v3201
        %v3250 = vadd.f32 %v2937, %v3204
        %v3251 = vadd.f32 %v2938, %v3209
        %v3252 = vadd.f32 %v2939, %v3212
        %v3253 = vadd.f32 %v2940, %v3217
        %v3254 = vadd.f32 %v2941, %v3220
        %3255 = vst [vmem:[#allocation2] sm:$0xff] %v3223
        %3256 = vst [vmem:[#allocation2 + $0x8] sm:$0xff] %v3224
        %3257 = vst [vmem:[#allocation2 + $0x10] sm:$0xff] %v3225
        %3258 = vst [vmem:[#allocation2 + $0x18] sm:$0xff] %v3226
        %3259 = vst [vmem:[#allocation2 + $0x20] sm:$0xff] %v3227
        %3260 = vst [vmem:[#allocation2 + $0x28] sm:$0xff] %v3228
        %3261 = vst [vmem:[#allocation2 + $0x30] sm:$0xff] %v3229
        %3262 = vst [vmem:[#allocation2 + $0x38] sm:$0xff] %v3230
        %3263 = vst [vmem:[#allocation2 + $0x40] sm:$0xff] %v3231
        %3264 = vst [vmem:[#allocation2 + $0x48] sm:$0xff] %v3232
        %3265 = vst [vmem:[#allocation2 + $0x50] sm:$0xff] %v3233
        %3266 = vst [vmem:[#allocation2 + $0x58] sm:$0xff] %v3234
        %3267 = vst [vmem:[#allocation2 + $0x60] sm:$0xff] %v3235
        %3268 = vst [vmem:[#allocation2 + $0x68] sm:$0xff] %v3236
        %3269 = vst [vmem:[#allocation2 + $0x70] sm:$0xff] %v3237
        %3270 = vst [vmem:[#allocation2 + $0x78] sm:$0xff] %v3238
        %3271 = vst [vmem:[#allocation2 + $0x80] sm:$0xff] %v3239
        %3272 = vst [vmem:[#allocation2 + $0x88] sm:$0xff] %v3240
        %3273 = vst [vmem:[#allocation2 + $0x90] sm:$0xff] %v3241
        %3274 = vst [vmem:[#allocation2 + $0x98] sm:$0xff] %v3242
        %3275 = vst [vmem:[#allocation2 + $0xa0] sm:$0xff] %v3243
        %3276 = vst [vmem:[#allocation2 + $0xa8] sm:$0xff] %v3244
        %3277 = vst [vmem:[#allocation2 + $0xb0] sm:$0xff] %v3245
        %3278 = vst [vmem:[#allocation2 + $0xb8] sm:$0xff] %v3246
        %3279 = vst [vmem:[#allocation2 + $0xc0] sm:$0xff] %v3247
        %3280 = vst [vmem:[#allocation2 + $0xc8] sm:$0xff] %v3248
        %3281 = vst [vmem:[#allocation2 + $0xd0] sm:$0xff] %v3249
        %3282 = vst [vmem:[#allocation2 + $0xd8] sm:$0xff] %v3250
        %3283 = vst [vmem:[#allocation2 + $0xe0] sm:$0xff] %v3251
        %3284 = vst [vmem:[#allocation2 + $0xe8] sm:$0xff] %v3252
        %3285 = vst [vmem:[#allocation2 + $0xf0] sm:$0xff] %v3253
        %3286 = vst [vmem:[#allocation2 + $0xf8] sm:$0xff] %v3254
        %v3303 = vrot.slane %v2069, 5
        %v3304 = vrot.slane %v3303, 4
        %v3305 = vrot.slane %v2070, 5
        %v3306 = vsel %vm1575, %v3304, %v3305
        %v3307 = vrot.slane %v3305, 4
        %v3308 = vrot.slane %v2071, 5
        %v3309 = vsel %vm1575, %v3307, %v3308
        %v3310 = vrot.slane %v2072, 5
        %v3311 = vrot.slane %v3310, 4
        %v3312 = vrot.slane %v2073, 5
        %v3313 = vsel %vm1575, %v3311, %v3312
        %v3314 = vrot.slane %v3312, 4
        %v3315 = vrot.slane %v2074, 5
        %v3316 = vsel %vm1575, %v3314, %v3315
        %v3317 = vrot.slane %v2075, 5
        %v3318 = vrot.slane %v3317, 4
        %v3319 = vrot.slane %v2076, 5
        %v3320 = vsel %vm1575, %v3318, %v3319
        %v3321 = vrot.slane %v3319, 4
        %v3322 = vrot.slane %v2077, 5
        %v3323 = vsel %vm1575, %v3321, %v3322
        %v3324 = vrot.slane %v2078, 5
        %v3325 = vrot.slane %v3324, 4
        %v3326 = vrot.slane %v2079, 5
        %v3327 = vsel %vm1575, %v3325, %v3326
        %v3328 = vrot.slane %v3326, 4
        %v3329 = vrot.slane %v2080, 5
        %v3330 = vsel %vm1575, %v3328, %v3329
        %v3331 = vrot.slane %v2081, 5
        %v3332 = vrot.slane %v3331, 4
        %v3333 = vrot.slane %v2082, 5
        %v3334 = vsel %vm1575, %v3332, %v3333
        %v3335 = vrot.slane %v3333, 4
        %v3336 = vrot.slane %v2083, 5
        %v3337 = vsel %vm1575, %v3335, %v3336
        %v3338 = vrot.slane %v2084, 5
        %v3339 = vrot.slane %v3338, 4
        %v3340 = vrot.slane %v2085, 5
        %v3341 = vsel %vm1575, %v3339, %v3340
        %v3342 = vrot.slane %v3340, 4
        %v3343 = vrot.slane %v2086, 5
        %v3344 = vsel %vm1575, %v3342, %v3343
        %v3345 = vrot.slane %v2087, 5
        %v3346 = vrot.slane %v3345, 4
        %v3347 = vrot.slane %v2088, 5
        %v3348 = vsel %vm1575, %v3346, %v3347
        %v3349 = vrot.slane %v3347, 4
        %v3350 = vrot.slane %v2089, 5
        %v3351 = vsel %vm1575, %v3349, %v3350
        %v3352 = vrot.slane %v2090, 5
        %v3353 = vrot.slane %v3352, 4
        %v3354 = vrot.slane %v2091, 5
        %v3355 = vsel %vm1575, %v3353, %v3354
        %v3356 = vrot.slane %v3354, 4
        %v3357 = vrot.slane %v2092, 5
        %v3358 = vsel %vm1575, %v3356, %v3357
        %v3359 = vrot.slane %v2093, 5
        %v3360 = vrot.slane %v3359, 4
        %v3361 = vrot.slane %v2094, 5
        %v3362 = vsel %vm1575, %v3360, %v3361
        %v3363 = vrot.slane %v3361, 4
        %v3364 = vrot.slane %v2095, 5
        %v3365 = vsel %vm1575, %v3363, %v3364
        %v3366 = vrot.slane %v2096, 5
        %v3367 = vrot.slane %v3366, 4
        %v3368 = vrot.slane %v2097, 5
        %v3369 = vsel %vm1575, %v3367, %v3368
        %v3370 = vrot.slane %v3368, 4
        %v3371 = vrot.slane %v2098, 5
        %v3372 = vsel %vm1575, %v3370, %v3371
        %v3373 = vrot.slane %v2099, 5
        %v3374 = vrot.slane %v3373, 4
        %v3375 = vrot.slane %v2100, 5
        %v3376 = vsel %vm1575, %v3374, %v3375
        %v3377 = vrot.slane %v3375, 4
        %v3378 = vrot.slane %v2101, 5
        %v3379 = vsel %vm1575, %v3377, %v3378
        %v3380 = vrot.slane %v2102, 5
        %v3381 = vrot.slane %v3380, 4
        %v3382 = vrot.slane %v2103, 5
        %v3383 = vsel %vm1575, %v3381, %v3382
        %v3384 = vrot.slane %v3382, 4
        %v3385 = vrot.slane %v2104, 5
        %v3386 = vsel %vm1575, %v3384, %v3385
        %v3387 = vrot.slane %v2105, 5
        %v3388 = vrot.slane %v3387, 4
        %v3389 = vrot.slane %v2106, 5
        %v3390 = vsel %vm1575, %v3388, %v3389
        %v3391 = vrot.slane %v3389, 4
        %v3392 = vrot.slane %v2107, 5
        %v3393 = vsel %vm1575, %v3391, %v3392
        %v3394 = vrot.slane %v2108, 5
        %v3395 = vrot.slane %v3394, 4
        %v3396 = vrot.slane %v2109, 5
        %v3397 = vsel %vm1575, %v3395, %v3396
        %v3398 = vrot.slane %v3396, 4
        %v3399 = vrot.slane %v2110, 5
        %v3400 = vsel %vm1575, %v3398, %v3399
        %v3401 = vrot.slane %v2111, 5
        %v3402 = vrot.slane %v3401, 4
        %v3403 = vrot.slane %v2112, 5
        %v3404 = vsel %vm1575, %v3402, %v3403
        %v3405 = vrot.slane %v3403, 4
        %v3406 = vrot.slane %v2113, 5
        %v3407 = vsel %vm1575, %v3405, %v3406
        %v3408 = vrot.slane %v2114, 5
        %v3409 = vrot.slane %v3408, 4
        %v3410 = vrot.slane %v2115, 5
        %v3411 = vsel %vm1575, %v3409, %v3410
        %v3412 = vrot.slane %v3410, 4
        %v3413 = vrot.slane %v2116, 5
        %v3414 = vsel %vm1575, %v3412, %v3413
        %v3415 = vld [vmem:[#allocation2] sm:$0xff]
        %v3416 = vld [vmem:[#allocation2 + $0x8] sm:$0xff]
        %v3417 = vld [vmem:[#allocation2 + $0x10] sm:$0xff]
        %v3418 = vld [vmem:[#allocation2 + $0x18] sm:$0xff]
        %v3419 = vld [vmem:[#allocation2 + $0x20] sm:$0xff]
        %v3420 = vld [vmem:[#allocation2 + $0x28] sm:$0xff]
        %v3421 = vld [vmem:[#allocation2 + $0x30] sm:$0xff]
        %v3422 = vld [vmem:[#allocation2 + $0x38] sm:$0xff]
        %v3423 = vld [vmem:[#allocation2 + $0x40] sm:$0xff]
        %v3424 = vld [vmem:[#allocation2 + $0x48] sm:$0xff]
        %v3425 = vld [vmem:[#allocation2 + $0x50] sm:$0xff]
        %v3426 = vld [vmem:[#allocation2 + $0x58] sm:$0xff]
        %v3427 = vld [vmem:[#allocation2 + $0x60] sm:$0xff]
        %v3428 = vld [vmem:[#allocation2 + $0x68] sm:$0xff]
        %v3429 = vld [vmem:[#allocation2 + $0x70] sm:$0xff]
        %v3430 = vld [vmem:[#allocation2 + $0x78] sm:$0xff]
        %v3431 = vld [vmem:[#allocation2 + $0x80] sm:$0xff]
        %v3432 = vld [vmem:[#allocation2 + $0x88] sm:$0xff]
        %v3433 = vld [vmem:[#allocation2 + $0x90] sm:$0xff]
        %v3434 = vld [vmem:[#allocation2 + $0x98] sm:$0xff]
        %v3435 = vld [vmem:[#allocation2 + $0xa0] sm:$0xff]
        %v3436 = vld [vmem:[#allocation2 + $0xa8] sm:$0xff]
        %v3437 = vld [vmem:[#allocation2 + $0xb0] sm:$0xff]
        %v3438 = vld [vmem:[#allocation2 + $0xb8] sm:$0xff]
        %v3439 = vld [vmem:[#allocation2 + $0xc0] sm:$0xff]
        %v3440 = vld [vmem:[#allocation2 + $0xc8] sm:$0xff]
        %v3441 = vld [vmem:[#allocation2 + $0xd0] sm:$0xff]
        %v3442 = vld [vmem:[#allocation2 + $0xd8] sm:$0xff]
        %v3443 = vld [vmem:[#allocation2 + $0xe0] sm:$0xff]
        %v3444 = vld [vmem:[#allocation2 + $0xe8] sm:$0xff]
        %v3445 = vld [vmem:[#allocation2 + $0xf0] sm:$0xff]
        %v3446 = vld [vmem:[#allocation2 + $0xf8] sm:$0xff]
        %s3447 = scalar_lea.vmem %s2, 100
        %v3448 = vld [vmem:[%s3447] sm:$0xf]
        %v3449 = vld [vmem:[%s3447 + $0x4] sm:$0xf]
        %v3450 = vld [vmem:[%s3447 + $0x8] sm:$0xf]
        %v3451 = vld [vmem:[%s3447 + $0xc] sm:$0xf]
        %v3452 = vld [vmem:[%s3447 + $0x10] sm:$0x3]
        %v3453 = vunpack.c.l.b16 %v3306
        %v3454 = vunpack.c.l.b16 %v3309
        %v3455 = vunpack.c.l.b16 %v3313
        %v3456 = vunpack.c.l.b16 %v3316
        %v3457 = vunpack.c.l.b16 %v3320
        %v3458 = vunpack.c.l.b16 %v3323
        %v3459 = vunpack.c.l.b16 %v3327
        %v3460 = vunpack.c.l.b16 %v3330
        %v3461 = vunpack.c.l.b16 %v3334
        %v3462 = vunpack.c.l.b16 %v3337
        %v3463 = vunpack.c.l.b16 %v3341
        %v3464 = vunpack.c.l.b16 %v3344
        %v3465 = vunpack.c.l.b16 %v3348
        %v3466 = vunpack.c.l.b16 %v3351
        %v3467 = vunpack.c.l.b16 %v3355
        %v3468 = vunpack.c.l.b16 %v3358
        %v3469 = vunpack.c.l.b16 %v3362
        %v3470 = vunpack.c.l.b16 %v3365
        %v3471 = vunpack.c.l.b16 %v3369
        %v3472 = vunpack.c.l.b16 %v3372
        %v3473 = vunpack.c.l.b16 %v3376
        %v3474 = vunpack.c.l.b16 %v3379
        %v3475 = vunpack.c.l.b16 %v3383
        %v3476 = vunpack.c.l.b16 %v3386
        %v3477 = vunpack.c.l.b16 %v3390
        %v3478 = vunpack.c.l.b16 %v3393
        %v3479 = vunpack.c.l.b16 %v3397
        %v3480 = vunpack.c.l.b16 %v3400
        %v3481 = vunpack.c.l.b16 %v3404
        %v3482 = vunpack.c.l.b16 %v3407
        %v3483 = vunpack.c.l.b16 %v3411
        %v3484 = vunpack.c.l.b16 %v3414
        %v3485 = vpack.c.b16 %v3454, %v3453
        %v3486 = vpack.c.b16 %v3456, %v3455
        %v3487 = vpack.c.b16 %v3458, %v3457
        %v3488 = vpack.c.b16 %v3460, %v3459
        %v3489 = vpack.c.b16 %v3462, %v3461
        %v3490 = vpack.c.b16 %v3464, %v3463
        %v3491 = vpack.c.b16 %v3466, %v3465
        %v3492 = vpack.c.b16 %v3468, %v3467
        %v3493 = vpack.c.b16 %v3470, %v3469
        %v3494 = vpack.c.b16 %v3472, %v3471
        %v3495 = vpack.c.b16 %v3474, %v3473
        %v3496 = vpack.c.b16 %v3476, %v3475
        %v3497 = vpack.c.b16 %v3478, %v3477
        %v3498 = vpack.c.b16 %v3480, %v3479
        %v3499 = vpack.c.b16 %v3482, %v3481
        %v3500 = vpack.c.b16 %v3484, %v3483
        %v3506 = vunpack.c.l.b16 %v3448
        %v3507 = vunpack.c.l.b16 %v3449
        %v3508 = vunpack.c.l.b16 %v3450
        %v3509 = vunpack.c.l.b16 %v3451
        %v3510 = vunpack.c.l.b16 %v3452
        %v3511 = vpack.c.b16 %v3507, %v3506
        %v3512 = vpack.c.b16 %v3509, %v3508
        %v3513 = vpack.c.b16 %v3510, %v3510
        %v3517 = vsel %vm515, %v3485, 0
        %v3520 = vsel %vm515, %v3486, 0
        %v3523 = vsel %vm515, %v3487, 0
        %v3526 = vsel %vm515, %v3488, 0
        %v3529 = vsel %vm515, %v3489, 0
        %v3532 = vsel %vm515, %v3490, 0
        %v3535 = vsel %vm515, %v3491, 0
        %v3538 = vsel %vm515, %v3492, 0
        %v3541 = vsel %vm515, %v3493, 0
        %v3544 = vsel %vm515, %v3494, 0
        %v3547 = vsel %vm515, %v3495, 0
        %v3550 = vsel %vm515, %v3496, 0
        %v3553 = vsel %vm515, %v3497, 0
        %v3556 = vsel %vm515, %v3498, 0
        %v3559 = vsel %vm515, %v3499, 0
        %v3562 = vsel %vm515, %v3500, 0
        %v3565 = vsel %vm564, %v3513, 0
        %3567 = vmatprep.subr.bf16.mxu0 0
        %3568 = vmatpush1.bf16.msra.mxu0 %v3511
        %3569 = vmatprep.subr.bf16.mxu0 0
        %3570 = vmatpush1.bf16.msra.mxu0 %v3512
        %3571 = vmatprep.subr.bf16.mxu0 0
        %3572 = vmatpush1.bf16.msra.mxu0 %v3565
        %3573 = vmatprep.subr.bf16.mxu0 0
        %3574 = vmatpush1.bf16.msra.mxu0 0
        %3575 = vmatprep.subr.bf16.mxu0 0
        %3576 = vmatpush1.bf16.msra.mxu0 0
        %3577 = vmatprep.subr.bf16.mxu0 0
        %3578 = vmatpush1.bf16.msra.mxu0 0
        %3579 = vmatprep.subr.bf16.mxu0 0
        %3580 = vmatpush1.bf16.msra.mxu0 0
        %3581 = vmatprep.subr.bf16.mxu0 0
        %3582 = vmatpush1.bf16.msra.mxu0 0
        %3583 = vmatprep.subr.bf16.mxu0 0
        %3584 = vmatpush1.bf16.msra.mxu0 0
        %3585 = vmatprep.subr.bf16.mxu0 0
        %3586 = vmatpush1.bf16.msra.mxu0 0
        %3587 = vmatprep.subr.bf16.mxu0 0
        %3588 = vmatpush1.bf16.msra.mxu0 0
        %3589 = vmatprep.subr.bf16.mxu0 0
        %3590 = vmatpush1.bf16.msra.mxu0 0
        %3591 = vmatprep.subr.bf16.mxu0 0
        %3592 = vmatpush1.bf16.msra.mxu0 0
        %3593 = vmatprep.subr.bf16.mxu0 0
        %3594 = vmatpush1.bf16.msra.mxu0 0
        %3595 = vmatprep.subr.bf16.mxu0 0
        %3596 = vmatpush1.bf16.msra.mxu0 0
        %3597 = vmatprep.subr.bf16.mxu0 0
        %3598 = vmatpush1.bf16.msra.mxu0 0
        %3599 = vmatprep.mubr.bf16.mxu0 0
        %3600 = vmatmul.mubr.bf16.gmra.mrb[0].mxu0 %v3517
        %v3601 = vpop.f32.mrb[0].mxu0
        %v3602 = vadd.f32 0.0, %v3601
        %v3603 = vpop.f32.mrb[0].mxu0
        %v3604 = vpop.f32.mrb[0].mxu0
        %v3605 = vadd.f32 0.0, %v3604
        %v3606 = vpop.f32.mrb[0].mxu0
        %3607 = vmatprep.mubr.bf16.mxu0 0
        %3608 = vmatmul.mubr.bf16.gmra.mrb[0].mxu0 %v3520
        %v3609 = vpop.f32.mrb[0].mxu0
        %v3610 = vadd.f32 0.0, %v3609
        %v3611 = vpop.f32.mrb[0].mxu0
        %v3612 = vpop.f32.mrb[0].mxu0
        %v3613 = vadd.f32 0.0, %v3612
        %v3614 = vpop.f32.mrb[0].mxu0
        %3615 = vmatprep.mubr.bf16.mxu0 0
        %3616 = vmatmul.mubr.bf16.gmra.mrb[0].mxu0 %v3523
        %v3617 = vpop.f32.mrb[0].mxu0
        %v3618 = vadd.f32 0.0, %v3617
        %v3619 = vpop.f32.mrb[0].mxu0
        %v3620 = vpop.f32.mrb[0].mxu0
        %v3621 = vadd.f32 0.0, %v3620
        %v3622 = vpop.f32.mrb[0].mxu0
        %3623 = vmatprep.mubr.bf16.mxu0 0
        %3624 = vmatmul.mubr.bf16.gmra.mrb[0].mxu0 %v3526
        %v3625 = vpop.f32.mrb[0].mxu0
        %v3626 = vadd.f32 0.0, %v3625
        %v3627 = vpop.f32.mrb[0].mxu0
        %v3628 = vpop.f32.mrb[0].mxu0
        %v3629 = vadd.f32 0.0, %v3628
        %v3630 = vpop.f32.mrb[0].mxu0
        %3631 = vmatprep.mubr.bf16.mxu0 0
        %3632 = vmatmul.mubr.bf16.gmra.mrb[0].mxu0 %v3529
        %v3633 = vpop.f32.mrb[0].mxu0
        %v3634 = vadd.f32 0.0, %v3633
        %v3635 = vpop.f32.mrb[0].mxu0
        %v3636 = vpop.f32.mrb[0].mxu0
        %v3637 = vadd.f32 0.0, %v3636
        %v3638 = vpop.f32.mrb[0].mxu0
        %3639 = vmatprep.mubr.bf16.mxu0 0
        %3640 = vmatmul.mubr.bf16.gmra.mrb[0].mxu0 %v3532
        %v3641 = vpop.f32.mrb[0].mxu0
        %v3642 = vadd.f32 0.0, %v3641
        %v3643 = vpop.f32.mrb[0].mxu0
        %v3644 = vpop.f32.mrb[0].mxu0
        %v3645 = vadd.f32 0.0, %v3644
        %v3646 = vpop.f32.mrb[0].mxu0
        %3647 = vmatprep.mubr.bf16.mxu0 0
        %3648 = vmatmul.mubr.bf16.gmra.mrb[0].mxu0 %v3535
        %v3649 = vpop.f32.mrb[0].mxu0
        %v3650 = vadd.f32 0.0, %v3649
        %v3651 = vpop.f32.mrb[0].mxu0
        %v3652 = vpop.f32.mrb[0].mxu0
        %v3653 = vadd.f32 0.0, %v3652
        %v3654 = vpop.f32.mrb[0].mxu0
        %3655 = vmatprep.mubr.bf16.mxu0 0
        %3656 = vmatmul.mubr.bf16.gmra.mrb[0].mxu0 %v3538
        %v3657 = vpop.f32.mrb[0].mxu0
        %v3658 = vadd.f32 0.0, %v3657
        %v3659 = vpop.f32.mrb[0].mxu0
        %v3660 = vpop.f32.mrb[0].mxu0
        %v3661 = vadd.f32 0.0, %v3660
        %v3662 = vpop.f32.mrb[0].mxu0
        %3663 = vmatprep.mubr.bf16.mxu0 0
        %3664 = vmatmul.mubr.bf16.gmra.mrb[0].mxu0 %v3541
        %v3665 = vpop.f32.mrb[0].mxu0
        %v3666 = vadd.f32 0.0, %v3665
        %v3667 = vpop.f32.mrb[0].mxu0
        %v3668 = vpop.f32.mrb[0].mxu0
        %v3669 = vadd.f32 0.0, %v3668
        %v3670 = vpop.f32.mrb[0].mxu0
        %3671 = vmatprep.mubr.bf16.mxu0 0
        %3672 = vmatmul.mubr.bf16.gmra.mrb[0].mxu0 %v3544
        %v3673 = vpop.f32.mrb[0].mxu0
        %v3674 = vadd.f32 0.0, %v3673
        %v3675 = vpop.f32.mrb[0].mxu0
        %v3676 = vpop.f32.mrb[0].mxu0
        %v3677 = vadd.f32 0.0, %v3676
        %v3678 = vpop.f32.mrb[0].mxu0
        %3679 = vmatprep.mubr.bf16.mxu0 0
        %3680 = vmatmul.mubr.bf16.gmra.mrb[0].mxu0 %v3547
        %v3681 = vpop.f32.mrb[0].mxu0
        %v3682 = vadd.f32 0.0, %v3681
        %v3683 = vpop.f32.mrb[0].mxu0
        %v3684 = vpop.f32.mrb[0].mxu0
        %v3685 = vadd.f32 0.0, %v3684
        %v3686 = vpop.f32.mrb[0].mxu0
        %3687 = vmatprep.mubr.bf16.mxu0 0
        %3688 = vmatmul.mubr.bf16.gmra.mrb[0].mxu0 %v3550
        %v3689 = vpop.f32.mrb[0].mxu0
        %v3690 = vadd.f32 0.0, %v3689
        %v3691 = vpop.f32.mrb[0].mxu0
        %v3692 = vpop.f32.mrb[0].mxu0
        %v3693 = vadd.f32 0.0, %v3692
        %v3694 = vpop.f32.mrb[0].mxu0
        %3695 = vmatprep.mubr.bf16.mxu0 0
        %3696 = vmatmul.mubr.bf16.gmra.mrb[0].mxu0 %v3553
        %v3697 = vpop.f32.mrb[0].mxu0
        %v3698 = vadd.f32 0.0, %v3697
        %v3699 = vpop.f32.mrb[0].mxu0
        %v3700 = vpop.f32.mrb[0].mxu0
        %v3701 = vadd.f32 0.0, %v3700
        %v3702 = vpop.f32.mrb[0].mxu0
        %3703 = vmatprep.mubr.bf16.mxu0 0
        %3704 = vmatmul.mubr.bf16.gmra.mrb[0].mxu0 %v3556
        %v3705 = vpop.f32.mrb[0].mxu0
        %v3706 = vadd.f32 0.0, %v3705
        %v3707 = vpop.f32.mrb[0].mxu0
        %v3708 = vpop.f32.mrb[0].mxu0
        %v3709 = vadd.f32 0.0, %v3708
        %v3710 = vpop.f32.mrb[0].mxu0
        %3711 = vmatprep.mubr.bf16.mxu0 0
        %3712 = vmatmul.mubr.bf16.gmra.mrb[0].mxu0 %v3559
        %v3713 = vpop.f32.mrb[0].mxu0
        %v3714 = vadd.f32 0.0, %v3713
        %v3715 = vpop.f32.mrb[0].mxu0
        %v3716 = vpop.f32.mrb[0].mxu0
        %v3717 = vadd.f32 0.0, %v3716
        %v3718 = vpop.f32.mrb[0].mxu0
        %3719 = vmatprep.mubr.bf16.mxu0 0
        %3720 = vmatmul.mubr.bf16.gmra.mrb[0].mxu0 %v3562
        %v3721 = vpop.f32.mrb[0].mxu0
        %v3722 = vadd.f32 0.0, %v3721
        %v3723 = vpop.f32.mrb[0].mxu0
        %v3724 = vpop.f32.mrb[0].mxu0
        %v3725 = vadd.f32 0.0, %v3724
        %v3726 = vpop.f32.mrb[0].mxu0
        %3727 = vdwg.mxu0
        %v3728 = vadd.f32 %v3415, %v3602
        %v3729 = vadd.f32 %v3416, %v3605
        %v3730 = vadd.f32 %v3417, %v3610
        %v3731 = vadd.f32 %v3418, %v3613
        %v3732 = vadd.f32 %v3419, %v3618
        %v3733 = vadd.f32 %v3420, %v3621
        %v3734 = vadd.f32 %v3421, %v3626
        %v3735 = vadd.f32 %v3422, %v3629
        %v3736 = vadd.f32 %v3423, %v3634
        %v3737 = vadd.f32 %v3424, %v3637
        %v3738 = vadd.f32 %v3425, %v3642
        %v3739 = vadd.f32 %v3426, %v3645
        %v3740 = vadd.f32 %v3427, %v3650
        %v3741 = vadd.f32 %v3428, %v3653
        %v3742 = vadd.f32 %v3429, %v3658
        %v3743 = vadd.f32 %v3430, %v3661
        %v3744 = vadd.f32 %v3431, %v3666
        %v3745 = vadd.f32 %v3432, %v3669
        %v3746 = vadd.f32 %v3433, %v3674
        %v3747 = vadd.f32 %v3434, %v3677
        %v3748 = vadd.f32 %v3435, %v3682
        %v3749 = vadd.f32 %v3436, %v3685
        %v3750 = vadd.f32 %v3437, %v3690
        %v3751 = vadd.f32 %v3438, %v3693
        %v3752 = vadd.f32 %v3439, %v3698
        %v3753 = vadd.f32 %v3440, %v3701
        %v3754 = vadd.f32 %v3441, %v3706
        %v3755 = vadd.f32 %v3442, %v3709
        %v3756 = vadd.f32 %v3443, %v3714
        %v3757 = vadd.f32 %v3444, %v3717
        %v3758 = vadd.f32 %v3445, %v3722
        %v3759 = vadd.f32 %v3446, %v3725
        %3760 = vst [vmem:[#allocation2] sm:$0xff] %v3728
        %3761 = vst [vmem:[#allocation2 + $0x8] sm:$0xff] %v3729
        %3762 = vst [vmem:[#allocation2 + $0x10] sm:$0xff] %v3730
        %3763 = vst [vmem:[#allocation2 + $0x18] sm:$0xff] %v3731
        %3764 = vst [vmem:[#allocation2 + $0x20] sm:$0xff] %v3732
        %3765 = vst [vmem:[#allocation2 + $0x28] sm:$0xff] %v3733
        %3766 = vst [vmem:[#allocation2 + $0x30] sm:$0xff] %v3734
        %3767 = vst [vmem:[#allocation2 + $0x38] sm:$0xff] %v3735
        %3768 = vst [vmem:[#allocation2 + $0x40] sm:$0xff] %v3736
        %3769 = vst [vmem:[#allocation2 + $0x48] sm:$0xff] %v3737
        %3770 = vst [vmem:[#allocation2 + $0x50] sm:$0xff] %v3738
        %3771 = vst [vmem:[#allocation2 + $0x58] sm:$0xff] %v3739
        %3772 = vst [vmem:[#allocation2 + $0x60] sm:$0xff] %v3740
        %3773 = vst [vmem:[#allocation2 + $0x68] sm:$0xff] %v3741
        %3774 = vst [vmem:[#allocation2 + $0x70] sm:$0xff] %v3742
        %3775 = vst [vmem:[#allocation2 + $0x78] sm:$0xff] %v3743
        %3776 = vst [vmem:[#allocation2 + $0x80] sm:$0xff] %v3744
        %3777 = vst [vmem:[#allocation2 + $0x88] sm:$0xff] %v3745
        %3778 = vst [vmem:[#allocation2 + $0x90] sm:$0xff] %v3746
        %3779 = vst [vmem:[#allocation2 + $0x98] sm:$0xff] %v3747
        %3780 = vst [vmem:[#allocation2 + $0xa0] sm:$0xff] %v3748
        %3781 = vst [vmem:[#allocation2 + $0xa8] sm:$0xff] %v3749
        %3782 = vst [vmem:[#allocation2 + $0xb0] sm:$0xff] %v3750
        %3783 = vst [vmem:[#allocation2 + $0xb8] sm:$0xff] %v3751
        %3784 = vst [vmem:[#allocation2 + $0xc0] sm:$0xff] %v3752
        %3785 = vst [vmem:[#allocation2 + $0xc8] sm:$0xff] %v3753
        %3786 = vst [vmem:[#allocation2 + $0xd0] sm:$0xff] %v3754
        %3787 = vst [vmem:[#allocation2 + $0xd8] sm:$0xff] %v3755
        %3788 = vst [vmem:[#allocation2 + $0xe0] sm:$0xff] %v3756
        %3789 = vst [vmem:[#allocation2 + $0xe8] sm:$0xff] %v3757
        %3790 = vst [vmem:[#allocation2 + $0xf0] sm:$0xff] %v3758
        %3791 = vst [vmem:[#allocation2 + $0xf8] sm:$0xff] %v3759
        %s3792 = sadd.s32 %s292, 2
        %s3793 = smul.u32 %s3792, 3
        %s3794 = smul.addr %s3793, 4
        %s3795 = scalar_lea.vmem %s277, %s3794
        %v3796 = vld [vmem:[%s3795] sm:$0xf]
        %v3797 = vld [vmem:[%s3795 + $0x4] sm:$0xf]
        %v3798 = vld [vmem:[%s3795 + $0x8] sm:$0x1]
        %v3799 = vld [vmem:[%s3795 + $0xc] sm:$0xf]
        %v3800 = vld [vmem:[%s3795 + $0x10] sm:$0xf]
        %v3801 = vld [vmem:[%s3795 + $0x14] sm:$0x1]
        %v3802 = vld [vmem:[%s3795 + $0x18] sm:$0xf]
        %v3803 = vld [vmem:[%s3795 + $0x1c] sm:$0xf]
        %v3804 = vld [vmem:[%s3795 + $0x20] sm:$0x1]
        %v3805 = vld [vmem:[%s3795 + $0x24] sm:$0xf]
        %v3806 = vld [vmem:[%s3795 + $0x28] sm:$0xf]
        %v3807 = vld [vmem:[%s3795 + $0x2c] sm:$0x1]
        %v3808 = vld [vmem:[%s3795 + $0x30] sm:$0xf]
        %v3809 = vld [vmem:[%s3795 + $0x34] sm:$0xf]
        %v3810 = vld [vmem:[%s3795 + $0x38] sm:$0x1]
        %v3811 = vld [vmem:[%s3795 + $0x3c] sm:$0xf]
        %v3812 = vld [vmem:[%s3795 + $0x40] sm:$0xf]
        %v3813 = vld [vmem:[%s3795 + $0x44] sm:$0x1]
        %v3814 = vld [vmem:[%s3795 + $0x48] sm:$0xf]
        %v3815 = vld [vmem:[%s3795 + $0x4c] sm:$0xf]
        %v3816 = vld [vmem:[%s3795 + $0x50] sm:$0x1]
        %v3817 = vld [vmem:[%s3795 + $0x54] sm:$0xf]
        %v3818 = vld [vmem:[%s3795 + $0x58] sm:$0xf]
        %v3819 = vld [vmem:[%s3795 + $0x5c] sm:$0x1]
        %v3820 = vld [vmem:[%s3795 + $0x60] sm:$0xf]
        %v3821 = vld [vmem:[%s3795 + $0x64] sm:$0xf]
        %v3822 = vld [vmem:[%s3795 + $0x68] sm:$0x1]
        %v3823 = vld [vmem:[%s3795 + $0x6c] sm:$0xf]
        %v3824 = vld [vmem:[%s3795 + $0x70] sm:$0xf]
        %v3825 = vld [vmem:[%s3795 + $0x74] sm:$0x1]
        %v3826 = vld [vmem:[%s3795 + $0x78] sm:$0xf]
        %v3827 = vld [vmem:[%s3795 + $0x7c] sm:$0xf]
        %v3828 = vld [vmem:[%s3795 + $0x80] sm:$0x1]
        %v3829 = vld [vmem:[%s3795 + $0x84] sm:$0xf]
        %v3830 = vld [vmem:[%s3795 + $0x88] sm:$0xf]
        %v3831 = vld [vmem:[%s3795 + $0x8c] sm:$0x1]
        %v3832 = vld [vmem:[%s3795 + $0x90] sm:$0xf]
        %v3833 = vld [vmem:[%s3795 + $0x94] sm:$0xf]
        %v3834 = vld [vmem:[%s3795 + $0x98] sm:$0x1]
        %v3835 = vld [vmem:[%s3795 + $0x9c] sm:$0xf]
        %v3836 = vld [vmem:[%s3795 + $0xa0] sm:$0xf]
        %v3837 = vld [vmem:[%s3795 + $0xa4] sm:$0x1]
        %v3838 = vld [vmem:[%s3795 + $0xa8] sm:$0xf]
        %v3839 = vld [vmem:[%s3795 + $0xac] sm:$0xf]
        %v3840 = vld [vmem:[%s3795 + $0xb0] sm:$0x1]
        %v3841 = vld [vmem:[%s3795 + $0xb4] sm:$0xf]
        %v3842 = vld [vmem:[%s3795 + $0xb8] sm:$0xf]
        %v3843 = vld [vmem:[%s3795 + $0xbc] sm:$0x1]
        %v3844 = vld [vmem:[#allocation2] sm:$0xff]
        %v3845 = vld [vmem:[#allocation2 + $0x8] sm:$0xff]
        %v3846 = vld [vmem:[#allocation2 + $0x10] sm:$0xff]
        %v3847 = vld [vmem:[#allocation2 + $0x18] sm:$0xff]
        %v3848 = vld [vmem:[#allocation2 + $0x20] sm:$0xff]
        %v3849 = vld [vmem:[#allocation2 + $0x28] sm:$0xff]
        %v3850 = vld [vmem:[#allocation2 + $0x30] sm:$0xff]
        %v3851 = vld [vmem:[#allocation2 + $0x38] sm:$0xff]
        %v3852 = vld [vmem:[#allocation2 + $0x40] sm:$0xff]
        %v3853 = vld [vmem:[#allocation2 + $0x48] sm:$0xff]
        %v3854 = vld [vmem:[#allocation2 + $0x50] sm:$0xff]
        %v3855 = vld [vmem:[#allocation2 + $0x58] sm:$0xff]
        %v3856 = vld [vmem:[#allocation2 + $0x60] sm:$0xff]
        %v3857 = vld [vmem:[#allocation2 + $0x68] sm:$0xff]
        %v3858 = vld [vmem:[#allocation2 + $0x70] sm:$0xff]
        %v3859 = vld [vmem:[#allocation2 + $0x78] sm:$0xff]
        %v3860 = vld [vmem:[#allocation2 + $0x80] sm:$0xff]
        %v3861 = vld [vmem:[#allocation2 + $0x88] sm:$0xff]
        %v3862 = vld [vmem:[#allocation2 + $0x90] sm:$0xff]
        %v3863 = vld [vmem:[#allocation2 + $0x98] sm:$0xff]
        %v3864 = vld [vmem:[#allocation2 + $0xa0] sm:$0xff]
        %v3865 = vld [vmem:[#allocation2 + $0xa8] sm:$0xff]
        %v3866 = vld [vmem:[#allocation2 + $0xb0] sm:$0xff]
        %v3867 = vld [vmem:[#allocation2 + $0xb8] sm:$0xff]
        %v3868 = vld [vmem:[#allocation2 + $0xc0] sm:$0xff]
        %v3869 = vld [vmem:[#allocation2 + $0xc8] sm:$0xff]
        %v3870 = vld [vmem:[#allocation2 + $0xd0] sm:$0xff]
        %v3871 = vld [vmem:[#allocation2 + $0xd8] sm:$0xff]
        %v3872 = vld [vmem:[#allocation2 + $0xe0] sm:$0xff]
        %v3873 = vld [vmem:[#allocation2 + $0xe8] sm:$0xff]
        %v3874 = vld [vmem:[#allocation2 + $0xf0] sm:$0xff]
        %v3875 = vld [vmem:[#allocation2 + $0xf8] sm:$0xff]
        %s3876 = scalar_lea.vmem %s2, 120
        %v3877 = vld [vmem:[%s3876] sm:$0xf]
        %v3878 = vld [vmem:[%s3876 + $0x4] sm:$0xf]
        %v3879 = vld [vmem:[%s3876 + $0x8] sm:$0xf]
        %v3880 = vld [vmem:[%s3876 + $0xc] sm:$0xf]
        %v3881 = vld [vmem:[%s3876 + $0x10] sm:$0x3]
        %v3914 = vunpack.c.l.b16 %v3796
        %v3915 = vunpack.c.l.b16 %v3797
        %v3916 = vunpack.c.l.b16 %v3799
        %v3917 = vunpack.c.l.b16 %v3800
        %v3918 = vunpack.c.l.b16 %v3802
        %v3919 = vunpack.c.l.b16 %v3803
        %v3920 = vunpack.c.l.b16 %v3805
        %v3921 = vunpack.c.l.b16 %v3806
        %v3922 = vunpack.c.l.b16 %v3808
        %v3923 = vunpack.c.l.b16 %v3809
        %v3924 = vunpack.c.l.b16 %v3811
        %v3925 = vunpack.c.l.b16 %v3812
        %v3926 = vunpack.c.l.b16 %v3814
        %v3927 = vunpack.c.l.b16 %v3815
        %v3928 = vunpack.c.l.b16 %v3817
        %v3929 = vunpack.c.l.b16 %v3818
        %v3930 = vunpack.c.l.b16 %v3820
        %v3931 = vunpack.c.l.b16 %v3821
        %v3932 = vunpack.c.l.b16 %v3823
        %v3933 = vunpack.c.l.b16 %v3824
        %v3934 = vunpack.c.l.b16 %v3826
        %v3935 = vunpack.c.l.b16 %v3827
        %v3936 = vunpack.c.l.b16 %v3829
        %v3937 = vunpack.c.l.b16 %v3830
        %v3938 = vunpack.c.l.b16 %v3832
        %v3939 = vunpack.c.l.b16 %v3833
        %v3940 = vunpack.c.l.b16 %v3835
        %v3941 = vunpack.c.l.b16 %v3836
        %v3942 = vunpack.c.l.b16 %v3838
        %v3943 = vunpack.c.l.b16 %v3839
        %v3944 = vunpack.c.l.b16 %v3841
        %v3945 = vunpack.c.l.b16 %v3842
        %v3946 = vpack.c.b16 %v3915, %v3914
        %v3947 = vpack.c.b16 %v3917, %v3916
        %v3948 = vpack.c.b16 %v3919, %v3918
        %v3949 = vpack.c.b16 %v3921, %v3920
        %v3950 = vpack.c.b16 %v3923, %v3922
        %v3951 = vpack.c.b16 %v3925, %v3924
        %v3952 = vpack.c.b16 %v3927, %v3926
        %v3953 = vpack.c.b16 %v3929, %v3928
        %v3954 = vpack.c.b16 %v3931, %v3930
        %v3955 = vpack.c.b16 %v3933, %v3932
        %v3956 = vpack.c.b16 %v3935, %v3934
        %v3957 = vpack.c.b16 %v3937, %v3936
        %v3958 = vpack.c.b16 %v3939, %v3938
        %v3959 = vpack.c.b16 %v3941, %v3940
        %v3960 = vpack.c.b16 %v3943, %v3942
        %v3961 = vpack.c.b16 %v3945, %v3944
        %v3967 = vunpack.c.l.b16 %v3877
        %v3968 = vunpack.c.l.b16 %v3878
        %v3969 = vunpack.c.l.b16 %v3879
        %v3970 = vunpack.c.l.b16 %v3880
        %v3971 = vunpack.c.l.b16 %v3881
        %v3972 = vpack.c.b16 %v3968, %v3967
        %v3973 = vpack.c.b16 %v3970, %v3969
        %v3974 = vpack.c.b16 %v3971, %v3971
        %v3978 = vsel %vm515, %v3946, 0
        %v3981 = vsel %vm515, %v3947, 0
        %v3984 = vsel %vm515, %v3948, 0
        %v3987 = vsel %vm515, %v3949, 0
        %v3990 = vsel %vm515, %v3950, 0
        %v3993 = vsel %vm515, %v3951, 0
        %v3996 = vsel %vm515, %v3952, 0
        %v3999 = vsel %vm515, %v3953, 0
        %v4002 = vsel %vm515, %v3954, 0
        %v4005 = vsel %vm515, %v3955, 0
        %v4008 = vsel %vm515, %v3956, 0
        %v4011 = vsel %vm515, %v3957, 0
        %v4014 = vsel %vm515, %v3958, 0
        %v4017 = vsel %vm515, %v3959, 0
        %v4020 = vsel %vm515, %v3960, 0
        %v4023 = vsel %vm515, %v3961, 0
        %v4026 = vsel %vm564, %v3974, 0
        %4028 = vmatprep.subr.bf16.mxu0 0
        %4029 = vmatpush1.bf16.msra.mxu0 %v3972
        %4030 = vmatprep.subr.bf16.mxu0 0
        %4031 = vmatpush1.bf16.msra.mxu0 %v3973
        %4032 = vmatprep.subr.bf16.mxu0 0
        %4033 = vmatpush1.bf16.msra.mxu0 %v4026
        %4034 = vmatprep.subr.bf16.mxu0 0
        %4035 = vmatpush1.bf16.msra.mxu0 0
        %4036 = vmatprep.subr.bf16.mxu0 0
        %4037 = vmatpush1.bf16.msra.mxu0 0
        %4038 = vmatprep.subr.bf16.mxu0 0
        %4039 = vmatpush1.bf16.msra.mxu0 0
        %4040 = vmatprep.subr.bf16.mxu0 0
        %4041 = vmatpush1.bf16.msra.mxu0 0
        %4042 = vmatprep.subr.bf16.mxu0 0
        %4043 = vmatpush1.bf16.msra.mxu0 0
        %4044 = vmatprep.subr.bf16.mxu0 0
        %4045 = vmatpush1.bf16.msra.mxu0 0
        %4046 = vmatprep.subr.bf16.mxu0 0
        %4047 = vmatpush1.bf16.msra.mxu0 0
        %4048 = vmatprep.subr.bf16.mxu0 0
        %4049 = vmatpush1.bf16.msra.mxu0 0
        %4050 = vmatprep.subr.bf16.mxu0 0
        %4051 = vmatpush1.bf16.msra.mxu0 0
        %4052 = vmatprep.subr.bf16.mxu0 0
        %4053 = vmatpush1.bf16.msra.mxu0 0
        %4054 = vmatprep.subr.bf16.mxu0 0
        %4055 = vmatpush1.bf16.msra.mxu0 0
        %4056 = vmatprep.subr.bf16.mxu0 0
        %4057 = vmatpush1.bf16.msra.mxu0 0
        %4058 = vmatprep.subr.bf16.mxu0 0
        %4059 = vmatpush1.bf16.msra.mxu0 0
        %4060 = vmatprep.mubr.bf16.mxu0 0
        %4061 = vmatmul.mubr.bf16.gmra.mrb[0].mxu0 %v3978
        %v4062 = vpop.f32.mrb[0].mxu0
        %v4063 = vadd.f32 0.0, %v4062
        %v4064 = vpop.f32.mrb[0].mxu0
        %v4065 = vpop.f32.mrb[0].mxu0
        %v4066 = vadd.f32 0.0, %v4065
        %v4067 = vpop.f32.mrb[0].mxu0
        %4068 = vmatprep.mubr.bf16.mxu0 0
        %4069 = vmatmul.mubr.bf16.gmra.mrb[0].mxu0 %v3981
        %v4070 = vpop.f32.mrb[0].mxu0
        %v4071 = vadd.f32 0.0, %v4070
        %v4072 = vpop.f32.mrb[0].mxu0
        %v4073 = vpop.f32.mrb[0].mxu0
        %v4074 = vadd.f32 0.0, %v4073
        %v4075 = vpop.f32.mrb[0].mxu0
        %4076 = vmatprep.mubr.bf16.mxu0 0
        %4077 = vmatmul.mubr.bf16.gmra.mrb[0].mxu0 %v3984
        %v4078 = vpop.f32.mrb[0].mxu0
        %v4079 = vadd.f32 0.0, %v4078
        %v4080 = vpop.f32.mrb[0].mxu0
        %v4081 = vpop.f32.mrb[0].mxu0
        %v4082 = vadd.f32 0.0, %v4081
        %v4083 = vpop.f32.mrb[0].mxu0
        %4084 = vmatprep.mubr.bf16.mxu0 0
        %4085 = vmatmul.mubr.bf16.gmra.mrb[0].mxu0 %v3987
        %v4086 = vpop.f32.mrb[0].mxu0
        %v4087 = vadd.f32 0.0, %v4086
        %v4088 = vpop.f32.mrb[0].mxu0
        %v4089 = vpop.f32.mrb[0].mxu0
        %v4090 = vadd.f32 0.0, %v4089
        %v4091 = vpop.f32.mrb[0].mxu0
        %4092 = vmatprep.mubr.bf16.mxu0 0
        %4093 = vmatmul.mubr.bf16.gmra.mrb[0].mxu0 %v3990
        %v4094 = vpop.f32.mrb[0].mxu0
        %v4095 = vadd.f32 0.0, %v4094
        %v4096 = vpop.f32.mrb[0].mxu0
        %v4097 = vpop.f32.mrb[0].mxu0
        %v4098 = vadd.f32 0.0, %v4097
        %v4099 = vpop.f32.mrb[0].mxu0
        %4100 = vmatprep.mubr.bf16.mxu0 0
        %4101 = vmatmul.mubr.bf16.gmra.mrb[0].mxu0 %v3993
        %v4102 = vpop.f32.mrb[0].mxu0
        %v4103 = vadd.f32 0.0, %v4102
        %v4104 = vpop.f32.mrb[0].mxu0
        %v4105 = vpop.f32.mrb[0].mxu0
        %v4106 = vadd.f32 0.0, %v4105
        %v4107 = vpop.f32.mrb[0].mxu0
        %4108 = vmatprep.mubr.bf16.mxu0 0
        %4109 = vmatmul.mubr.bf16.gmra.mrb[0].mxu0 %v3996
        %v4110 = vpop.f32.mrb[0].mxu0
        %v4111 = vadd.f32 0.0, %v4110
        %v4112 = vpop.f32.mrb[0].mxu0
        %v4113 = vpop.f32.mrb[0].mxu0
        %v4114 = vadd.f32 0.0, %v4113
        %v4115 = vpop.f32.mrb[0].mxu0
        %4116 = vmatprep.mubr.bf16.mxu0 0
        %4117 = vmatmul.mubr.bf16.gmra.mrb[0].mxu0 %v3999
        %v4118 = vpop.f32.mrb[0].mxu0
        %v4119 = vadd.f32 0.0, %v4118
        %v4120 = vpop.f32.mrb[0].mxu0
        %v4121 = vpop.f32.mrb[0].mxu0
        %v4122 = vadd.f32 0.0, %v4121
        %v4123 = vpop.f32.mrb[0].mxu0
        %4124 = vmatprep.mubr.bf16.mxu0 0
        %4125 = vmatmul.mubr.bf16.gmra.mrb[0].mxu0 %v4002
        %v4126 = vpop.f32.mrb[0].mxu0
        %v4127 = vadd.f32 0.0, %v4126
        %v4128 = vpop.f32.mrb[0].mxu0
        %v4129 = vpop.f32.mrb[0].mxu0
        %v4130 = vadd.f32 0.0, %v4129
        %v4131 = vpop.f32.mrb[0].mxu0
        %4132 = vmatprep.mubr.bf16.mxu0 0
        %4133 = vmatmul.mubr.bf16.gmra.mrb[0].mxu0 %v4005
        %v4134 = vpop.f32.mrb[0].mxu0
        %v4135 = vadd.f32 0.0, %v4134
        %v4136 = vpop.f32.mrb[0].mxu0
        %v4137 = vpop.f32.mrb[0].mxu0
        %v4138 = vadd.f32 0.0, %v4137
        %v4139 = vpop.f32.mrb[0].mxu0
        %4140 = vmatprep.mubr.bf16.mxu0 0
        %4141 = vmatmul.mubr.bf16.gmra.mrb[0].mxu0 %v4008
        %v4142 = vpop.f32.mrb[0].mxu0
        %v4143 = vadd.f32 0.0, %v4142
        %v4144 = vpop.f32.mrb[0].mxu0
        %v4145 = vpop.f32.mrb[0].mxu0
        %v4146 = vadd.f32 0.0, %v4145
        %v4147 = vpop.f32.mrb[0].mxu0
        %4148 = vmatprep.mubr.bf16.mxu0 0
        %4149 = vmatmul.mubr.bf16.gmra.mrb[0].mxu0 %v4011
        %v4150 = vpop.f32.mrb[0].mxu0
        %v4151 = vadd.f32 0.0, %v4150
        %v4152 = vpop.f32.mrb[0].mxu0
        %v4153 = vpop.f32.mrb[0].mxu0
        %v4154 = vadd.f32 0.0, %v4153
        %v4155 = vpop.f32.mrb[0].mxu0
        %4156 = vmatprep.mubr.bf16.mxu0 0
        %4157 = vmatmul.mubr.bf16.gmra.mrb[0].mxu0 %v4014
        %v4158 = vpop.f32.mrb[0].mxu0
        %v4159 = vadd.f32 0.0, %v4158
        %v4160 = vpop.f32.mrb[0].mxu0
        %v4161 = vpop.f32.mrb[0].mxu0
        %v4162 = vadd.f32 0.0, %v4161
        %v4163 = vpop.f32.mrb[0].mxu0
        %4164 = vmatprep.mubr.bf16.mxu0 0
        %4165 = vmatmul.mubr.bf16.gmra.mrb[0].mxu0 %v4017
        %v4166 = vpop.f32.mrb[0].mxu0
        %v4167 = vadd.f32 0.0, %v4166
        %v4168 = vpop.f32.mrb[0].mxu0
        %v4169 = vpop.f32.mrb[0].mxu0
        %v4170 = vadd.f32 0.0, %v4169
        %v4171 = vpop.f32.mrb[0].mxu0
        %4172 = vmatprep.mubr.bf16.mxu0 0
        %4173 = vmatmul.mubr.bf16.gmra.mrb[0].mxu0 %v4020
        %v4174 = vpop.f32.mrb[0].mxu0
        %v4175 = vadd.f32 0.0, %v4174
        %v4176 = vpop.f32.mrb[0].mxu0
        %v4177 = vpop.f32.mrb[0].mxu0
        %v4178 = vadd.f32 0.0, %v4177
        %v4179 = vpop.f32.mrb[0].mxu0
        %4180 = vmatprep.mubr.bf16.mxu0 0
        %4181 = vmatmul.mubr.bf16.gmra.mrb[0].mxu0 %v4023
        %v4182 = vpop.f32.mrb[0].mxu0
        %v4183 = vadd.f32 0.0, %v4182
        %v4184 = vpop.f32.mrb[0].mxu0
        %v4185 = vpop.f32.mrb[0].mxu0
        %v4186 = vadd.f32 0.0, %v4185
        %v4187 = vpop.f32.mrb[0].mxu0
        %4188 = vdwg.mxu0
        %v4189 = vadd.f32 %v3844, %v4063
        %v4190 = vadd.f32 %v3845, %v4066
        %v4191 = vadd.f32 %v3846, %v4071
        %v4192 = vadd.f32 %v3847, %v4074
        %v4193 = vadd.f32 %v3848, %v4079
        %v4194 = vadd.f32 %v3849, %v4082
        %v4195 = vadd.f32 %v3850, %v4087
        %v4196 = vadd.f32 %v3851, %v4090
        %v4197 = vadd.f32 %v3852, %v4095
        %v4198 = vadd.f32 %v3853, %v4098
        %v4199 = vadd.f32 %v3854, %v4103
        %v4200 = vadd.f32 %v3855, %v4106
        %v4201 = vadd.f32 %v3856, %v4111
        %v4202 = vadd.f32 %v3857, %v4114
        %v4203 = vadd.f32 %v3858, %v4119
        %v4204 = vadd.f32 %v3859, %v4122
        %v4205 = vadd.f32 %v3860, %v4127
        %v4206 = vadd.f32 %v3861, %v4130
        %v4207 = vadd.f32 %v3862, %v4135
        %v4208 = vadd.f32 %v3863, %v4138
        %v4209 = vadd.f32 %v3864, %v4143
        %v4210 = vadd.f32 %v3865, %v4146
        %v4211 = vadd.f32 %v3866, %v4151
        %v4212 = vadd.f32 %v3867, %v4154
        %v4213 = vadd.f32 %v3868, %v4159
        %v4214 = vadd.f32 %v3869, %v4162
        %v4215 = vadd.f32 %v3870, %v4167
        %v4216 = vadd.f32 %v3871, %v4170
        %v4217 = vadd.f32 %v3872, %v4175
        %v4218 = vadd.f32 %v3873, %v4178
        %v4219 = vadd.f32 %v3874, %v4183
        %v4220 = vadd.f32 %v3875, %v4186
        %4221 = vst [vmem:[#allocation2] sm:$0xff] %v4189
        %4222 = vst [vmem:[#allocation2 + $0x8] sm:$0xff] %v4190
        %4223 = vst [vmem:[#allocation2 + $0x10] sm:$0xff] %v4191
        %4224 = vst [vmem:[#allocation2 + $0x18] sm:$0xff] %v4192
        %4225 = vst [vmem:[#allocation2 + $0x20] sm:$0xff] %v4193
        %4226 = vst [vmem:[#allocation2 + $0x28] sm:$0xff] %v4194
        %4227 = vst [vmem:[#allocation2 + $0x30] sm:$0xff] %v4195
        %4228 = vst [vmem:[#allocation2 + $0x38] sm:$0xff] %v4196
        %4229 = vst [vmem:[#allocation2 + $0x40] sm:$0xff] %v4197
        %4230 = vst [vmem:[#allocation2 + $0x48] sm:$0xff] %v4198
        %4231 = vst [vmem:[#allocation2 + $0x50] sm:$0xff] %v4199
        %4232 = vst [vmem:[#allocation2 + $0x58] sm:$0xff] %v4200
        %4233 = vst [vmem:[#allocation2 + $0x60] sm:$0xff] %v4201
        %4234 = vst [vmem:[#allocation2 + $0x68] sm:$0xff] %v4202
        %4235 = vst [vmem:[#allocation2 + $0x70] sm:$0xff] %v4203
        %4236 = vst [vmem:[#allocation2 + $0x78] sm:$0xff] %v4204
        %4237 = vst [vmem:[#allocation2 + $0x80] sm:$0xff] %v4205
        %4238 = vst [vmem:[#allocation2 + $0x88] sm:$0xff] %v4206
        %4239 = vst [vmem:[#allocation2 + $0x90] sm:$0xff] %v4207
        %4240 = vst [vmem:[#allocation2 + $0x98] sm:$0xff] %v4208
        %4241 = vst [vmem:[#allocation2 + $0xa0] sm:$0xff] %v4209
        %4242 = vst [vmem:[#allocation2 + $0xa8] sm:$0xff] %v4210
        %4243 = vst [vmem:[#allocation2 + $0xb0] sm:$0xff] %v4211
        %4244 = vst [vmem:[#allocation2 + $0xb8] sm:$0xff] %v4212
        %4245 = vst [vmem:[#allocation2 + $0xc0] sm:$0xff] %v4213
        %4246 = vst [vmem:[#allocation2 + $0xc8] sm:$0xff] %v4214
        %4247 = vst [vmem:[#allocation2 + $0xd0] sm:$0xff] %v4215
        %4248 = vst [vmem:[#allocation2 + $0xd8] sm:$0xff] %v4216
        %4249 = vst [vmem:[#allocation2 + $0xe0] sm:$0xff] %v4217
        %4250 = vst [vmem:[#allocation2 + $0xe8] sm:$0xff] %v4218
        %4251 = vst [vmem:[#allocation2 + $0xf0] sm:$0xff] %v4219
        %4252 = vst [vmem:[#allocation2 + $0xf8] sm:$0xff] %v4220
        %v4254 = vshrl.u32 %v3796, 16
        %v4256 = vrot.slane %v4254, 4
        %v4257 = vshll.u32 %v3796, 16
        %v4259 = vrot.slane %v4257, 5
        %v4260 = vor.u32 %v4256, %v4259
        %v4261 = vrot.slane %v4260, 4
        %v4263 = vshll.u32 %v3797, 16
        %v4265 = vrot.slane %v4263, 5
        %v4266 = vsel %vm795, %v4261, %v4265
        %v4267 = vshrl.u32 %v3797, 16
        %v4269 = vrot.slane %v4267, 4
        %v4270 = vor.u32 %v4269, %v4265
        %v4271 = vrot.slane %v4270, 4
        %v4273 = vshll.u32 %v3798, 16
        %v4275 = vrot.slane %v4273, 5
        %v4276 = vsel %vm795, %v4271, %v4275
        %v4278 = vshrl.u32 %v3799, 16
        %v4280 = vrot.slane %v4278, 4
        %v4281 = vshll.u32 %v3799, 16
        %v4283 = vrot.slane %v4281, 5
        %v4284 = vor.u32 %v4280, %v4283
        %v4285 = vrot.slane %v4284, 4
        %v4287 = vshll.u32 %v3800, 16
        %v4289 = vrot.slane %v4287, 5
        %v4290 = vsel %vm795, %v4285, %v4289
        %v4291 = vshrl.u32 %v3800, 16
        %v4293 = vrot.slane %v4291, 4
        %v4294 = vor.u32 %v4293, %v4289
        %v4295 = vrot.slane %v4294, 4
        %v4297 = vshll.u32 %v3801, 16
        %v4299 = vrot.slane %v4297, 5
        %v4300 = vsel %vm795, %v4295, %v4299
        %v4302 = vshrl.u32 %v3802, 16
        %v4304 = vrot.slane %v4302, 4
        %v4305 = vshll.u32 %v3802, 16
        %v4307 = vrot.slane %v4305, 5
        %v4308 = vor.u32 %v4304, %v4307
        %v4309 = vrot.slane %v4308, 4
        %v4311 = vshll.u32 %v3803, 16
        %v4313 = vrot.slane %v4311, 5
        %v4314 = vsel %vm795, %v4309, %v4313
        %v4315 = vshrl.u32 %v3803, 16
        %v4317 = vrot.slane %v4315, 4
        %v4318 = vor.u32 %v4317, %v4313
        %v4319 = vrot.slane %v4318, 4
        %v4321 = vshll.u32 %v3804, 16
        %v4323 = vrot.slane %v4321, 5
        %v4324 = vsel %vm795, %v4319, %v4323
        %v4326 = vshrl.u32 %v3805, 16
        %v4328 = vrot.slane %v4326, 4
        %v4329 = vshll.u32 %v3805, 16
        %v4331 = vrot.slane %v4329, 5
        %v4332 = vor.u32 %v4328, %v4331
        %v4333 = vrot.slane %v4332, 4
        %v4335 = vshll.u32 %v3806, 16
        %v4337 = vrot.slane %v4335, 5
        %v4338 = vsel %vm795, %v4333, %v4337
        %v4339 = vshrl.u32 %v3806, 16
        %v4341 = vrot.slane %v4339, 4
        %v4342 = vor.u32 %v4341, %v4337
        %v4343 = vrot.slane %v4342, 4
        %v4345 = vshll.u32 %v3807, 16
        %v4347 = vrot.slane %v4345, 5
        %v4348 = vsel %vm795, %v4343, %v4347
        %v4350 = vshrl.u32 %v3808, 16
        %v4352 = vrot.slane %v4350, 4
        %v4353 = vshll.u32 %v3808, 16
        %v4355 = vrot.slane %v4353, 5
        %v4356 = vor.u32 %v4352, %v4355
        %v4357 = vrot.slane %v4356, 4
        %v4359 = vshll.u32 %v3809, 16
        %v4361 = vrot.slane %v4359, 5
        %v4362 = vsel %vm795, %v4357, %v4361
        %v4363 = vshrl.u32 %v3809, 16
        %v4365 = vrot.slane %v4363, 4
        %v4366 = vor.u32 %v4365, %v4361
        %v4367 = vrot.slane %v4366, 4
        %v4369 = vshll.u32 %v3810, 16
        %v4371 = vrot.slane %v4369, 5
        %v4372 = vsel %vm795, %v4367, %v4371
        %v4374 = vshrl.u32 %v3811, 16
        %v4376 = vrot.slane %v4374, 4
        %v4377 = vshll.u32 %v3811, 16
        %v4379 = vrot.slane %v4377, 5
        %v4380 = vor.u32 %v4376, %v4379
        %v4381 = vrot.slane %v4380, 4
        %v4383 = vshll.u32 %v3812, 16
        %v4385 = vrot.slane %v4383, 5
        %v4386 = vsel %vm795, %v4381, %v4385
        %v4387 = vshrl.u32 %v3812, 16
        %v4389 = vrot.slane %v4387, 4
        %v4390 = vor.u32 %v4389, %v4385
        %v4391 = vrot.slane %v4390, 4
        %v4393 = vshll.u32 %v3813, 16
        %v4395 = vrot.slane %v4393, 5
        %v4396 = vsel %vm795, %v4391, %v4395
        %v4398 = vshrl.u32 %v3814, 16
        %v4400 = vrot.slane %v4398, 4
        %v4401 = vshll.u32 %v3814, 16
        %v4403 = vrot.slane %v4401, 5
        %v4404 = vor.u32 %v4400, %v4403
        %v4405 = vrot.slane %v4404, 4
        %v4407 = vshll.u32 %v3815, 16
        %v4409 = vrot.slane %v4407, 5
        %v4410 = vsel %vm795, %v4405, %v4409
        %v4411 = vshrl.u32 %v3815, 16
        %v4413 = vrot.slane %v4411, 4
        %v4414 = vor.u32 %v4413, %v4409
        %v4415 = vrot.slane %v4414, 4
        %v4417 = vshll.u32 %v3816, 16
        %v4419 = vrot.slane %v4417, 5
        %v4420 = vsel %vm795, %v4415, %v4419
        %v4422 = vshrl.u32 %v3817, 16
        %v4424 = vrot.slane %v4422, 4
        %v4425 = vshll.u32 %v3817, 16
        %v4427 = vrot.slane %v4425, 5
        %v4428 = vor.u32 %v4424, %v4427
        %v4429 = vrot.slane %v4428, 4
        %v4431 = vshll.u32 %v3818, 16
        %v4433 = vrot.slane %v4431, 5
        %v4434 = vsel %vm795, %v4429, %v4433
        %v4435 = vshrl.u32 %v3818, 16
        %v4437 = vrot.slane %v4435, 4
        %v4438 = vor.u32 %v4437, %v4433
        %v4439 = vrot.slane %v4438, 4
        %v4441 = vshll.u32 %v3819, 16
        %v4443 = vrot.slane %v4441, 5
        %v4444 = vsel %vm795, %v4439, %v4443
        %v4446 = vshrl.u32 %v3820, 16
        %v4448 = vrot.slane %v4446, 4
        %v4449 = vshll.u32 %v3820, 16
        %v4451 = vrot.slane %v4449, 5
        %v4452 = vor.u32 %v4448, %v4451
        %v4453 = vrot.slane %v4452, 4
        %v4455 = vshll.u32 %v3821, 16
        %v4457 = vrot.slane %v4455, 5
        %v4458 = vsel %vm795, %v4453, %v4457
        %v4459 = vshrl.u32 %v3821, 16
        %v4461 = vrot.slane %v4459, 4
        %v4462 = vor.u32 %v4461, %v4457
        %v4463 = vrot.slane %v4462, 4
        %v4465 = vshll.u32 %v3822, 16
        %v4467 = vrot.slane %v4465, 5
        %v4468 = vsel %vm795, %v4463, %v4467
        %v4470 = vshrl.u32 %v3823, 16
        %v4472 = vrot.slane %v4470, 4
        %v4473 = vshll.u32 %v3823, 16
        %v4475 = vrot.slane %v4473, 5
        %v4476 = vor.u32 %v4472, %v4475
        %v4477 = vrot.slane %v4476, 4
        %v4479 = vshll.u32 %v3824, 16
        %v4481 = vrot.slane %v4479, 5
        %v4482 = vsel %vm795, %v4477, %v4481
        %v4483 = vshrl.u32 %v3824, 16
        %v4485 = vrot.slane %v4483, 4
        %v4486 = vor.u32 %v4485, %v4481
        %v4487 = vrot.slane %v4486, 4
        %v4489 = vshll.u32 %v3825, 16
        %v4491 = vrot.slane %v4489, 5
        %v4492 = vsel %vm795, %v4487, %v4491
        %v4494 = vshrl.u32 %v3826, 16
        %v4496 = vrot.slane %v4494, 4
        %v4497 = vshll.u32 %v3826, 16
        %v4499 = vrot.slane %v4497, 5
        %v4500 = vor.u32 %v4496, %v4499
        %v4501 = vrot.slane %v4500, 4
        %v4503 = vshll.u32 %v3827, 16
        %v4505 = vrot.slane %v4503, 5
        %v4506 = vsel %vm795, %v4501, %v4505
        %v4507 = vshrl.u32 %v3827, 16
        %v4509 = vrot.slane %v4507, 4
        %v4510 = vor.u32 %v4509, %v4505
        %v4511 = vrot.slane %v4510, 4
        %v4513 = vshll.u32 %v3828, 16
        %v4515 = vrot.slane %v4513, 5
        %v4516 = vsel %vm795, %v4511, %v4515
        %v4518 = vshrl.u32 %v3829, 16
        %v4520 = vrot.slane %v4518, 4
        %v4521 = vshll.u32 %v3829, 16
        %v4523 = vrot.slane %v4521, 5
        %v4524 = vor.u32 %v4520, %v4523
        %v4525 = vrot.slane %v4524, 4
        %v4527 = vshll.u32 %v3830, 16
        %v4529 = vrot.slane %v4527, 5
        %v4530 = vsel %vm795, %v4525, %v4529
        %v4531 = vshrl.u32 %v3830, 16
        %v4533 = vrot.slane %v4531, 4
        %v4534 = vor.u32 %v4533, %v4529
        %v4535 = vrot.slane %v4534, 4
        %v4537 = vshll.u32 %v3831, 16
        %v4539 = vrot.slane %v4537, 5
        %v4540 = vsel %vm795, %v4535, %v4539
        %v4542 = vshrl.u32 %v3832, 16
        %v4544 = vrot.slane %v4542, 4
        %v4545 = vshll.u32 %v3832, 16
        %v4547 = vrot.slane %v4545, 5
        %v4548 = vor.u32 %v4544, %v4547
        %v4549 = vrot.slane %v4548, 4
        %v4551 = vshll.u32 %v3833, 16
        %v4553 = vrot.slane %v4551, 5
        %v4554 = vsel %vm795, %v4549, %v4553
        %v4555 = vshrl.u32 %v3833, 16
        %v4557 = vrot.slane %v4555, 4
        %v4558 = vor.u32 %v4557, %v4553
        %v4559 = vrot.slane %v4558, 4
        %v4561 = vshll.u32 %v3834, 16
        %v4563 = vrot.slane %v4561, 5
        %v4564 = vsel %vm795, %v4559, %v4563
        %v4566 = vshrl.u32 %v3835, 16
        %v4568 = vrot.slane %v4566, 4
        %v4569 = vshll.u32 %v3835, 16
        %v4571 = vrot.slane %v4569, 5
        %v4572 = vor.u32 %v4568, %v4571
        %v4573 = vrot.slane %v4572, 4
        %v4575 = vshll.u32 %v3836, 16
        %v4577 = vrot.slane %v4575, 5
        %v4578 = vsel %vm795, %v4573, %v4577
        %v4579 = vshrl.u32 %v3836, 16
        %v4581 = vrot.slane %v4579, 4
        %v4582 = vor.u32 %v4581, %v4577
        %v4583 = vrot.slane %v4582, 4
        %v4585 = vshll.u32 %v3837, 16
        %v4587 = vrot.slane %v4585, 5
        %v4588 = vsel %vm795, %v4583, %v4587
        %v4590 = vshrl.u32 %v3838, 16
        %v4592 = vrot.slane %v4590, 4
        %v4593 = vshll.u32 %v3838, 16
        %v4595 = vrot.slane %v4593, 5
        %v4596 = vor.u32 %v4592, %v4595
        %v4597 = vrot.slane %v4596, 4
        %v4599 = vshll.u32 %v3839, 16
        %v4601 = vrot.slane %v4599, 5
        %v4602 = vsel %vm795, %v4597, %v4601
        %v4603 = vshrl.u32 %v3839, 16
        %v4605 = vrot.slane %v4603, 4
        %v4606 = vor.u32 %v4605, %v4601
        %v4607 = vrot.slane %v4606, 4
        %v4609 = vshll.u32 %v3840, 16
        %v4611 = vrot.slane %v4609, 5
        %v4612 = vsel %vm795, %v4607, %v4611
        %v4614 = vshrl.u32 %v3841, 16
        %v4616 = vrot.slane %v4614, 4
        %v4617 = vshll.u32 %v3841, 16
        %v4619 = vrot.slane %v4617, 5
        %v4620 = vor.u32 %v4616, %v4619
        %v4621 = vrot.slane %v4620, 4
        %v4623 = vshll.u32 %v3842, 16
        %v4625 = vrot.slane %v4623, 5
        %v4626 = vsel %vm795, %v4621, %v4625
        %v4627 = vshrl.u32 %v3842, 16
        %v4629 = vrot.slane %v4627, 4
        %v4630 = vor.u32 %v4629, %v4625
        %v4631 = vrot.slane %v4630, 4
        %v4633 = vshll.u32 %v3843, 16
        %v4635 = vrot.slane %v4633, 5
        %v4636 = vsel %vm795, %v4631, %v4635
        %v4637 = vld [vmem:[#allocation2] sm:$0xff]
        %v4638 = vld [vmem:[#allocation2 + $0x8] sm:$0xff]
        %v4639 = vld [vmem:[#allocation2 + $0x10] sm:$0xff]
        %v4640 = vld [vmem:[#allocation2 + $0x18] sm:$0xff]
        %v4641 = vld [vmem:[#allocation2 + $0x20] sm:$0xff]
        %v4642 = vld [vmem:[#allocation2 + $0x28] sm:$0xff]
        %v4643 = vld [vmem:[#allocation2 + $0x30] sm:$0xff]
        %v4644 = vld [vmem:[#allocation2 + $0x38] sm:$0xff]
        %v4645 = vld [vmem:[#allocation2 + $0x40] sm:$0xff]
        %v4646 = vld [vmem:[#allocation2 + $0x48] sm:$0xff]
        %v4647 = vld [vmem:[#allocation2 + $0x50] sm:$0xff]
        %v4648 = vld [vmem:[#allocation2 + $0x58] sm:$0xff]
        %v4649 = vld [vmem:[#allocation2 + $0x60] sm:$0xff]
        %v4650 = vld [vmem:[#allocation2 + $0x68] sm:$0xff]
        %v4651 = vld [vmem:[#allocation2 + $0x70] sm:$0xff]
        %v4652 = vld [vmem:[#allocation2 + $0x78] sm:$0xff]
        %v4653 = vld [vmem:[#allocation2 + $0x80] sm:$0xff]
        %v4654 = vld [vmem:[#allocation2 + $0x88] sm:$0xff]
        %v4655 = vld [vmem:[#allocation2 + $0x90] sm:$0xff]
        %v4656 = vld [vmem:[#allocation2 + $0x98] sm:$0xff]
        %v4657 = vld [vmem:[#allocation2 + $0xa0] sm:$0xff]
        %v4658 = vld [vmem:[#allocation2 + $0xa8] sm:$0xff]
        %v4659 = vld [vmem:[#allocation2 + $0xb0] sm:$0xff]
        %v4660 = vld [vmem:[#allocation2 + $0xb8] sm:$0xff]
        %v4661 = vld [vmem:[#allocation2 + $0xc0] sm:$0xff]
        %v4662 = vld [vmem:[#allocation2 + $0xc8] sm:$0xff]
        %v4663 = vld [vmem:[#allocation2 + $0xd0] sm:$0xff]
        %v4664 = vld [vmem:[#allocation2 + $0xd8] sm:$0xff]
        %v4665 = vld [vmem:[#allocation2 + $0xe0] sm:$0xff]
        %v4666 = vld [vmem:[#allocation2 + $0xe8] sm:$0xff]
        %v4667 = vld [vmem:[#allocation2 + $0xf0] sm:$0xff]
        %v4668 = vld [vmem:[#allocation2 + $0xf8] sm:$0xff]
        %s4669 = scalar_lea.vmem %s2, 140
        %v4670 = vld [vmem:[%s4669] sm:$0xf]
        %v4671 = vld [vmem:[%s4669 + $0x4] sm:$0xf]
        %v4672 = vld [vmem:[%s4669 + $0x8] sm:$0xf]
        %v4673 = vld [vmem:[%s4669 + $0xc] sm:$0xf]
        %v4674 = vld [vmem:[%s4669 + $0x10] sm:$0x3]
        %v4675 = vunpack.c.l.b16 %v4266
        %v4676 = vunpack.c.l.b16 %v4276
        %v4677 = vunpack.c.l.b16 %v4290
        %v4678 = vunpack.c.l.b16 %v4300
        %v4679 = vunpack.c.l.b16 %v4314
        %v4680 = vunpack.c.l.b16 %v4324
        %v4681 = vunpack.c.l.b16 %v4338
        %v4682 = vunpack.c.l.b16 %v4348
        %v4683 = vunpack.c.l.b16 %v4362
        %v4684 = vunpack.c.l.b16 %v4372
        %v4685 = vunpack.c.l.b16 %v4386
        %v4686 = vunpack.c.l.b16 %v4396
        %v4687 = vunpack.c.l.b16 %v4410
        %v4688 = vunpack.c.l.b16 %v4420
        %v4689 = vunpack.c.l.b16 %v4434
        %v4690 = vunpack.c.l.b16 %v4444
        %v4691 = vunpack.c.l.b16 %v4458
        %v4692 = vunpack.c.l.b16 %v4468
        %v4693 = vunpack.c.l.b16 %v4482
        %v4694 = vunpack.c.l.b16 %v4492
        %v4695 = vunpack.c.l.b16 %v4506
        %v4696 = vunpack.c.l.b16 %v4516
        %v4697 = vunpack.c.l.b16 %v4530
        %v4698 = vunpack.c.l.b16 %v4540
        %v4699 = vunpack.c.l.b16 %v4554
        %v4700 = vunpack.c.l.b16 %v4564
        %v4701 = vunpack.c.l.b16 %v4578
        %v4702 = vunpack.c.l.b16 %v4588
        %v4703 = vunpack.c.l.b16 %v4602
        %v4704 = vunpack.c.l.b16 %v4612
        %v4705 = vunpack.c.l.b16 %v4626
        %v4706 = vunpack.c.l.b16 %v4636
        %v4707 = vpack.c.b16 %v4676, %v4675
        %v4708 = vpack.c.b16 %v4678, %v4677
        %v4709 = vpack.c.b16 %v4680, %v4679
        %v4710 = vpack.c.b16 %v4682, %v4681
        %v4711 = vpack.c.b16 %v4684, %v4683
        %v4712 = vpack.c.b16 %v4686, %v4685
        %v4713 = vpack.c.b16 %v4688, %v4687
        %v4714 = vpack.c.b16 %v4690, %v4689
        %v4715 = vpack.c.b16 %v4692, %v4691
        %v4716 = vpack.c.b16 %v4694, %v4693
        %v4717 = vpack.c.b16 %v4696, %v4695
        %v4718 = vpack.c.b16 %v4698, %v4697
        %v4719 = vpack.c.b16 %v4700, %v4699
        %v4720 = vpack.c.b16 %v4702, %v4701
        %v4721 = vpack.c.b16 %v4704, %v4703
        %v4722 = vpack.c.b16 %v4706, %v4705
        %v4728 = vunpack.c.l.b16 %v4670
        %v4729 = vunpack.c.l.b16 %v4671
        %v4730 = vunpack.c.l.b16 %v4672
        %v4731 = vunpack.c.l.b16 %v4673
        %v4732 = vunpack.c.l.b16 %v4674
        %v4733 = vpack.c.b16 %v4729, %v4728
        %v4734 = vpack.c.b16 %v4731, %v4730
        %v4735 = vpack.c.b16 %v4732, %v4732
        %v4739 = vsel %vm515, %v4707, 0
        %v4742 = vsel %vm515, %v4708, 0
        %v4745 = vsel %vm515, %v4709, 0
        %v4748 = vsel %vm515, %v4710, 0
        %v4751 = vsel %vm515, %v4711, 0
        %v4754 = vsel %vm515, %v4712, 0
        %v4757 = vsel %vm515, %v4713, 0
        %v4760 = vsel %vm515, %v4714, 0
        %v4763 = vsel %vm515, %v4715, 0
        %v4766 = vsel %vm515, %v4716, 0
        %v4769 = vsel %vm515, %v4717, 0
        %v4772 = vsel %vm515, %v4718, 0
        %v4775 = vsel %vm515, %v4719, 0
        %v4778 = vsel %vm515, %v4720, 0
        %v4781 = vsel %vm515, %v4721, 0
        %v4784 = vsel %vm515, %v4722, 0
        %v4787 = vsel %vm564, %v4735, 0
        %4789 = vmatprep.subr.bf16.mxu0 0
        %4790 = vmatpush1.bf16.msra.mxu0 %v4733
        %4791 = vmatprep.subr.bf16.mxu0 0
        %4792 = vmatpush1.bf16.msra.mxu0 %v4734
        %4793 = vmatprep.subr.bf16.mxu0 0
        %4794 = vmatpush1.bf16.msra.mxu0 %v4787
        %4795 = vmatprep.subr.bf16.mxu0 0
        %4796 = vmatpush1.bf16.msra.mxu0 0
        %4797 = vmatprep.subr.bf16.mxu0 0
        %4798 = vmatpush1.bf16.msra.mxu0 0
        %4799 = vmatprep.subr.bf16.mxu0 0
        %4800 = vmatpush1.bf16.msra.mxu0 0
        %4801 = vmatprep.subr.bf16.mxu0 0
        %4802 = vmatpush1.bf16.msra.mxu0 0
        %4803 = vmatprep.subr.bf16.mxu0 0
        %4804 = vmatpush1.bf16.msra.mxu0 0
        %4805 = vmatprep.subr.bf16.mxu0 0
        %4806 = vmatpush1.bf16.msra.mxu0 0
        %4807 = vmatprep.subr.bf16.mxu0 0
        %4808 = vmatpush1.bf16.msra.mxu0 0
        %4809 = vmatprep.subr.bf16.mxu0 0
        %4810 = vmatpush1.bf16.msra.mxu0 0
        %4811 = vmatprep.subr.bf16.mxu0 0
        %4812 = vmatpush1.bf16.msra.mxu0 0
        %4813 = vmatprep.subr.bf16.mxu0 0
        %4814 = vmatpush1.bf16.msra.mxu0 0
        %4815 = vmatprep.subr.bf16.mxu0 0
        %4816 = vmatpush1.bf16.msra.mxu0 0
        %4817 = vmatprep.subr.bf16.mxu0 0
        %4818 = vmatpush1.bf16.msra.mxu0 0
        %4819 = vmatprep.subr.bf16.mxu0 0
        %4820 = vmatpush1.bf16.msra.mxu0 0
        %4821 = vmatprep.mubr.bf16.mxu0 0
        %4822 = vmatmul.mubr.bf16.gmra.mrb[0].mxu0 %v4739
        %v4823 = vpop.f32.mrb[0].mxu0
        %v4824 = vadd.f32 0.0, %v4823
        %v4825 = vpop.f32.mrb[0].mxu0
        %v4826 = vpop.f32.mrb[0].mxu0
        %v4827 = vadd.f32 0.0, %v4826
        %v4828 = vpop.f32.mrb[0].mxu0
        %4829 = vmatprep.mubr.bf16.mxu0 0
        %4830 = vmatmul.mubr.bf16.gmra.mrb[0].mxu0 %v4742
        %v4831 = vpop.f32.mrb[0].mxu0
        %v4832 = vadd.f32 0.0, %v4831
        %v4833 = vpop.f32.mrb[0].mxu0
        %v4834 = vpop.f32.mrb[0].mxu0
        %v4835 = vadd.f32 0.0, %v4834
        %v4836 = vpop.f32.mrb[0].mxu0
        %4837 = vmatprep.mubr.bf16.mxu0 0
        %4838 = vmatmul.mubr.bf16.gmra.mrb[0].mxu0 %v4745
        %v4839 = vpop.f32.mrb[0].mxu0
        %v4840 = vadd.f32 0.0, %v4839
        %v4841 = vpop.f32.mrb[0].mxu0
        %v4842 = vpop.f32.mrb[0].mxu0
        %v4843 = vadd.f32 0.0, %v4842
        %v4844 = vpop.f32.mrb[0].mxu0
        %4845 = vmatprep.mubr.bf16.mxu0 0
        %4846 = vmatmul.mubr.bf16.gmra.mrb[0].mxu0 %v4748
        %v4847 = vpop.f32.mrb[0].mxu0
        %v4848 = vadd.f32 0.0, %v4847
        %v4849 = vpop.f32.mrb[0].mxu0
        %v4850 = vpop.f32.mrb[0].mxu0
        %v4851 = vadd.f32 0.0, %v4850
        %v4852 = vpop.f32.mrb[0].mxu0
        %4853 = vmatprep.mubr.bf16.mxu0 0
        %4854 = vmatmul.mubr.bf16.gmra.mrb[0].mxu0 %v4751
        %v4855 = vpop.f32.mrb[0].mxu0
        %v4856 = vadd.f32 0.0, %v4855
        %v4857 = vpop.f32.mrb[0].mxu0
        %v4858 = vpop.f32.mrb[0].mxu0
        %v4859 = vadd.f32 0.0, %v4858
        %v4860 = vpop.f32.mrb[0].mxu0
        %4861 = vmatprep.mubr.bf16.mxu0 0
        %4862 = vmatmul.mubr.bf16.gmra.mrb[0].mxu0 %v4754
        %v4863 = vpop.f32.mrb[0].mxu0
        %v4864 = vadd.f32 0.0, %v4863
        %v4865 = vpop.f32.mrb[0].mxu0
        %v4866 = vpop.f32.mrb[0].mxu0
        %v4867 = vadd.f32 0.0, %v4866
        %v4868 = vpop.f32.mrb[0].mxu0
        %4869 = vmatprep.mubr.bf16.mxu0 0
        %4870 = vmatmul.mubr.bf16.gmra.mrb[0].mxu0 %v4757
        %v4871 = vpop.f32.mrb[0].mxu0
        %v4872 = vadd.f32 0.0, %v4871
        %v4873 = vpop.f32.mrb[0].mxu0
        %v4874 = vpop.f32.mrb[0].mxu0
        %v4875 = vadd.f32 0.0, %v4874
        %v4876 = vpop.f32.mrb[0].mxu0
        %4877 = vmatprep.mubr.bf16.mxu0 0
        %4878 = vmatmul.mubr.bf16.gmra.mrb[0].mxu0 %v4760
        %v4879 = vpop.f32.mrb[0].mxu0
        %v4880 = vadd.f32 0.0, %v4879
        %v4881 = vpop.f32.mrb[0].mxu0
        %v4882 = vpop.f32.mrb[0].mxu0
        %v4883 = vadd.f32 0.0, %v4882
        %v4884 = vpop.f32.mrb[0].mxu0
        %4885 = vmatprep.mubr.bf16.mxu0 0
        %4886 = vmatmul.mubr.bf16.gmra.mrb[0].mxu0 %v4763
        %v4887 = vpop.f32.mrb[0].mxu0
        %v4888 = vadd.f32 0.0, %v4887
        %v4889 = vpop.f32.mrb[0].mxu0
        %v4890 = vpop.f32.mrb[0].mxu0
        %v4891 = vadd.f32 0.0, %v4890
        %v4892 = vpop.f32.mrb[0].mxu0
        %4893 = vmatprep.mubr.bf16.mxu0 0
        %4894 = vmatmul.mubr.bf16.gmra.mrb[0].mxu0 %v4766
        %v4895 = vpop.f32.mrb[0].mxu0
        %v4896 = vadd.f32 0.0, %v4895
        %v4897 = vpop.f32.mrb[0].mxu0
        %v4898 = vpop.f32.mrb[0].mxu0
        %v4899 = vadd.f32 0.0, %v4898
        %v4900 = vpop.f32.mrb[0].mxu0
        %4901 = vmatprep.mubr.bf16.mxu0 0
        %4902 = vmatmul.mubr.bf16.gmra.mrb[0].mxu0 %v4769
        %v4903 = vpop.f32.mrb[0].mxu0
        %v4904 = vadd.f32 0.0, %v4903
        %v4905 = vpop.f32.mrb[0].mxu0
        %v4906 = vpop.f32.mrb[0].mxu0
        %v4907 = vadd.f32 0.0, %v4906
        %v4908 = vpop.f32.mrb[0].mxu0
        %4909 = vmatprep.mubr.bf16.mxu0 0
        %4910 = vmatmul.mubr.bf16.gmra.mrb[0].mxu0 %v4772
        %v4911 = vpop.f32.mrb[0].mxu0
        %v4912 = vadd.f32 0.0, %v4911
        %v4913 = vpop.f32.mrb[0].mxu0
        %v4914 = vpop.f32.mrb[0].mxu0
        %v4915 = vadd.f32 0.0, %v4914
        %v4916 = vpop.f32.mrb[0].mxu0
        %4917 = vmatprep.mubr.bf16.mxu0 0
        %4918 = vmatmul.mubr.bf16.gmra.mrb[0].mxu0 %v4775
        %v4919 = vpop.f32.mrb[0].mxu0
        %v4920 = vadd.f32 0.0, %v4919
        %v4921 = vpop.f32.mrb[0].mxu0
        %v4922 = vpop.f32.mrb[0].mxu0
        %v4923 = vadd.f32 0.0, %v4922
        %v4924 = vpop.f32.mrb[0].mxu0
        %4925 = vmatprep.mubr.bf16.mxu0 0
        %4926 = vmatmul.mubr.bf16.gmra.mrb[0].mxu0 %v4778
        %v4927 = vpop.f32.mrb[0].mxu0
        %v4928 = vadd.f32 0.0, %v4927
        %v4929 = vpop.f32.mrb[0].mxu0
        %v4930 = vpop.f32.mrb[0].mxu0
        %v4931 = vadd.f32 0.0, %v4930
        %v4932 = vpop.f32.mrb[0].mxu0
        %4933 = vmatprep.mubr.bf16.mxu0 0
        %4934 = vmatmul.mubr.bf16.gmra.mrb[0].mxu0 %v4781
        %v4935 = vpop.f32.mrb[0].mxu0
        %v4936 = vadd.f32 0.0, %v4935
        %v4937 = vpop.f32.mrb[0].mxu0
        %v4938 = vpop.f32.mrb[0].mxu0
        %v4939 = vadd.f32 0.0, %v4938
        %v4940 = vpop.f32.mrb[0].mxu0
        %4941 = vmatprep.mubr.bf16.mxu0 0
        %4942 = vmatmul.mubr.bf16.gmra.mrb[0].mxu0 %v4784
        %v4943 = vpop.f32.mrb[0].mxu0
        %v4944 = vadd.f32 0.0, %v4943
        %v4945 = vpop.f32.mrb[0].mxu0
        %v4946 = vpop.f32.mrb[0].mxu0
        %v4947 = vadd.f32 0.0, %v4946
        %v4948 = vpop.f32.mrb[0].mxu0
        %4949 = vdwg.mxu0
        %v4950 = vadd.f32 %v4637, %v4824
        %v4951 = vadd.f32 %v4638, %v4827
        %v4952 = vadd.f32 %v4639, %v4832
        %v4953 = vadd.f32 %v4640, %v4835
        %v4954 = vadd.f32 %v4641, %v4840
        %v4955 = vadd.f32 %v4642, %v4843
        %v4956 = vadd.f32 %v4643, %v4848
        %v4957 = vadd.f32 %v4644, %v4851
        %v4958 = vadd.f32 %v4645, %v4856
        %v4959 = vadd.f32 %v4646, %v4859
        %v4960 = vadd.f32 %v4647, %v4864
        %v4961 = vadd.f32 %v4648, %v4867
        %v4962 = vadd.f32 %v4649, %v4872
        %v4963 = vadd.f32 %v4650, %v4875
        %v4964 = vadd.f32 %v4651, %v4880
        %v4965 = vadd.f32 %v4652, %v4883
        %v4966 = vadd.f32 %v4653, %v4888
        %v4967 = vadd.f32 %v4654, %v4891
        %v4968 = vadd.f32 %v4655, %v4896
        %v4969 = vadd.f32 %v4656, %v4899
        %v4970 = vadd.f32 %v4657, %v4904
        %v4971 = vadd.f32 %v4658, %v4907
        %v4972 = vadd.f32 %v4659, %v4912
        %v4973 = vadd.f32 %v4660, %v4915
        %v4974 = vadd.f32 %v4661, %v4920
        %v4975 = vadd.f32 %v4662, %v4923
        %v4976 = vadd.f32 %v4663, %v4928
        %v4977 = vadd.f32 %v4664, %v4931
        %v4978 = vadd.f32 %v4665, %v4936
        %v4979 = vadd.f32 %v4666, %v4939
        %v4980 = vadd.f32 %v4667, %v4944
        %v4981 = vadd.f32 %v4668, %v4947
        %4982 = vst [vmem:[#allocation2] sm:$0xff] %v4950
        %4983 = vst [vmem:[#allocation2 + $0x8] sm:$0xff] %v4951
        %4984 = vst [vmem:[#allocation2 + $0x10] sm:$0xff] %v4952
        %4985 = vst [vmem:[#allocation2 + $0x18] sm:$0xff] %v4953
        %4986 = vst [vmem:[#allocation2 + $0x20] sm:$0xff] %v4954
        %4987 = vst [vmem:[#allocation2 + $0x28] sm:$0xff] %v4955
        %4988 = vst [vmem:[#allocation2 + $0x30] sm:$0xff] %v4956
        %4989 = vst [vmem:[#allocation2 + $0x38] sm:$0xff] %v4957
        %4990 = vst [vmem:[#allocation2 + $0x40] sm:$0xff] %v4958
        %4991 = vst [vmem:[#allocation2 + $0x48] sm:$0xff] %v4959
        %4992 = vst [vmem:[#allocation2 + $0x50] sm:$0xff] %v4960
        %4993 = vst [vmem:[#allocation2 + $0x58] sm:$0xff] %v4961
        %4994 = vst [vmem:[#allocation2 + $0x60] sm:$0xff] %v4962
        %4995 = vst [vmem:[#allocation2 + $0x68] sm:$0xff] %v4963
        %4996 = vst [vmem:[#allocation2 + $0x70] sm:$0xff] %v4964
        %4997 = vst [vmem:[#allocation2 + $0x78] sm:$0xff] %v4965
        %4998 = vst [vmem:[#allocation2 + $0x80] sm:$0xff] %v4966
        %4999 = vst [vmem:[#allocation2 + $0x88] sm:$0xff] %v4967
        %5000 = vst [vmem:[#allocation2 + $0x90] sm:$0xff] %v4968
        %5001 = vst [vmem:[#allocation2 + $0x98] sm:$0xff] %v4969
        %5002 = vst [vmem:[#allocation2 + $0xa0] sm:$0xff] %v4970
        %5003 = vst [vmem:[#allocation2 + $0xa8] sm:$0xff] %v4971
        %5004 = vst [vmem:[#allocation2 + $0xb0] sm:$0xff] %v4972
        %5005 = vst [vmem:[#allocation2 + $0xb8] sm:$0xff] %v4973
        %5006 = vst [vmem:[#allocation2 + $0xc0] sm:$0xff] %v4974
        %5007 = vst [vmem:[#allocation2 + $0xc8] sm:$0xff] %v4975
        %5008 = vst [vmem:[#allocation2 + $0xd0] sm:$0xff] %v4976
        %5009 = vst [vmem:[#allocation2 + $0xd8] sm:$0xff] %v4977
        %5010 = vst [vmem:[#allocation2 + $0xe0] sm:$0xff] %v4978
        %5011 = vst [vmem:[#allocation2 + $0xe8] sm:$0xff] %v4979
        %5012 = vst [vmem:[#allocation2 + $0xf0] sm:$0xff] %v4980
        %5013 = vst [vmem:[#allocation2 + $0xf8] sm:$0xff] %v4981
        %v5030 = vrot.slane %v3796, 5
        %v5031 = vrot.slane %v5030, 4
        %v5032 = vrot.slane %v3797, 5
        %v5033 = vsel %vm1575, %v5031, %v5032
        %v5034 = vrot.slane %v5032, 4
        %v5035 = vrot.slane %v3798, 5
        %v5036 = vsel %vm1575, %v5034, %v5035
        %v5037 = vrot.slane %v3799, 5
        %v5038 = vrot.slane %v5037, 4
        %v5039 = vrot.slane %v3800, 5
        %v5040 = vsel %vm1575, %v5038, %v5039
        %v5041 = vrot.slane %v5039, 4
        %v5042 = vrot.slane %v3801, 5
        %v5043 = vsel %vm1575, %v5041, %v5042
        %v5044 = vrot.slane %v3802, 5
        %v5045 = vrot.slane %v5044, 4
        %v5046 = vrot.slane %v3803, 5
        %v5047 = vsel %vm1575, %v5045, %v5046
        %v5048 = vrot.slane %v5046, 4
        %v5049 = vrot.slane %v3804, 5
        %v5050 = vsel %vm1575, %v5048, %v5049
        %v5051 = vrot.slane %v3805, 5
        %v5052 = vrot.slane %v5051, 4
        %v5053 = vrot.slane %v3806, 5
        %v5054 = vsel %vm1575, %v5052, %v5053
        %v5055 = vrot.slane %v5053, 4
        %v5056 = vrot.slane %v3807, 5
        %v5057 = vsel %vm1575, %v5055, %v5056
        %v5058 = vrot.slane %v3808, 5
        %v5059 = vrot.slane %v5058, 4
        %v5060 = vrot.slane %v3809, 5
        %v5061 = vsel %vm1575, %v5059, %v5060
        %v5062 = vrot.slane %v5060, 4
        %v5063 = vrot.slane %v3810, 5
        %v5064 = vsel %vm1575, %v5062, %v5063
        %v5065 = vrot.slane %v3811, 5
        %v5066 = vrot.slane %v5065, 4
        %v5067 = vrot.slane %v3812, 5
        %v5068 = vsel %vm1575, %v5066, %v5067
        %v5069 = vrot.slane %v5067, 4
        %v5070 = vrot.slane %v3813, 5
        %v5071 = vsel %vm1575, %v5069, %v5070
        %v5072 = vrot.slane %v3814, 5
        %v5073 = vrot.slane %v5072, 4
        %v5074 = vrot.slane %v3815, 5
        %v5075 = vsel %vm1575, %v5073, %v5074
        %v5076 = vrot.slane %v5074, 4
        %v5077 = vrot.slane %v3816, 5
        %v5078 = vsel %vm1575, %v5076, %v5077
        %v5079 = vrot.slane %v3817, 5
        %v5080 = vrot.slane %v5079, 4
        %v5081 = vrot.slane %v3818, 5
        %v5082 = vsel %vm1575, %v5080, %v5081
        %v5083 = vrot.slane %v5081, 4
        %v5084 = vrot.slane %v3819, 5
        %v5085 = vsel %vm1575, %v5083, %v5084
        %v5086 = vrot.slane %v3820, 5
        %v5087 = vrot.slane %v5086, 4
        %v5088 = vrot.slane %v3821, 5
        %v5089 = vsel %vm1575, %v5087, %v5088
        %v5090 = vrot.slane %v5088, 4
        %v5091 = vrot.slane %v3822, 5
        %v5092 = vsel %vm1575, %v5090, %v5091
        %v5093 = vrot.slane %v3823, 5
        %v5094 = vrot.slane %v5093, 4
        %v5095 = vrot.slane %v3824, 5
        %v5096 = vsel %vm1575, %v5094, %v5095
        %v5097 = vrot.slane %v5095, 4
        %v5098 = vrot.slane %v3825, 5
        %v5099 = vsel %vm1575, %v5097, %v5098
        %v5100 = vrot.slane %v3826, 5
        %v5101 = vrot.slane %v5100, 4
        %v5102 = vrot.slane %v3827, 5
        %v5103 = vsel %vm1575, %v5101, %v5102
        %v5104 = vrot.slane %v5102, 4
        %v5105 = vrot.slane %v3828, 5
        %v5106 = vsel %vm1575, %v5104, %v5105
        %v5107 = vrot.slane %v3829, 5
        %v5108 = vrot.slane %v5107, 4
        %v5109 = vrot.slane %v3830, 5
        %v5110 = vsel %vm1575, %v5108, %v5109
        %v5111 = vrot.slane %v5109, 4
        %v5112 = vrot.slane %v3831, 5
        %v5113 = vsel %vm1575, %v5111, %v5112
        %v5114 = vrot.slane %v3832, 5
        %v5115 = vrot.slane %v5114, 4
        %v5116 = vrot.slane %v3833, 5
        %v5117 = vsel %vm1575, %v5115, %v5116
        %v5118 = vrot.slane %v5116, 4
        %v5119 = vrot.slane %v3834, 5
        %v5120 = vsel %vm1575, %v5118, %v5119
        %v5121 = vrot.slane %v3835, 5
        %v5122 = vrot.slane %v5121, 4
        %v5123 = vrot.slane %v3836, 5
        %v5124 = vsel %vm1575, %v5122, %v5123
        %v5125 = vrot.slane %v5123, 4
        %v5126 = vrot.slane %v3837, 5
        %v5127 = vsel %vm1575, %v5125, %v5126
        %v5128 = vrot.slane %v3838, 5
        %v5129 = vrot.slane %v5128, 4
        %v5130 = vrot.slane %v3839, 5
        %v5131 = vsel %vm1575, %v5129, %v5130
        %v5132 = vrot.slane %v5130, 4
        %v5133 = vrot.slane %v3840, 5
        %v5134 = vsel %vm1575, %v5132, %v5133
        %v5135 = vrot.slane %v3841, 5
        %v5136 = vrot.slane %v5135, 4
        %v5137 = vrot.slane %v3842, 5
        %v5138 = vsel %vm1575, %v5136, %v5137
        %v5139 = vrot.slane %v5137, 4
        %v5140 = vrot.slane %v3843, 5
        %v5141 = vsel %vm1575, %v5139, %v5140
        %v5142 = vld [vmem:[#allocation2] sm:$0xff]
        %v5143 = vld [vmem:[#allocation2 + $0x8] sm:$0xff]
        %v5144 = vld [vmem:[#allocation2 + $0x10] sm:$0xff]
        %v5145 = vld [vmem:[#allocation2 + $0x18] sm:$0xff]
        %v5146 = vld [vmem:[#allocation2 + $0x20] sm:$0xff]
        %v5147 = vld [vmem:[#allocation2 + $0x28] sm:$0xff]
        %v5148 = vld [vmem:[#allocation2 + $0x30] sm:$0xff]
        %v5149 = vld [vmem:[#allocation2 + $0x38] sm:$0xff]
        %v5150 = vld [vmem:[#allocation2 + $0x40] sm:$0xff]
        %v5151 = vld [vmem:[#allocation2 + $0x48] sm:$0xff]
        %v5152 = vld [vmem:[#allocation2 + $0x50] sm:$0xff]
        %v5153 = vld [vmem:[#allocation2 + $0x58] sm:$0xff]
        %v5154 = vld [vmem:[#allocation2 + $0x60] sm:$0xff]
        %v5155 = vld [vmem:[#allocation2 + $0x68] sm:$0xff]
        %v5156 = vld [vmem:[#allocation2 + $0x70] sm:$0xff]
        %v5157 = vld [vmem:[#allocation2 + $0x78] sm:$0xff]
        %v5158 = vld [vmem:[#allocation2 + $0x80] sm:$0xff]
        %v5159 = vld [vmem:[#allocation2 + $0x88] sm:$0xff]
        %v5160 = vld [vmem:[#allocation2 + $0x90] sm:$0xff]
        %v5161 = vld [vmem:[#allocation2 + $0x98] sm:$0xff]
        %v5162 = vld [vmem:[#allocation2 + $0xa0] sm:$0xff]
        %v5163 = vld [vmem:[#allocation2 + $0xa8] sm:$0xff]
        %v5164 = vld [vmem:[#allocation2 + $0xb0] sm:$0xff]
        %v5165 = vld [vmem:[#allocation2 + $0xb8] sm:$0xff]
        %v5166 = vld [vmem:[#allocation2 + $0xc0] sm:$0xff]
        %v5167 = vld [vmem:[#allocation2 + $0xc8] sm:$0xff]
        %v5168 = vld [vmem:[#allocation2 + $0xd0] sm:$0xff]
        %v5169 = vld [vmem:[#allocation2 + $0xd8] sm:$0xff]
        %v5170 = vld [vmem:[#allocation2 + $0xe0] sm:$0xff]
        %v5171 = vld [vmem:[#allocation2 + $0xe8] sm:$0xff]
        %v5172 = vld [vmem:[#allocation2 + $0xf0] sm:$0xff]
        %v5173 = vld [vmem:[#allocation2 + $0xf8] sm:$0xff]
        %s5174 = scalar_lea.vmem %s2, 160
        %v5175 = vld [vmem:[%s5174] sm:$0xf]
        %v5176 = vld [vmem:[%s5174 + $0x4] sm:$0xf]
        %v5177 = vld [vmem:[%s5174 + $0x8] sm:$0xf]
        %v5178 = vld [vmem:[%s5174 + $0xc] sm:$0xf]
        %v5179 = vld [vmem:[%s5174 + $0x10] sm:$0x3]
        %v5180 = vunpack.c.l.b16 %v5033
        %v5181 = vunpack.c.l.b16 %v5036
        %v5182 = vunpack.c.l.b16 %v5040
        %v5183 = vunpack.c.l.b16 %v5043
        %v5184 = vunpack.c.l.b16 %v5047
        %v5185 = vunpack.c.l.b16 %v5050
        %v5186 = vunpack.c.l.b16 %v5054
        %v5187 = vunpack.c.l.b16 %v5057
        %v5188 = vunpack.c.l.b16 %v5061
        %v5189 = vunpack.c.l.b16 %v5064
        %v5190 = vunpack.c.l.b16 %v5068
        %v5191 = vunpack.c.l.b16 %v5071
        %v5192 = vunpack.c.l.b16 %v5075
        %v5193 = vunpack.c.l.b16 %v5078
        %v5194 = vunpack.c.l.b16 %v5082
        %v5195 = vunpack.c.l.b16 %v5085
        %v5196 = vunpack.c.l.b16 %v5089
        %v5197 = vunpack.c.l.b16 %v5092
        %v5198 = vunpack.c.l.b16 %v5096
        %v5199 = vunpack.c.l.b16 %v5099
        %v5200 = vunpack.c.l.b16 %v5103
        %v5201 = vunpack.c.l.b16 %v5106
        %v5202 = vunpack.c.l.b16 %v5110
        %v5203 = vunpack.c.l.b16 %v5113
        %v5204 = vunpack.c.l.b16 %v5117
        %v5205 = vunpack.c.l.b16 %v5120
        %v5206 = vunpack.c.l.b16 %v5124
        %v5207 = vunpack.c.l.b16 %v5127
        %v5208 = vunpack.c.l.b16 %v5131
        %v5209 = vunpack.c.l.b16 %v5134
        %v5210 = vunpack.c.l.b16 %v5138
        %v5211 = vunpack.c.l.b16 %v5141
        %v5212 = vpack.c.b16 %v5181, %v5180
        %v5213 = vpack.c.b16 %v5183, %v5182
        %v5214 = vpack.c.b16 %v5185, %v5184
        %v5215 = vpack.c.b16 %v5187, %v5186
        %v5216 = vpack.c.b16 %v5189, %v5188
        %v5217 = vpack.c.b16 %v5191, %v5190
        %v5218 = vpack.c.b16 %v5193, %v5192
        %v5219 = vpack.c.b16 %v5195, %v5194
        %v5220 = vpack.c.b16 %v5197, %v5196
        %v5221 = vpack.c.b16 %v5199, %v5198
        %v5222 = vpack.c.b16 %v5201, %v5200
        %v5223 = vpack.c.b16 %v5203, %v5202
        %v5224 = vpack.c.b16 %v5205, %v5204
        %v5225 = vpack.c.b16 %v5207, %v5206
        %v5226 = vpack.c.b16 %v5209, %v5208
        %v5227 = vpack.c.b16 %v5211, %v5210
        %v5233 = vunpack.c.l.b16 %v5175
        %v5234 = vunpack.c.l.b16 %v5176
        %v5235 = vunpack.c.l.b16 %v5177
        %v5236 = vunpack.c.l.b16 %v5178
        %v5237 = vunpack.c.l.b16 %v5179
        %v5238 = vpack.c.b16 %v5234, %v5233
        %v5239 = vpack.c.b16 %v5236, %v5235
        %v5240 = vpack.c.b16 %v5237, %v5237
        %v5244 = vsel %vm515, %v5212, 0
        %v5247 = vsel %vm515, %v5213, 0
        %v5250 = vsel %vm515, %v5214, 0
        %v5253 = vsel %vm515, %v5215, 0
        %v5256 = vsel %vm515, %v5216, 0
        %v5259 = vsel %vm515, %v5217, 0
        %v5262 = vsel %vm515, %v5218, 0
        %v5265 = vsel %vm515, %v5219, 0
        %v5268 = vsel %vm515, %v5220, 0
        %v5271 = vsel %vm515, %v5221, 0
        %v5274 = vsel %vm515, %v5222, 0
        %v5277 = vsel %vm515, %v5223, 0
        %v5280 = vsel %vm515, %v5224, 0
        %v5283 = vsel %vm515, %v5225, 0
        %v5286 = vsel %vm515, %v5226, 0
        %v5289 = vsel %vm515, %v5227, 0
        %v5292 = vsel %vm564, %v5240, 0
        %5294 = vmatprep.subr.bf16.mxu0 0
        %5295 = vmatpush1.bf16.msra.mxu0 %v5238
        %5296 = vmatprep.subr.bf16.mxu0 0
        %5297 = vmatpush1.bf16.msra.mxu0 %v5239
        %5298 = vmatprep.subr.bf16.mxu0 0
        %5299 = vmatpush1.bf16.msra.mxu0 %v5292
        %5300 = vmatprep.subr.bf16.mxu0 0
        %5301 = vmatpush1.bf16.msra.mxu0 0
        %5302 = vmatprep.subr.bf16.mxu0 0
        %5303 = vmatpush1.bf16.msra.mxu0 0
        %5304 = vmatprep.subr.bf16.mxu0 0
        %5305 = vmatpush1.bf16.msra.mxu0 0
        %5306 = vmatprep.subr.bf16.mxu0 0
        %5307 = vmatpush1.bf16.msra.mxu0 0
        %5308 = vmatprep.subr.bf16.mxu0 0
        %5309 = vmatpush1.bf16.msra.mxu0 0
        %5310 = vmatprep.subr.bf16.mxu0 0
        %5311 = vmatpush1.bf16.msra.mxu0 0
        %5312 = vmatprep.subr.bf16.mxu0 0
        %5313 = vmatpush1.bf16.msra.mxu0 0
        %5314 = vmatprep.subr.bf16.mxu0 0
        %5315 = vmatpush1.bf16.msra.mxu0 0
        %5316 = vmatprep.subr.bf16.mxu0 0
        %5317 = vmatpush1.bf16.msra.mxu0 0
        %5318 = vmatprep.subr.bf16.mxu0 0
        %5319 = vmatpush1.bf16.msra.mxu0 0
        %5320 = vmatprep.subr.bf16.mxu0 0
        %5321 = vmatpush1.bf16.msra.mxu0 0
        %5322 = vmatprep.subr.bf16.mxu0 0
        %5323 = vmatpush1.bf16.msra.mxu0 0
        %5324 = vmatprep.subr.bf16.mxu0 0
        %5325 = vmatpush1.bf16.msra.mxu0 0
        %5326 = vmatprep.mubr.bf16.mxu0 0
        %5327 = vmatmul.mubr.bf16.gmra.mrb[0].mxu0 %v5244
        %v5328 = vpop.f32.mrb[0].mxu0
        %v5329 = vadd.f32 0.0, %v5328
        %v5330 = vpop.f32.mrb[0].mxu0
        %v5331 = vpop.f32.mrb[0].mxu0
        %v5332 = vadd.f32 0.0, %v5331
        %v5333 = vpop.f32.mrb[0].mxu0
        %5334 = vmatprep.mubr.bf16.mxu0 0
        %5335 = vmatmul.mubr.bf16.gmra.mrb[0].mxu0 %v5247
        %v5336 = vpop.f32.mrb[0].mxu0
        %v5337 = vadd.f32 0.0, %v5336
        %v5338 = vpop.f32.mrb[0].mxu0
        %v5339 = vpop.f32.mrb[0].mxu0
        %v5340 = vadd.f32 0.0, %v5339
        %v5341 = vpop.f32.mrb[0].mxu0
        %5342 = vmatprep.mubr.bf16.mxu0 0
        %5343 = vmatmul.mubr.bf16.gmra.mrb[0].mxu0 %v5250
        %v5344 = vpop.f32.mrb[0].mxu0
        %v5345 = vadd.f32 0.0, %v5344
        %v5346 = vpop.f32.mrb[0].mxu0
        %v5347 = vpop.f32.mrb[0].mxu0
        %v5348 = vadd.f32 0.0, %v5347
        %v5349 = vpop.f32.mrb[0].mxu0
        %5350 = vmatprep.mubr.bf16.mxu0 0
        %5351 = vmatmul.mubr.bf16.gmra.mrb[0].mxu0 %v5253
        %v5352 = vpop.f32.mrb[0].mxu0
        %v5353 = vadd.f32 0.0, %v5352
        %v5354 = vpop.f32.mrb[0].mxu0
        %v5355 = vpop.f32.mrb[0].mxu0
        %v5356 = vadd.f32 0.0, %v5355
        %v5357 = vpop.f32.mrb[0].mxu0
        %5358 = vmatprep.mubr.bf16.mxu0 0
        %5359 = vmatmul.mubr.bf16.gmra.mrb[0].mxu0 %v5256
        %v5360 = vpop.f32.mrb[0].mxu0
        %v5361 = vadd.f32 0.0, %v5360
        %v5362 = vpop.f32.mrb[0].mxu0
        %v5363 = vpop.f32.mrb[0].mxu0
        %v5364 = vadd.f32 0.0, %v5363
        %v5365 = vpop.f32.mrb[0].mxu0
        %5366 = vmatprep.mubr.bf16.mxu0 0
        %5367 = vmatmul.mubr.bf16.gmra.mrb[0].mxu0 %v5259
        %v5368 = vpop.f32.mrb[0].mxu0
        %v5369 = vadd.f32 0.0, %v5368
        %v5370 = vpop.f32.mrb[0].mxu0
        %v5371 = vpop.f32.mrb[0].mxu0
        %v5372 = vadd.f32 0.0, %v5371
        %v5373 = vpop.f32.mrb[0].mxu0
        %5374 = vmatprep.mubr.bf16.mxu0 0
        %5375 = vmatmul.mubr.bf16.gmra.mrb[0].mxu0 %v5262
        %v5376 = vpop.f32.mrb[0].mxu0
        %v5377 = vadd.f32 0.0, %v5376
        %v5378 = vpop.f32.mrb[0].mxu0
        %v5379 = vpop.f32.mrb[0].mxu0
        %v5380 = vadd.f32 0.0, %v5379
        %v5381 = vpop.f32.mrb[0].mxu0
        %5382 = vmatprep.mubr.bf16.mxu0 0
        %5383 = vmatmul.mubr.bf16.gmra.mrb[0].mxu0 %v5265
        %v5384 = vpop.f32.mrb[0].mxu0
        %v5385 = vadd.f32 0.0, %v5384
        %v5386 = vpop.f32.mrb[0].mxu0
        %v5387 = vpop.f32.mrb[0].mxu0
        %v5388 = vadd.f32 0.0, %v5387
        %v5389 = vpop.f32.mrb[0].mxu0
        %5390 = vmatprep.mubr.bf16.mxu0 0
        %5391 = vmatmul.mubr.bf16.gmra.mrb[0].mxu0 %v5268
        %v5392 = vpop.f32.mrb[0].mxu0
        %v5393 = vadd.f32 0.0, %v5392
        %v5394 = vpop.f32.mrb[0].mxu0
        %v5395 = vpop.f32.mrb[0].mxu0
        %v5396 = vadd.f32 0.0, %v5395
        %v5397 = vpop.f32.mrb[0].mxu0
        %5398 = vmatprep.mubr.bf16.mxu0 0
        %5399 = vmatmul.mubr.bf16.gmra.mrb[0].mxu0 %v5271
        %v5400 = vpop.f32.mrb[0].mxu0
        %v5401 = vadd.f32 0.0, %v5400
        %v5402 = vpop.f32.mrb[0].mxu0
        %v5403 = vpop.f32.mrb[0].mxu0
        %v5404 = vadd.f32 0.0, %v5403
        %v5405 = vpop.f32.mrb[0].mxu0
        %5406 = vmatprep.mubr.bf16.mxu0 0
        %5407 = vmatmul.mubr.bf16.gmra.mrb[0].mxu0 %v5274
        %v5408 = vpop.f32.mrb[0].mxu0
        %v5409 = vadd.f32 0.0, %v5408
        %v5410 = vpop.f32.mrb[0].mxu0
        %v5411 = vpop.f32.mrb[0].mxu0
        %v5412 = vadd.f32 0.0, %v5411
        %v5413 = vpop.f32.mrb[0].mxu0
        %5414 = vmatprep.mubr.bf16.mxu0 0
        %5415 = vmatmul.mubr.bf16.gmra.mrb[0].mxu0 %v5277
        %v5416 = vpop.f32.mrb[0].mxu0
        %v5417 = vadd.f32 0.0, %v5416
        %v5418 = vpop.f32.mrb[0].mxu0
        %v5419 = vpop.f32.mrb[0].mxu0
        %v5420 = vadd.f32 0.0, %v5419
        %v5421 = vpop.f32.mrb[0].mxu0
        %5422 = vmatprep.mubr.bf16.mxu0 0
        %5423 = vmatmul.mubr.bf16.gmra.mrb[0].mxu0 %v5280
        %v5424 = vpop.f32.mrb[0].mxu0
        %v5425 = vadd.f32 0.0, %v5424
        %v5426 = vpop.f32.mrb[0].mxu0
        %v5427 = vpop.f32.mrb[0].mxu0
        %v5428 = vadd.f32 0.0, %v5427
        %v5429 = vpop.f32.mrb[0].mxu0
        %5430 = vmatprep.mubr.bf16.mxu0 0
        %5431 = vmatmul.mubr.bf16.gmra.mrb[0].mxu0 %v5283
        %v5432 = vpop.f32.mrb[0].mxu0
        %v5433 = vadd.f32 0.0, %v5432
        %v5434 = vpop.f32.mrb[0].mxu0
        %v5435 = vpop.f32.mrb[0].mxu0
        %v5436 = vadd.f32 0.0, %v5435
        %v5437 = vpop.f32.mrb[0].mxu0
        %5438 = vmatprep.mubr.bf16.mxu0 0
        %5439 = vmatmul.mubr.bf16.gmra.mrb[0].mxu0 %v5286
        %v5440 = vpop.f32.mrb[0].mxu0
        %v5441 = vadd.f32 0.0, %v5440
        %v5442 = vpop.f32.mrb[0].mxu0
        %v5443 = vpop.f32.mrb[0].mxu0
        %v5444 = vadd.f32 0.0, %v5443
        %v5445 = vpop.f32.mrb[0].mxu0
        %5446 = vmatprep.mubr.bf16.mxu0 0
        %5447 = vmatmul.mubr.bf16.gmra.mrb[0].mxu0 %v5289
        %v5448 = vpop.f32.mrb[0].mxu0
        %v5449 = vadd.f32 0.0, %v5448
        %v5450 = vpop.f32.mrb[0].mxu0
        %v5451 = vpop.f32.mrb[0].mxu0
        %v5452 = vadd.f32 0.0, %v5451
        %v5453 = vpop.f32.mrb[0].mxu0
        %5454 = vdwg.mxu0
        %v5455 = vadd.f32 %v5142, %v5329
        %v5456 = vadd.f32 %v5143, %v5332
        %v5457 = vadd.f32 %v5144, %v5337
        %v5458 = vadd.f32 %v5145, %v5340
        %v5459 = vadd.f32 %v5146, %v5345
        %v5460 = vadd.f32 %v5147, %v5348
        %v5461 = vadd.f32 %v5148, %v5353
        %v5462 = vadd.f32 %v5149, %v5356
        %v5463 = vadd.f32 %v5150, %v5361
        %v5464 = vadd.f32 %v5151, %v5364
        %v5465 = vadd.f32 %v5152, %v5369
        %v5466 = vadd.f32 %v5153, %v5372
        %v5467 = vadd.f32 %v5154, %v5377
        %v5468 = vadd.f32 %v5155, %v5380
        %v5469 = vadd.f32 %v5156, %v5385
        %v5470 = vadd.f32 %v5157, %v5388
        %v5471 = vadd.f32 %v5158, %v5393
        %v5472 = vadd.f32 %v5159, %v5396
        %v5473 = vadd.f32 %v5160, %v5401
        %v5474 = vadd.f32 %v5161, %v5404
        %v5475 = vadd.f32 %v5162, %v5409
        %v5476 = vadd.f32 %v5163, %v5412
        %v5477 = vadd.f32 %v5164, %v5417
        %v5478 = vadd.f32 %v5165, %v5420
        %v5479 = vadd.f32 %v5166, %v5425
        %v5480 = vadd.f32 %v5167, %v5428
        %v5481 = vadd.f32 %v5168, %v5433
        %v5482 = vadd.f32 %v5169, %v5436
        %v5483 = vadd.f32 %v5170, %v5441
        %v5484 = vadd.f32 %v5171, %v5444
        %v5485 = vadd.f32 %v5172, %v5449
        %v5486 = vadd.f32 %v5173, %v5452
        %5487 = vst [vmem:[#allocation2] sm:$0xff] %v5455
        %5488 = vst [vmem:[#allocation2 + $0x8] sm:$0xff] %v5456
        %5489 = vst [vmem:[#allocation2 + $0x10] sm:$0xff] %v5457
        %5490 = vst [vmem:[#allocation2 + $0x18] sm:$0xff] %v5458
        %5491 = vst [vmem:[#allocation2 + $0x20] sm:$0xff] %v5459
        %5492 = vst [vmem:[#allocation2 + $0x28] sm:$0xff] %v5460
        %5493 = vst [vmem:[#allocation2 + $0x30] sm:$0xff] %v5461
        %5494 = vst [vmem:[#allocation2 + $0x38] sm:$0xff] %v5462
        %5495 = vst [vmem:[#allocation2 + $0x40] sm:$0xff] %v5463
        %5496 = vst [vmem:[#allocation2 + $0x48] sm:$0xff] %v5464
        %5497 = vst [vmem:[#allocation2 + $0x50] sm:$0xff] %v5465
        %5498 = vst [vmem:[#allocation2 + $0x58] sm:$0xff] %v5466
        %5499 = vst [vmem:[#allocation2 + $0x60] sm:$0xff] %v5467
        %5500 = vst [vmem:[#allocation2 + $0x68] sm:$0xff] %v5468
        %5501 = vst [vmem:[#allocation2 + $0x70] sm:$0xff] %v5469
        %5502 = vst [vmem:[#allocation2 + $0x78] sm:$0xff] %v5470
        %5503 = vst [vmem:[#allocation2 + $0x80] sm:$0xff] %v5471
        %5504 = vst [vmem:[#allocation2 + $0x88] sm:$0xff] %v5472
        %5505 = vst [vmem:[#allocation2 + $0x90] sm:$0xff] %v5473
        %5506 = vst [vmem:[#allocation2 + $0x98] sm:$0xff] %v5474
        %5507 = vst [vmem:[#allocation2 + $0xa0] sm:$0xff] %v5475
        %5508 = vst [vmem:[#allocation2 + $0xa8] sm:$0xff] %v5476
        %5509 = vst [vmem:[#allocation2 + $0xb0] sm:$0xff] %v5477
        %5510 = vst [vmem:[#allocation2 + $0xb8] sm:$0xff] %v5478
        %5511 = vst [vmem:[#allocation2 + $0xc0] sm:$0xff] %v5479
        %5512 = vst [vmem:[#allocation2 + $0xc8] sm:$0xff] %v5480
        %5513 = vst [vmem:[#allocation2 + $0xd0] sm:$0xff] %v5481
        %5514 = vst [vmem:[#allocation2 + $0xd8] sm:$0xff] %v5482
        %5515 = vst [vmem:[#allocation2 + $0xe0] sm:$0xff] %v5483
        %5516 = vst [vmem:[#allocation2 + $0xe8] sm:$0xff] %v5484
        %5517 = vst [vmem:[#allocation2 + $0xf0] sm:$0xff] %v5485
        %5518 = vst [vmem:[#allocation2 + $0xf8] sm:$0xff] %v5486
        %v5519 = vld [vmem:[#allocation2] sm:$0xff]
        %v5520 = vld [vmem:[#allocation2 + $0x8] sm:$0xff]
        %v5521 = vld [vmem:[#allocation2 + $0x10] sm:$0xff]
        %v5522 = vld [vmem:[#allocation2 + $0x18] sm:$0xff]
        %v5523 = vld [vmem:[#allocation2 + $0x20] sm:$0xff]
        %v5524 = vld [vmem:[#allocation2 + $0x28] sm:$0xff]
        %v5525 = vld [vmem:[#allocation2 + $0x30] sm:$0xff]
        %v5526 = vld [vmem:[#allocation2 + $0x38] sm:$0xff]
        %v5527 = vld [vmem:[#allocation2 + $0x40] sm:$0xff]
        %v5528 = vld [vmem:[#allocation2 + $0x48] sm:$0xff]
        %v5529 = vld [vmem:[#allocation2 + $0x50] sm:$0xff]
        %v5530 = vld [vmem:[#allocation2 + $0x58] sm:$0xff]
        %v5531 = vld [vmem:[#allocation2 + $0x60] sm:$0xff]
        %v5532 = vld [vmem:[#allocation2 + $0x68] sm:$0xff]
        %v5533 = vld [vmem:[#allocation2 + $0x70] sm:$0xff]
        %v5534 = vld [vmem:[#allocation2 + $0x78] sm:$0xff]
        %v5535 = vld [vmem:[#allocation2 + $0x80] sm:$0xff]
        %v5536 = vld [vmem:[#allocation2 + $0x88] sm:$0xff]
        %v5537 = vld [vmem:[#allocation2 + $0x90] sm:$0xff]
        %v5538 = vld [vmem:[#allocation2 + $0x98] sm:$0xff]
        %v5539 = vld [vmem:[#allocation2 + $0xa0] sm:$0xff]
        %v5540 = vld [vmem:[#allocation2 + $0xa8] sm:$0xff]
        %v5541 = vld [vmem:[#allocation2 + $0xb0] sm:$0xff]
        %v5542 = vld [vmem:[#allocation2 + $0xb8] sm:$0xff]
        %v5543 = vld [vmem:[#allocation2 + $0xc0] sm:$0xff]
        %v5544 = vld [vmem:[#allocation2 + $0xc8] sm:$0xff]
        %v5545 = vld [vmem:[#allocation2 + $0xd0] sm:$0xff]
        %v5546 = vld [vmem:[#allocation2 + $0xd8] sm:$0xff]
        %v5547 = vld [vmem:[#allocation2 + $0xe0] sm:$0xff]
        %v5548 = vld [vmem:[#allocation2 + $0xe8] sm:$0xff]
        %v5549 = vld [vmem:[#allocation2 + $0xf0] sm:$0xff]
        %v5550 = vld [vmem:[#allocation2 + $0xf8] sm:$0xff]
        %v5551 = vxor.u32 %v5519, 2147483648
        %v5552 = vxor.u32 %v5520, 2147483648
        %v5553 = vxor.u32 %v5521, 2147483648
        %v5554 = vxor.u32 %v5522, 2147483648
        %v5555 = vxor.u32 %v5523, 2147483648
        %v5556 = vxor.u32 %v5524, 2147483648
        %v5557 = vxor.u32 %v5525, 2147483648
        %v5558 = vxor.u32 %v5526, 2147483648
        %v5559 = vxor.u32 %v5527, 2147483648
        %v5560 = vxor.u32 %v5528, 2147483648
        %v5561 = vxor.u32 %v5529, 2147483648
        %v5562 = vxor.u32 %v5530, 2147483648
        %v5563 = vxor.u32 %v5531, 2147483648
        %v5564 = vxor.u32 %v5532, 2147483648
        %v5565 = vxor.u32 %v5533, 2147483648
        %v5566 = vxor.u32 %v5534, 2147483648
        %v5567 = vxor.u32 %v5535, 2147483648
        %v5568 = vxor.u32 %v5536, 2147483648
        %v5569 = vxor.u32 %v5537, 2147483648
        %v5570 = vxor.u32 %v5538, 2147483648
        %v5571 = vxor.u32 %v5539, 2147483648
        %v5572 = vxor.u32 %v5540, 2147483648
        %v5573 = vxor.u32 %v5541, 2147483648
        %v5574 = vxor.u32 %v5542, 2147483648
        %v5575 = vxor.u32 %v5543, 2147483648
        %v5576 = vxor.u32 %v5544, 2147483648
        %v5577 = vxor.u32 %v5545, 2147483648
        %v5578 = vxor.u32 %v5546, 2147483648
        %v5579 = vxor.u32 %v5547, 2147483648
        %v5580 = vxor.u32 %v5548, 2147483648
        %v5581 = vxor.u32 %v5549, 2147483648
        %v5582 = vxor.u32 %v5550, 2147483648
        %v5583 = vmul.f32 %v5551, 1.442695
        %v5584 = vpow.pop %v5583
        %v5585 = vmul.f32 %v5552, 1.442695
        %v5586 = vpow.pop %v5585
        %v5587 = vmul.f32 %v5553, 1.442695
        %v5588 = vpow.pop %v5587
        %v5589 = vmul.f32 %v5554, 1.442695
        %v5590 = vpow.pop %v5589
        %v5591 = vmul.f32 %v5555, 1.442695
        %v5592 = vpow.pop %v5591
        %v5593 = vmul.f32 %v5556, 1.442695
        %v5594 = vpow.pop %v5593
        %v5595 = vmul.f32 %v5557, 1.442695
        %v5596 = vpow.pop %v5595
        %v5597 = vmul.f32 %v5558, 1.442695
        %v5598 = vpow.pop %v5597
        %v5599 = vmul.f32 %v5559, 1.442695
        %v5600 = vpow.pop %v5599
        %v5601 = vmul.f32 %v5560, 1.442695
        %v5602 = vpow.pop %v5601
        %v5603 = vmul.f32 %v5561, 1.442695
        %v5604 = vpow.pop %v5603
        %v5605 = vmul.f32 %v5562, 1.442695
        %v5606 = vpow.pop %v5605
        %v5607 = vmul.f32 %v5563, 1.442695
        %v5608 = vpow.pop %v5607
        %v5609 = vmul.f32 %v5564, 1.442695
        %v5610 = vpow.pop %v5609
        %v5611 = vmul.f32 %v5565, 1.442695
        %v5612 = vpow.pop %v5611
        %v5613 = vmul.f32 %v5566, 1.442695
        %v5614 = vpow.pop %v5613
        %v5615 = vmul.f32 %v5567, 1.442695
        %v5616 = vpow.pop %v5615
        %v5617 = vmul.f32 %v5568, 1.442695
        %v5618 = vpow.pop %v5617
        %v5619 = vmul.f32 %v5569, 1.442695
        %v5620 = vpow.pop %v5619
        %v5621 = vmul.f32 %v5570, 1.442695
        %v5622 = vpow.pop %v5621
        %v5623 = vmul.f32 %v5571, 1.442695
        %v5624 = vpow.pop %v5623
        %v5625 = vmul.f32 %v5572, 1.442695
        %v5626 = vpow.pop %v5625
        %v5627 = vmul.f32 %v5573, 1.442695
        %v5628 = vpow.pop %v5627
        %v5629 = vmul.f32 %v5574, 1.442695
        %v5630 = vpow.pop %v5629
        %v5631 = vmul.f32 %v5575, 1.442695
        %v5632 = vpow.pop %v5631
        %v5633 = vmul.f32 %v5576, 1.442695
        %v5634 = vpow.pop %v5633
        %v5635 = vmul.f32 %v5577, 1.442695
        %v5636 = vpow.pop %v5635
        %v5637 = vmul.f32 %v5578, 1.442695
        %v5638 = vpow.pop %v5637
        %v5639 = vmul.f32 %v5579, 1.442695
        %v5640 = vpow.pop %v5639
        %v5641 = vmul.f32 %v5580, 1.442695
        %v5642 = vpow.pop %v5641
        %v5643 = vmul.f32 %v5581, 1.442695
        %v5644 = vpow.pop %v5643
        %v5645 = vmul.f32 %v5582, 1.442695
        %v5646 = vpow.pop %v5645
        %v5647 = vadd.f32 %v5584, 1.0
        %v5648 = vadd.f32 %v5586, 1.0
        %v5649 = vadd.f32 %v5588, 1.0
        %v5650 = vadd.f32 %v5590, 1.0
        %v5651 = vadd.f32 %v5592, 1.0
        %v5652 = vadd.f32 %v5594, 1.0
        %v5653 = vadd.f32 %v5596, 1.0
        %v5654 = vadd.f32 %v5598, 1.0
        %v5655 = vadd.f32 %v5600, 1.0
        %v5656 = vadd.f32 %v5602, 1.0
        %v5657 = vadd.f32 %v5604, 1.0
        %v5658 = vadd.f32 %v5606, 1.0
        %v5659 = vadd.f32 %v5608, 1.0
        %v5660 = vadd.f32 %v5610, 1.0
        %v5661 = vadd.f32 %v5612, 1.0
        %v5662 = vadd.f32 %v5614, 1.0
        %v5663 = vadd.f32 %v5616, 1.0
        %v5664 = vadd.f32 %v5618, 1.0
        %v5665 = vadd.f32 %v5620, 1.0
        %v5666 = vadd.f32 %v5622, 1.0
        %v5667 = vadd.f32 %v5624, 1.0
        %v5668 = vadd.f32 %v5626, 1.0
        %v5669 = vadd.f32 %v5628, 1.0
        %v5670 = vadd.f32 %v5630, 1.0
        %v5671 = vadd.f32 %v5632, 1.0
        %v5672 = vadd.f32 %v5634, 1.0
        %v5673 = vadd.f32 %v5636, 1.0
        %v5674 = vadd.f32 %v5638, 1.0
        %v5675 = vadd.f32 %v5640, 1.0
        %v5676 = vadd.f32 %v5642, 1.0
        %v5677 = vadd.f32 %v5644, 1.0
        %v5678 = vadd.f32 %v5646, 1.0
        %v5679 = vrcp.pop %v5647
        %v5680 = vmul.f32 1.0, %v5679
        %v5681 = vrcp.pop %v5648
        %v5682 = vmul.f32 1.0, %v5681
        %v5683 = vrcp.pop %v5649
        %v5684 = vmul.f32 1.0, %v5683
        %v5685 = vrcp.pop %v5650
        %v5686 = vmul.f32 1.0, %v5685
        %v5687 = vrcp.pop %v5651
        %v5688 = vmul.f32 1.0, %v5687
        %v5689 = vrcp.pop %v5652
        %v5690 = vmul.f32 1.0, %v5689
        %v5691 = vrcp.pop %v5653
        %v5692 = vmul.f32 1.0, %v5691
        %v5693 = vrcp.pop %v5654
        %v5694 = vmul.f32 1.0, %v5693
        %v5695 = vrcp.pop %v5655
        %v5696 = vmul.f32 1.0, %v5695
        %v5697 = vrcp.pop %v5656
        %v5698 = vmul.f32 1.0, %v5697
        %v5699 = vrcp.pop %v5657
        %v5700 = vmul.f32 1.0, %v5699
        %v5701 = vrcp.pop %v5658
        %v5702 = vmul.f32 1.0, %v5701
        %v5703 = vrcp.pop %v5659
        %v5704 = vmul.f32 1.0, %v5703
        %v5705 = vrcp.pop %v5660
        %v5706 = vmul.f32 1.0, %v5705
        %v5707 = vrcp.pop %v5661
        %v5708 = vmul.f32 1.0, %v5707
        %v5709 = vrcp.pop %v5662
        %v5710 = vmul.f32 1.0, %v5709
        %v5711 = vrcp.pop %v5663
        %v5712 = vmul.f32 1.0, %v5711
        %v5713 = vrcp.pop %v5664
        %v5714 = vmul.f32 1.0, %v5713
        %v5715 = vrcp.pop %v5665
        %v5716 = vmul.f32 1.0, %v5715
        %v5717 = vrcp.pop %v5666
        %v5718 = vmul.f32 1.0, %v5717
        %v5719 = vrcp.pop %v5667
        %v5720 = vmul.f32 1.0, %v5719
        %v5721 = vrcp.pop %v5668
        %v5722 = vmul.f32 1.0, %v5721
        %v5723 = vrcp.pop %v5669
        %v5724 = vmul.f32 1.0, %v5723
        %v5725 = vrcp.pop %v5670
        %v5726 = vmul.f32 1.0, %v5725
        %v5727 = vrcp.pop %v5671
        %v5728 = vmul.f32 1.0, %v5727
        %v5729 = vrcp.pop %v5672
        %v5730 = vmul.f32 1.0, %v5729
        %v5731 = vrcp.pop %v5673
        %v5732 = vmul.f32 1.0, %v5731
        %v5733 = vrcp.pop %v5674
        %v5734 = vmul.f32 1.0, %v5733
        %v5735 = vrcp.pop %v5675
        %v5736 = vmul.f32 1.0, %v5735
        %v5737 = vrcp.pop %v5676
        %v5738 = vmul.f32 1.0, %v5737
        %v5739 = vrcp.pop %v5677
        %v5740 = vmul.f32 1.0, %v5739
        %v5741 = vrcp.pop %v5678
        %v5742 = vmul.f32 1.0, %v5741
        %v5743 = vtanh.pop %v5519
        %v5744 = vtanh.pop %v5520
        %v5745 = vtanh.pop %v5521
        %v5746 = vtanh.pop %v5522
        %v5747 = vtanh.pop %v5523
        %v5748 = vtanh.pop %v5524
        %v5749 = vtanh.pop %v5525
        %v5750 = vtanh.pop %v5526
        %v5751 = vtanh.pop %v5527
        %v5752 = vtanh.pop %v5528
        %v5753 = vtanh.pop %v5529
        %v5754 = vtanh.pop %v5530
        %v5755 = vtanh.pop %v5531
        %v5756 = vtanh.pop %v5532
        %v5757 = vtanh.pop %v5533
        %v5758 = vtanh.pop %v5534
        %v5759 = vtanh.pop %v5535
        %v5760 = vtanh.pop %v5536
        %v5761 = vtanh.pop %v5537
        %v5762 = vtanh.pop %v5538
        %v5763 = vtanh.pop %v5539
        %v5764 = vtanh.pop %v5540
        %v5765 = vtanh.pop %v5541
        %v5766 = vtanh.pop %v5542
        %v5767 = vtanh.pop %v5543
        %v5768 = vtanh.pop %v5544
        %v5769 = vtanh.pop %v5545
        %v5770 = vtanh.pop %v5546
        %v5771 = vtanh.pop %v5547
        %v5772 = vtanh.pop %v5548
        %v5773 = vtanh.pop %v5549
        %v5774 = vtanh.pop %v5550
        %v5775 = vld [vmem:[%s287] sm:$0xff]
        %v5776 = vld [vmem:[%s287 + $0x8] sm:$0xff]
        %v5777 = vld [vmem:[%s287 + $0x10] sm:$0xff]
        %v5778 = vld [vmem:[%s287 + $0x18] sm:$0xff]
        %v5779 = vld [vmem:[%s287 + $0x20] sm:$0xff]
        %v5780 = vld [vmem:[%s287 + $0x28] sm:$0xff]
        %v5781 = vld [vmem:[%s287 + $0x30] sm:$0xff]
        %v5782 = vld [vmem:[%s287 + $0x38] sm:$0xff]
        %v5783 = vld [vmem:[%s287 + $0x40] sm:$0xff]
        %v5784 = vld [vmem:[%s287 + $0x48] sm:$0xff]
        %v5785 = vld [vmem:[%s287 + $0x50] sm:$0xff]
        %v5786 = vld [vmem:[%s287 + $0x58] sm:$0xff]
        %v5787 = vld [vmem:[%s287 + $0x60] sm:$0xff]
        %v5788 = vld [vmem:[%s287 + $0x68] sm:$0xff]
        %v5789 = vld [vmem:[%s287 + $0x70] sm:$0xff]
        %v5790 = vld [vmem:[%s287 + $0x78] sm:$0xff]
        %v5791 = vld [vmem:[%s287 + $0x80] sm:$0xff]
        %v5792 = vld [vmem:[%s287 + $0x88] sm:$0xff]
        %v5793 = vld [vmem:[%s287 + $0x90] sm:$0xff]
        %v5794 = vld [vmem:[%s287 + $0x98] sm:$0xff]
        %v5795 = vld [vmem:[%s287 + $0xa0] sm:$0xff]
        %v5796 = vld [vmem:[%s287 + $0xa8] sm:$0xff]
        %v5797 = vld [vmem:[%s287 + $0xb0] sm:$0xff]
        %v5798 = vld [vmem:[%s287 + $0xb8] sm:$0xff]
        %v5799 = vld [vmem:[%s287 + $0xc0] sm:$0xff]
        %v5800 = vld [vmem:[%s287 + $0xc8] sm:$0xff]
        %v5801 = vld [vmem:[%s287 + $0xd0] sm:$0xff]
        %v5802 = vld [vmem:[%s287 + $0xd8] sm:$0xff]
        %v5803 = vld [vmem:[%s287 + $0xe0] sm:$0xff]
        %v5804 = vld [vmem:[%s287 + $0xe8] sm:$0xff]
        %v5805 = vld [vmem:[%s287 + $0xf0] sm:$0xff]
        %v5806 = vld [vmem:[%s287 + $0xf8] sm:$0xff]
        %5839 = vrot.lane.b32.xlu0 %v5775, 32
        %v5840 = vpop.permute.xlu0 %5839
        %5841 = vrot.lane.b32.xlu0 %v5776, 32
        %v5842 = vpop.permute.xlu0 %5841
        %5843 = vrot.lane.b32.xlu0 %v5777, 32
        %v5844 = vpop.permute.xlu0 %5843
        %5845 = vrot.lane.b32.xlu0 %v5778, 32
        %v5846 = vpop.permute.xlu0 %5845
        %5847 = vrot.lane.b32.xlu0 %v5779, 32
        %v5848 = vpop.permute.xlu0 %5847
        %5849 = vrot.lane.b32.xlu0 %v5780, 32
        %v5850 = vpop.permute.xlu0 %5849
        %5851 = vrot.lane.b32.xlu0 %v5781, 32
        %v5852 = vpop.permute.xlu0 %5851
        %5853 = vrot.lane.b32.xlu0 %v5782, 32
        %v5854 = vpop.permute.xlu0 %5853
        %5855 = vrot.lane.b32.xlu0 %v5783, 32
        %v5856 = vpop.permute.xlu0 %5855
        %5857 = vrot.lane.b32.xlu0 %v5784, 32
        %v5858 = vpop.permute.xlu0 %5857
        %5859 = vrot.lane.b32.xlu0 %v5785, 32
        %v5860 = vpop.permute.xlu0 %5859
        %5861 = vrot.lane.b32.xlu0 %v5786, 32
        %v5862 = vpop.permute.xlu0 %5861
        %5863 = vrot.lane.b32.xlu0 %v5787, 32
        %v5864 = vpop.permute.xlu0 %5863
        %5865 = vrot.lane.b32.xlu0 %v5788, 32
        %v5866 = vpop.permute.xlu0 %5865
        %5867 = vrot.lane.b32.xlu0 %v5789, 32
        %v5868 = vpop.permute.xlu0 %5867
        %5869 = vrot.lane.b32.xlu0 %v5790, 32
        %v5870 = vpop.permute.xlu0 %5869
        %5871 = vrot.lane.b32.xlu0 %v5791, 32
        %v5872 = vpop.permute.xlu0 %5871
        %5873 = vrot.lane.b32.xlu0 %v5792, 32
        %v5874 = vpop.permute.xlu0 %5873
        %5875 = vrot.lane.b32.xlu0 %v5793, 32
        %v5876 = vpop.permute.xlu0 %5875
        %5877 = vrot.lane.b32.xlu0 %v5794, 32
        %v5878 = vpop.permute.xlu0 %5877
        %5879 = vrot.lane.b32.xlu0 %v5795, 32
        %v5880 = vpop.permute.xlu0 %5879
        %5881 = vrot.lane.b32.xlu0 %v5796, 32
        %v5882 = vpop.permute.xlu0 %5881
        %5883 = vrot.lane.b32.xlu0 %v5797, 32
        %v5884 = vpop.permute.xlu0 %5883
        %5885 = vrot.lane.b32.xlu0 %v5798, 32
        %v5886 = vpop.permute.xlu0 %5885
        %5887 = vrot.lane.b32.xlu0 %v5799, 32
        %v5888 = vpop.permute.xlu0 %5887
        %5889 = vrot.lane.b32.xlu0 %v5800, 32
        %v5890 = vpop.permute.xlu0 %5889
        %5891 = vrot.lane.b32.xlu0 %v5801, 32
        %v5892 = vpop.permute.xlu0 %5891
        %5893 = vrot.lane.b32.xlu0 %v5802, 32
        %v5894 = vpop.permute.xlu0 %5893
        %5895 = vrot.lane.b32.xlu0 %v5803, 32
        %v5896 = vpop.permute.xlu0 %5895
        %5897 = vrot.lane.b32.xlu0 %v5804, 32
        %v5898 = vpop.permute.xlu0 %5897
        %5899 = vrot.lane.b32.xlu0 %v5805, 32
        %v5900 = vpop.permute.xlu0 %5899
        %5901 = vrot.lane.b32.xlu0 %v5806, 32
        %v5902 = vpop.permute.xlu0 %5901
        %v5935 = vmul.f32 %v5680, %v5840
        %v5936 = vmul.f32 %v5682, %v5842
        %v5937 = vmul.f32 %v5684, %v5844
        %v5938 = vmul.f32 %v5686, %v5846
        %v5939 = vmul.f32 %v5688, %v5848
        %v5940 = vmul.f32 %v5690, %v5850
        %v5941 = vmul.f32 %v5692, %v5852
        %v5942 = vmul.f32 %v5694, %v5854
        %v5943 = vmul.f32 %v5696, %v5856
        %v5944 = vmul.f32 %v5698, %v5858
        %v5945 = vmul.f32 %v5700, %v5860
        %v5946 = vmul.f32 %v5702, %v5862
        %v5947 = vmul.f32 %v5704, %v5864
        %v5948 = vmul.f32 %v5706, %v5866
        %v5949 = vmul.f32 %v5708, %v5868
        %v5950 = vmul.f32 %v5710, %v5870
        %v5951 = vmul.f32 %v5712, %v5872
        %v5952 = vmul.f32 %v5714, %v5874
        %v5953 = vmul.f32 %v5716, %v5876
        %v5954 = vmul.f32 %v5718, %v5878
        %v5955 = vmul.f32 %v5720, %v5880
        %v5956 = vmul.f32 %v5722, %v5882
        %v5957 = vmul.f32 %v5724, %v5884
        %v5958 = vmul.f32 %v5726, %v5886
        %v5959 = vmul.f32 %v5728, %v5888
        %v5960 = vmul.f32 %v5730, %v5890
        %v5961 = vmul.f32 %v5732, %v5892
        %v5962 = vmul.f32 %v5734, %v5894
        %v5963 = vmul.f32 %v5736, %v5896
        %v5964 = vmul.f32 %v5738, %v5898
        %v5965 = vmul.f32 %v5740, %v5900
        %v5966 = vmul.f32 %v5742, %v5902
        %5999 = vrot.lane.b32.xlu0 %v5743, 64
        %v6000 = vpop.permute.xlu0 %5999
        %6001 = vrot.lane.b32.xlu0 %v5744, 64
        %v6002 = vpop.permute.xlu0 %6001
        %6003 = vrot.lane.b32.xlu0 %v5745, 64
        %v6004 = vpop.permute.xlu0 %6003
        %6005 = vrot.lane.b32.xlu0 %v5746, 64
        %v6006 = vpop.permute.xlu0 %6005
        %6007 = vrot.lane.b32.xlu0 %v5747, 64
        %v6008 = vpop.permute.xlu0 %6007
        %6009 = vrot.lane.b32.xlu0 %v5748, 64
        %v6010 = vpop.permute.xlu0 %6009
        %6011 = vrot.lane.b32.xlu0 %v5749, 64
        %v6012 = vpop.permute.xlu0 %6011
        %6013 = vrot.lane.b32.xlu0 %v5750, 64
        %v6014 = vpop.permute.xlu0 %6013
        %6015 = vrot.lane.b32.xlu0 %v5751, 64
        %v6016 = vpop.permute.xlu0 %6015
        %6017 = vrot.lane.b32.xlu0 %v5752, 64
        %v6018 = vpop.permute.xlu0 %6017
        %6019 = vrot.lane.b32.xlu0 %v5753, 64
        %v6020 = vpop.permute.xlu0 %6019
        %6021 = vrot.lane.b32.xlu0 %v5754, 64
        %v6022 = vpop.permute.xlu0 %6021
        %6023 = vrot.lane.b32.xlu0 %v5755, 64
        %v6024 = vpop.permute.xlu0 %6023
        %6025 = vrot.lane.b32.xlu0 %v5756, 64
        %v6026 = vpop.permute.xlu0 %6025
        %6027 = vrot.lane.b32.xlu0 %v5757, 64
        %v6028 = vpop.permute.xlu0 %6027
        %6029 = vrot.lane.b32.xlu0 %v5758, 64
        %v6030 = vpop.permute.xlu0 %6029
        %6031 = vrot.lane.b32.xlu0 %v5759, 64
        %v6032 = vpop.permute.xlu0 %6031
        %6033 = vrot.lane.b32.xlu0 %v5760, 64
        %v6034 = vpop.permute.xlu0 %6033
        %6035 = vrot.lane.b32.xlu0 %v5761, 64
        %v6036 = vpop.permute.xlu0 %6035
        %6037 = vrot.lane.b32.xlu0 %v5762, 64
        %v6038 = vpop.permute.xlu0 %6037
        %6039 = vrot.lane.b32.xlu0 %v5763, 64
        %v6040 = vpop.permute.xlu0 %6039
        %6041 = vrot.lane.b32.xlu0 %v5764, 64
        %v6042 = vpop.permute.xlu0 %6041
        %6043 = vrot.lane.b32.xlu0 %v5765, 64
        %v6044 = vpop.permute.xlu0 %6043
        %6045 = vrot.lane.b32.xlu0 %v5766, 64
        %v6046 = vpop.permute.xlu0 %6045
        %6047 = vrot.lane.b32.xlu0 %v5767, 64
        %v6048 = vpop.permute.xlu0 %6047
        %6049 = vrot.lane.b32.xlu0 %v5768, 64
        %v6050 = vpop.permute.xlu0 %6049
        %6051 = vrot.lane.b32.xlu0 %v5769, 64
        %v6052 = vpop.permute.xlu0 %6051
        %6053 = vrot.lane.b32.xlu0 %v5770, 64
        %v6054 = vpop.permute.xlu0 %6053
        %6055 = vrot.lane.b32.xlu0 %v5771, 64
        %v6056 = vpop.permute.xlu0 %6055
        %6057 = vrot.lane.b32.xlu0 %v5772, 64
        %v6058 = vpop.permute.xlu0 %6057
        %6059 = vrot.lane.b32.xlu0 %v5773, 64
        %v6060 = vpop.permute.xlu0 %6059
        %6061 = vrot.lane.b32.xlu0 %v5774, 64
        %v6062 = vpop.permute.xlu0 %6061
        %v6095 = vmul.f32 %v5680, %v6000
        %v6096 = vmul.f32 %v5682, %v6002
        %v6097 = vmul.f32 %v5684, %v6004
        %v6098 = vmul.f32 %v5686, %v6006
        %v6099 = vmul.f32 %v5688, %v6008
        %v6100 = vmul.f32 %v5690, %v6010
        %v6101 = vmul.f32 %v5692, %v6012
        %v6102 = vmul.f32 %v5694, %v6014
        %v6103 = vmul.f32 %v5696, %v6016
        %v6104 = vmul.f32 %v5698, %v6018
        %v6105 = vmul.f32 %v5700, %v6020
        %v6106 = vmul.f32 %v5702, %v6022
        %v6107 = vmul.f32 %v5704, %v6024
        %v6108 = vmul.f32 %v5706, %v6026
        %v6109 = vmul.f32 %v5708, %v6028
        %v6110 = vmul.f32 %v5710, %v6030
        %v6111 = vmul.f32 %v5712, %v6032
        %v6112 = vmul.f32 %v5714, %v6034
        %v6113 = vmul.f32 %v5716, %v6036
        %v6114 = vmul.f32 %v5718, %v6038
        %v6115 = vmul.f32 %v5720, %v6040
        %v6116 = vmul.f32 %v5722, %v6042
        %v6117 = vmul.f32 %v5724, %v6044
        %v6118 = vmul.f32 %v5726, %v6046
        %v6119 = vmul.f32 %v5728, %v6048
        %v6120 = vmul.f32 %v5730, %v6050
        %v6121 = vmul.f32 %v5732, %v6052
        %v6122 = vmul.f32 %v5734, %v6054
        %v6123 = vmul.f32 %v5736, %v6056
        %v6124 = vmul.f32 %v5738, %v6058
        %v6125 = vmul.f32 %v5740, %v6060
        %v6126 = vmul.f32 %v5742, %v6062
        %6159 = vrot.lane.b32.xlu0 %v6095, 32
        %v6160 = vpop.permute.xlu0 %6159
        %6161 = vrot.lane.b32.xlu0 %v6096, 32
        %v6162 = vpop.permute.xlu0 %6161
        %6163 = vrot.lane.b32.xlu0 %v6097, 32
        %v6164 = vpop.permute.xlu0 %6163
        %6165 = vrot.lane.b32.xlu0 %v6098, 32
        %v6166 = vpop.permute.xlu0 %6165
        %6167 = vrot.lane.b32.xlu0 %v6099, 32
        %v6168 = vpop.permute.xlu0 %6167
        %6169 = vrot.lane.b32.xlu0 %v6100, 32
        %v6170 = vpop.permute.xlu0 %6169
        %6171 = vrot.lane.b32.xlu0 %v6101, 32
        %v6172 = vpop.permute.xlu0 %6171
        %6173 = vrot.lane.b32.xlu0 %v6102, 32
        %v6174 = vpop.permute.xlu0 %6173
        %6175 = vrot.lane.b32.xlu0 %v6103, 32
        %v6176 = vpop.permute.xlu0 %6175
        %6177 = vrot.lane.b32.xlu0 %v6104, 32
        %v6178 = vpop.permute.xlu0 %6177
        %6179 = vrot.lane.b32.xlu0 %v6105, 32
        %v6180 = vpop.permute.xlu0 %6179
        %6181 = vrot.lane.b32.xlu0 %v6106, 32
        %v6182 = vpop.permute.xlu0 %6181
        %6183 = vrot.lane.b32.xlu0 %v6107, 32
        %v6184 = vpop.permute.xlu0 %6183
        %6185 = vrot.lane.b32.xlu0 %v6108, 32
        %v6186 = vpop.permute.xlu0 %6185
        %6187 = vrot.lane.b32.xlu0 %v6109, 32
        %v6188 = vpop.permute.xlu0 %6187
        %6189 = vrot.lane.b32.xlu0 %v6110, 32
        %v6190 = vpop.permute.xlu0 %6189
        %6191 = vrot.lane.b32.xlu0 %v6111, 32
        %v6192 = vpop.permute.xlu0 %6191
        %6193 = vrot.lane.b32.xlu0 %v6112, 32
        %v6194 = vpop.permute.xlu0 %6193
        %6195 = vrot.lane.b32.xlu0 %v6113, 32
        %v6196 = vpop.permute.xlu0 %6195
        %6197 = vrot.lane.b32.xlu0 %v6114, 32
        %v6198 = vpop.permute.xlu0 %6197
        %6199 = vrot.lane.b32.xlu0 %v6115, 32
        %v6200 = vpop.permute.xlu0 %6199
        %6201 = vrot.lane.b32.xlu0 %v6116, 32
        %v6202 = vpop.permute.xlu0 %6201
        %6203 = vrot.lane.b32.xlu0 %v6117, 32
        %v6204 = vpop.permute.xlu0 %6203
        %6205 = vrot.lane.b32.xlu0 %v6118, 32
        %v6206 = vpop.permute.xlu0 %6205
        %6207 = vrot.lane.b32.xlu0 %v6119, 32
        %v6208 = vpop.permute.xlu0 %6207
        %6209 = vrot.lane.b32.xlu0 %v6120, 32
        %v6210 = vpop.permute.xlu0 %6209
        %6211 = vrot.lane.b32.xlu0 %v6121, 32
        %v6212 = vpop.permute.xlu0 %6211
        %6213 = vrot.lane.b32.xlu0 %v6122, 32
        %v6214 = vpop.permute.xlu0 %6213
        %6215 = vrot.lane.b32.xlu0 %v6123, 32
        %v6216 = vpop.permute.xlu0 %6215
        %6217 = vrot.lane.b32.xlu0 %v6124, 32
        %v6218 = vpop.permute.xlu0 %6217
        %6219 = vrot.lane.b32.xlu0 %v6125, 32
        %v6220 = vpop.permute.xlu0 %6219
        %6221 = vrot.lane.b32.xlu0 %v6126, 32
        %v6222 = vpop.permute.xlu0 %6221
        %v6255 = vadd.f32 %v5935, %v6160
        %v6256 = vadd.f32 %v5936, %v6162
        %v6257 = vadd.f32 %v5937, %v6164
        %v6258 = vadd.f32 %v5938, %v6166
        %v6259 = vadd.f32 %v5939, %v6168
        %v6260 = vadd.f32 %v5940, %v6170
        %v6261 = vadd.f32 %v5941, %v6172
        %v6262 = vadd.f32 %v5942, %v6174
        %v6263 = vadd.f32 %v5943, %v6176
        %v6264 = vadd.f32 %v5944, %v6178
        %v6265 = vadd.f32 %v5945, %v6180
        %v6266 = vadd.f32 %v5946, %v6182
        %v6267 = vadd.f32 %v5947, %v6184
        %v6268 = vadd.f32 %v5948, %v6186
        %v6269 = vadd.f32 %v5949, %v6188
        %v6270 = vadd.f32 %v5950, %v6190
        %v6271 = vadd.f32 %v5951, %v6192
        %v6272 = vadd.f32 %v5952, %v6194
        %v6273 = vadd.f32 %v5953, %v6196
        %v6274 = vadd.f32 %v5954, %v6198
        %v6275 = vadd.f32 %v5955, %v6200
        %v6276 = vadd.f32 %v5956, %v6202
        %v6277 = vadd.f32 %v5957, %v6204
        %v6278 = vadd.f32 %v5958, %v6206
        %v6279 = vadd.f32 %v5959, %v6208
        %v6280 = vadd.f32 %v5960, %v6210
        %v6281 = vadd.f32 %v5961, %v6212
        %v6282 = vadd.f32 %v5962, %v6214
        %v6283 = vadd.f32 %v5963, %v6216
        %v6284 = vadd.f32 %v5964, %v6218
        %v6285 = vadd.f32 %v5965, %v6220
        %v6286 = vadd.f32 %v5966, %v6222
        %v6287 = vtanh.pop %v6255
        %v6288 = vtanh.pop %v6256
        %v6289 = vtanh.pop %v6257
        %v6290 = vtanh.pop %v6258
        %v6291 = vtanh.pop %v6259
        %v6292 = vtanh.pop %v6260
        %v6293 = vtanh.pop %v6261
        %v6294 = vtanh.pop %v6262
        %v6295 = vtanh.pop %v6263
        %v6296 = vtanh.pop %v6264
        %v6297 = vtanh.pop %v6265
        %v6298 = vtanh.pop %v6266
        %v6299 = vtanh.pop %v6267
        %v6300 = vtanh.pop %v6268
        %v6301 = vtanh.pop %v6269
        %v6302 = vtanh.pop %v6270
        %v6303 = vtanh.pop %v6271
        %v6304 = vtanh.pop %v6272
        %v6305 = vtanh.pop %v6273
        %v6306 = vtanh.pop %v6274
        %v6307 = vtanh.pop %v6275
        %v6308 = vtanh.pop %v6276
        %v6309 = vtanh.pop %v6277
        %v6310 = vtanh.pop %v6278
        %v6311 = vtanh.pop %v6279
        %v6312 = vtanh.pop %v6280
        %v6313 = vtanh.pop %v6281
        %v6314 = vtanh.pop %v6282
        %v6315 = vtanh.pop %v6283
        %v6316 = vtanh.pop %v6284
        %v6317 = vtanh.pop %v6285
        %v6318 = vtanh.pop %v6286
        %6351 = vrot.lane.b32.xlu0 %v6287, 64
        %v6352 = vpop.permute.xlu0 %6351
        %6353 = vrot.lane.b32.xlu0 %v6288, 64
        %v6354 = vpop.permute.xlu0 %6353
        %6355 = vrot.lane.b32.xlu0 %v6289, 64
        %v6356 = vpop.permute.xlu0 %6355
        %6357 = vrot.lane.b32.xlu0 %v6290, 64
        %v6358 = vpop.permute.xlu0 %6357
        %6359 = vrot.lane.b32.xlu0 %v6291, 64
        %v6360 = vpop.permute.xlu0 %6359
        %6361 = vrot.lane.b32.xlu0 %v6292, 64
        %v6362 = vpop.permute.xlu0 %6361
        %6363 = vrot.lane.b32.xlu0 %v6293, 64
        %v6364 = vpop.permute.xlu0 %6363
        %6365 = vrot.lane.b32.xlu0 %v6294, 64
        %v6366 = vpop.permute.xlu0 %6365
        %6367 = vrot.lane.b32.xlu0 %v6295, 64
        %v6368 = vpop.permute.xlu0 %6367
        %6369 = vrot.lane.b32.xlu0 %v6296, 64
        %v6370 = vpop.permute.xlu0 %6369
        %6371 = vrot.lane.b32.xlu0 %v6297, 64
        %v6372 = vpop.permute.xlu0 %6371
        %6373 = vrot.lane.b32.xlu0 %v6298, 64
        %v6374 = vpop.permute.xlu0 %6373
        %6375 = vrot.lane.b32.xlu0 %v6299, 64
        %v6376 = vpop.permute.xlu0 %6375
        %6377 = vrot.lane.b32.xlu0 %v6300, 64
        %v6378 = vpop.permute.xlu0 %6377
        %6379 = vrot.lane.b32.xlu0 %v6301, 64
        %v6380 = vpop.permute.xlu0 %6379
        %6381 = vrot.lane.b32.xlu0 %v6302, 64
        %v6382 = vpop.permute.xlu0 %6381
        %6383 = vrot.lane.b32.xlu0 %v6303, 64
        %v6384 = vpop.permute.xlu0 %6383
        %6385 = vrot.lane.b32.xlu0 %v6304, 64
        %v6386 = vpop.permute.xlu0 %6385
        %6387 = vrot.lane.b32.xlu0 %v6305, 64
        %v6388 = vpop.permute.xlu0 %6387
        %6389 = vrot.lane.b32.xlu0 %v6306, 64
        %v6390 = vpop.permute.xlu0 %6389
        %6391 = vrot.lane.b32.xlu0 %v6307, 64
        %v6392 = vpop.permute.xlu0 %6391
        %6393 = vrot.lane.b32.xlu0 %v6308, 64
        %v6394 = vpop.permute.xlu0 %6393
        %6395 = vrot.lane.b32.xlu0 %v6309, 64
        %v6396 = vpop.permute.xlu0 %6395
        %6397 = vrot.lane.b32.xlu0 %v6310, 64
        %v6398 = vpop.permute.xlu0 %6397
        %6399 = vrot.lane.b32.xlu0 %v6311, 64
        %v6400 = vpop.permute.xlu0 %6399
        %6401 = vrot.lane.b32.xlu0 %v6312, 64
        %v6402 = vpop.permute.xlu0 %6401
        %6403 = vrot.lane.b32.xlu0 %v6313, 64
        %v6404 = vpop.permute.xlu0 %6403
        %6405 = vrot.lane.b32.xlu0 %v6314, 64
        %v6406 = vpop.permute.xlu0 %6405
        %6407 = vrot.lane.b32.xlu0 %v6315, 64
        %v6408 = vpop.permute.xlu0 %6407
        %6409 = vrot.lane.b32.xlu0 %v6316, 64
        %v6410 = vpop.permute.xlu0 %6409
        %6411 = vrot.lane.b32.xlu0 %v6317, 64
        %v6412 = vpop.permute.xlu0 %6411
        %6413 = vrot.lane.b32.xlu0 %v6318, 64
        %v6414 = vpop.permute.xlu0 %6413
        %v6447 = vmul.f32 %v5680, %v6352
        %v6448 = vmul.f32 %v5682, %v6354
        %v6449 = vmul.f32 %v5684, %v6356
        %v6450 = vmul.f32 %v5686, %v6358
        %v6451 = vmul.f32 %v5688, %v6360
        %v6452 = vmul.f32 %v5690, %v6362
        %v6453 = vmul.f32 %v5692, %v6364
        %v6454 = vmul.f32 %v5694, %v6366
        %v6455 = vmul.f32 %v5696, %v6368
        %v6456 = vmul.f32 %v5698, %v6370
        %v6457 = vmul.f32 %v5700, %v6372
        %v6458 = vmul.f32 %v5702, %v6374
        %v6459 = vmul.f32 %v5704, %v6376
        %v6460 = vmul.f32 %v5706, %v6378
        %v6461 = vmul.f32 %v5708, %v6380
        %v6462 = vmul.f32 %v5710, %v6382
        %v6463 = vmul.f32 %v5712, %v6384
        %v6464 = vmul.f32 %v5714, %v6386
        %v6465 = vmul.f32 %v5716, %v6388
        %v6466 = vmul.f32 %v5718, %v6390
        %v6467 = vmul.f32 %v5720, %v6392
        %v6468 = vmul.f32 %v5722, %v6394
        %v6469 = vmul.f32 %v5724, %v6396
        %v6470 = vmul.f32 %v5726, %v6398
        %v6471 = vmul.f32 %v5728, %v6400
        %v6472 = vmul.f32 %v5730, %v6402
        %v6473 = vmul.f32 %v5732, %v6404
        %v6474 = vmul.f32 %v5734, %v6406
        %v6475 = vmul.f32 %v5736, %v6408
        %v6476 = vmul.f32 %v5738, %v6410
        %v6477 = vmul.f32 %v5740, %v6412
        %v6478 = vmul.f32 %v5742, %v6414
        %v6479 = vpack.c.bf16 %v6448, %v6447
        %v6480 = vpack.c.bf16 %v6450, %v6449
        %v6481 = vpack.c.bf16 %v6452, %v6451
        %v6482 = vpack.c.bf16 %v6454, %v6453
        %v6483 = vpack.c.bf16 %v6456, %v6455
        %v6484 = vpack.c.bf16 %v6458, %v6457
        %v6485 = vpack.c.bf16 %v6460, %v6459
        %v6486 = vpack.c.bf16 %v6462, %v6461
        %v6487 = vpack.c.bf16 %v6464, %v6463
        %v6488 = vpack.c.bf16 %v6466, %v6465
        %v6489 = vpack.c.bf16 %v6468, %v6467
        %v6490 = vpack.c.bf16 %v6470, %v6469
        %v6491 = vpack.c.bf16 %v6472, %v6471
        %v6492 = vpack.c.bf16 %v6474, %v6473
        %v6493 = vpack.c.bf16 %v6476, %v6475
        %v6494 = vpack.c.bf16 %v6478, %v6477
        %v6511 = vunpack.c.l.b16 %v6479
        %v6512 = vunpack.c.h.b16 %v6479
        %v6513 = vunpack.c.l.b16 %v6480
        %v6514 = vunpack.c.h.b16 %v6480
        %v6515 = vunpack.c.l.b16 %v6481
        %v6516 = vunpack.c.h.b16 %v6481
        %v6517 = vunpack.c.l.b16 %v6482
        %v6518 = vunpack.c.h.b16 %v6482
        %v6519 = vunpack.c.l.b16 %v6483
        %v6520 = vunpack.c.h.b16 %v6483
        %v6521 = vunpack.c.l.b16 %v6484
        %v6522 = vunpack.c.h.b16 %v6484
        %v6523 = vunpack.c.l.b16 %v6485
        %v6524 = vunpack.c.h.b16 %v6485
        %v6525 = vunpack.c.l.b16 %v6486
        %v6526 = vunpack.c.h.b16 %v6486
        %v6527 = vunpack.c.l.b16 %v6487
        %v6528 = vunpack.c.h.b16 %v6487
        %v6529 = vunpack.c.l.b16 %v6488
        %v6530 = vunpack.c.h.b16 %v6488
        %v6531 = vunpack.c.l.b16 %v6489
        %v6532 = vunpack.c.h.b16 %v6489
        %v6533 = vunpack.c.l.b16 %v6490
        %v6534 = vunpack.c.h.b16 %v6490
        %v6535 = vunpack.c.l.b16 %v6491
        %v6536 = vunpack.c.h.b16 %v6491
        %v6537 = vunpack.c.l.b16 %v6492
        %v6538 = vunpack.c.h.b16 %v6492
        %v6539 = vunpack.c.l.b16 %v6493
        %v6540 = vunpack.c.h.b16 %v6493
        %v6541 = vunpack.c.l.b16 %v6494
        %v6542 = vunpack.c.h.b16 %v6494
        %v6543 = vpack.c.b16 %v6511, %v6511
        %v6544 = vpack.c.b16 %v6512, %v6512
        %v6545 = vpack.c.b16 %v6513, %v6513
        %v6546 = vpack.c.b16 %v6514, %v6514
        %v6547 = vpack.c.b16 %v6515, %v6515
        %v6548 = vpack.c.b16 %v6516, %v6516
        %v6549 = vpack.c.b16 %v6517, %v6517
        %v6550 = vpack.c.b16 %v6518, %v6518
        %v6551 = vpack.c.b16 %v6519, %v6519
        %v6552 = vpack.c.b16 %v6520, %v6520
        %v6553 = vpack.c.b16 %v6521, %v6521
        %v6554 = vpack.c.b16 %v6522, %v6522
        %v6555 = vpack.c.b16 %v6523, %v6523
        %v6556 = vpack.c.b16 %v6524, %v6524
        %v6557 = vpack.c.b16 %v6525, %v6525
        %v6558 = vpack.c.b16 %v6526, %v6526
        %v6559 = vpack.c.b16 %v6527, %v6527
        %v6560 = vpack.c.b16 %v6528, %v6528
        %v6561 = vpack.c.b16 %v6529, %v6529
        %v6562 = vpack.c.b16 %v6530, %v6530
        %v6563 = vpack.c.b16 %v6531, %v6531
        %v6564 = vpack.c.b16 %v6532, %v6532
        %v6565 = vpack.c.b16 %v6533, %v6533
        %v6566 = vpack.c.b16 %v6534, %v6534
        %v6567 = vpack.c.b16 %v6535, %v6535
        %v6568 = vpack.c.b16 %v6536, %v6536
        %v6569 = vpack.c.b16 %v6537, %v6537
        %v6570 = vpack.c.b16 %v6538, %v6538
        %v6571 = vpack.c.b16 %v6539, %v6539
        %v6572 = vpack.c.b16 %v6540, %v6540
        %v6573 = vpack.c.b16 %v6541, %v6541
        %v6574 = vpack.c.b16 %v6542, %v6542
        %6575 = vrot.lane.b32.xlu0 %v6543, 32
        %v6576 = vpop.permute.xlu0 %6575
        %6577 = vrot.lane.b32.xlu0 %v6544, 32
        %v6578 = vpop.permute.xlu0 %6577
        %6579 = vrot.lane.b32.xlu0 %v6545, 32
        %v6580 = vpop.permute.xlu0 %6579
        %6581 = vrot.lane.b32.xlu0 %v6546, 32
        %v6582 = vpop.permute.xlu0 %6581
        %6583 = vrot.lane.b32.xlu0 %v6547, 32
        %v6584 = vpop.permute.xlu0 %6583
        %6585 = vrot.lane.b32.xlu0 %v6548, 32
        %v6586 = vpop.permute.xlu0 %6585
        %6587 = vrot.lane.b32.xlu0 %v6549, 32
        %v6588 = vpop.permute.xlu0 %6587
        %6589 = vrot.lane.b32.xlu0 %v6550, 32
        %v6590 = vpop.permute.xlu0 %6589
        %6591 = vrot.lane.b32.xlu0 %v6551, 32
        %v6592 = vpop.permute.xlu0 %6591
        %6593 = vrot.lane.b32.xlu0 %v6552, 32
        %v6594 = vpop.permute.xlu0 %6593
        %6595 = vrot.lane.b32.xlu0 %v6553, 32
        %v6596 = vpop.permute.xlu0 %6595
        %6597 = vrot.lane.b32.xlu0 %v6554, 32
        %v6598 = vpop.permute.xlu0 %6597
        %6599 = vrot.lane.b32.xlu0 %v6555, 32
        %v6600 = vpop.permute.xlu0 %6599
        %6601 = vrot.lane.b32.xlu0 %v6556, 32
        %v6602 = vpop.permute.xlu0 %6601
        %6603 = vrot.lane.b32.xlu0 %v6557, 32
        %v6604 = vpop.permute.xlu0 %6603
        %6605 = vrot.lane.b32.xlu0 %v6558, 32
        %v6606 = vpop.permute.xlu0 %6605
        %6607 = vrot.lane.b32.xlu0 %v6559, 32
        %v6608 = vpop.permute.xlu0 %6607
        %6609 = vrot.lane.b32.xlu0 %v6560, 32
        %v6610 = vpop.permute.xlu0 %6609
        %6611 = vrot.lane.b32.xlu0 %v6561, 32
        %v6612 = vpop.permute.xlu0 %6611
        %6613 = vrot.lane.b32.xlu0 %v6562, 32
        %v6614 = vpop.permute.xlu0 %6613
        %6615 = vrot.lane.b32.xlu0 %v6563, 32
        %v6616 = vpop.permute.xlu0 %6615
        %6617 = vrot.lane.b32.xlu0 %v6564, 32
        %v6618 = vpop.permute.xlu0 %6617
        %6619 = vrot.lane.b32.xlu0 %v6565, 32
        %v6620 = vpop.permute.xlu0 %6619
        %6621 = vrot.lane.b32.xlu0 %v6566, 32
        %v6622 = vpop.permute.xlu0 %6621
        %6623 = vrot.lane.b32.xlu0 %v6567, 32
        %v6624 = vpop.permute.xlu0 %6623
        %6625 = vrot.lane.b32.xlu0 %v6568, 32
        %v6626 = vpop.permute.xlu0 %6625
        %6627 = vrot.lane.b32.xlu0 %v6569, 32
        %v6628 = vpop.permute.xlu0 %6627
        %6629 = vrot.lane.b32.xlu0 %v6570, 32
        %v6630 = vpop.permute.xlu0 %6629
        %6631 = vrot.lane.b32.xlu0 %v6571, 32
        %v6632 = vpop.permute.xlu0 %6631
        %6633 = vrot.lane.b32.xlu0 %v6572, 32
        %v6634 = vpop.permute.xlu0 %6633
        %6635 = vrot.lane.b32.xlu0 %v6573, 32
        %v6636 = vpop.permute.xlu0 %6635
        %6637 = vrot.lane.b32.xlu0 %v6574, 32
        %v6638 = vpop.permute.xlu0 %6637
        %vm6671 = vcmask 257024
        %6672 = vst.msk [vmem:[%s265] sm:$0xf] %vm6671, %v6576
        %6673 = vst.msk [vmem:[%s265 + $0x4] sm:$0xf] %vm6671, %v6578
        %6674 = vst.msk [vmem:[%s265 + $0x8] sm:$0xf] %vm6671, %v6580
        %6675 = vst.msk [vmem:[%s265 + $0xc] sm:$0xf] %vm6671, %v6582
        %6676 = vst.msk [vmem:[%s265 + $0x10] sm:$0xf] %vm6671, %v6584
        %6677 = vst.msk [vmem:[%s265 + $0x14] sm:$0xf] %vm6671, %v6586
        %6678 = vst.msk [vmem:[%s265 + $0x18] sm:$0xf] %vm6671, %v6588
        %6679 = vst.msk [vmem:[%s265 + $0x1c] sm:$0xf] %vm6671, %v6590
        %6680 = vst.msk [vmem:[%s265 + $0x20] sm:$0xf] %vm6671, %v6592
        %6681 = vst.msk [vmem:[%s265 + $0x24] sm:$0xf] %vm6671, %v6594
        %6682 = vst.msk [vmem:[%s265 + $0x28] sm:$0xf] %vm6671, %v6596
        %6683 = vst.msk [vmem:[%s265 + $0x2c] sm:$0xf] %vm6671, %v6598
        %6684 = vst.msk [vmem:[%s265 + $0x30] sm:$0xf] %vm6671, %v6600
        %6685 = vst.msk [vmem:[%s265 + $0x34] sm:$0xf] %vm6671, %v6602
        %6686 = vst.msk [vmem:[%s265 + $0x38] sm:$0xf] %vm6671, %v6604
        %6687 = vst.msk [vmem:[%s265 + $0x3c] sm:$0xf] %vm6671, %v6606
        %6688 = vst.msk [vmem:[%s265 + $0x40] sm:$0xf] %vm6671, %v6608
        %6689 = vst.msk [vmem:[%s265 + $0x44] sm:$0xf] %vm6671, %v6610
        %6690 = vst.msk [vmem:[%s265 + $0x48] sm:$0xf] %vm6671, %v6612
        %6691 = vst.msk [vmem:[%s265 + $0x4c] sm:$0xf] %vm6671, %v6614
        %6692 = vst.msk [vmem:[%s265 + $0x50] sm:$0xf] %vm6671, %v6616
        %6693 = vst.msk [vmem:[%s265 + $0x54] sm:$0xf] %vm6671, %v6618
        %6694 = vst.msk [vmem:[%s265 + $0x58] sm:$0xf] %vm6671, %v6620
        %6695 = vst.msk [vmem:[%s265 + $0x5c] sm:$0xf] %vm6671, %v6622
        %6696 = vst.msk [vmem:[%s265 + $0x60] sm:$0xf] %vm6671, %v6624
        %6697 = vst.msk [vmem:[%s265 + $0x64] sm:$0xf] %vm6671, %v6626
        %6698 = vst.msk [vmem:[%s265 + $0x68] sm:$0xf] %vm6671, %v6628
        %6699 = vst.msk [vmem:[%s265 + $0x6c] sm:$0xf] %vm6671, %v6630
        %6700 = vst.msk [vmem:[%s265 + $0x70] sm:$0xf] %vm6671, %v6632
        %6701 = vst.msk [vmem:[%s265 + $0x74] sm:$0xf] %vm6671, %v6634
        %6702 = vst.msk [vmem:[%s265 + $0x78] sm:$0xf] %vm6671, %v6636
        %6703 = vst.msk [vmem:[%s265 + $0x7c] sm:$0xf] %vm6671, %v6638
        %6736 = vrot.lane.b32.xlu0 %v6255, 96
        %v6737 = vpop.permute.xlu0 %6736
        %6738 = vrot.lane.b32.xlu0 %v6256, 96
        %v6739 = vpop.permute.xlu0 %6738
        %6740 = vrot.lane.b32.xlu0 %v6257, 96
        %v6741 = vpop.permute.xlu0 %6740
        %6742 = vrot.lane.b32.xlu0 %v6258, 96
        %v6743 = vpop.permute.xlu0 %6742
        %6744 = vrot.lane.b32.xlu0 %v6259, 96
        %v6745 = vpop.permute.xlu0 %6744
        %6746 = vrot.lane.b32.xlu0 %v6260, 96
        %v6747 = vpop.permute.xlu0 %6746
        %6748 = vrot.lane.b32.xlu0 %v6261, 96
        %v6749 = vpop.permute.xlu0 %6748
        %6750 = vrot.lane.b32.xlu0 %v6262, 96
        %v6751 = vpop.permute.xlu0 %6750
        %6752 = vrot.lane.b32.xlu0 %v6263, 96
        %v6753 = vpop.permute.xlu0 %6752
        %6754 = vrot.lane.b32.xlu0 %v6264, 96
        %v6755 = vpop.permute.xlu0 %6754
        %6756 = vrot.lane.b32.xlu0 %v6265, 96
        %v6757 = vpop.permute.xlu0 %6756
        %6758 = vrot.lane.b32.xlu0 %v6266, 96
        %v6759 = vpop.permute.xlu0 %6758
        %6760 = vrot.lane.b32.xlu0 %v6267, 96
        %v6761 = vpop.permute.xlu0 %6760
        %6762 = vrot.lane.b32.xlu0 %v6268, 96
        %v6763 = vpop.permute.xlu0 %6762
        %6764 = vrot.lane.b32.xlu0 %v6269, 96
        %v6765 = vpop.permute.xlu0 %6764
        %6766 = vrot.lane.b32.xlu0 %v6270, 96
        %v6767 = vpop.permute.xlu0 %6766
        %6768 = vrot.lane.b32.xlu0 %v6271, 96
        %v6769 = vpop.permute.xlu0 %6768
        %6770 = vrot.lane.b32.xlu0 %v6272, 96
        %v6771 = vpop.permute.xlu0 %6770
        %6772 = vrot.lane.b32.xlu0 %v6273, 96
        %v6773 = vpop.permute.xlu0 %6772
        %6774 = vrot.lane.b32.xlu0 %v6274, 96
        %v6775 = vpop.permute.xlu0 %6774
        %6776 = vrot.lane.b32.xlu0 %v6275, 96
        %v6777 = vpop.permute.xlu0 %6776
        %6778 = vrot.lane.b32.xlu0 %v6276, 96
        %v6779 = vpop.permute.xlu0 %6778
        %6780 = vrot.lane.b32.xlu0 %v6277, 96
        %v6781 = vpop.permute.xlu0 %6780
        %6782 = vrot.lane.b32.xlu0 %v6278, 96
        %v6783 = vpop.permute.xlu0 %6782
        %6784 = vrot.lane.b32.xlu0 %v6279, 96
        %v6785 = vpop.permute.xlu0 %6784
        %6786 = vrot.lane.b32.xlu0 %v6280, 96
        %v6787 = vpop.permute.xlu0 %6786
        %6788 = vrot.lane.b32.xlu0 %v6281, 96
        %v6789 = vpop.permute.xlu0 %6788
        %6790 = vrot.lane.b32.xlu0 %v6282, 96
        %v6791 = vpop.permute.xlu0 %6790
        %6792 = vrot.lane.b32.xlu0 %v6283, 96
        %v6793 = vpop.permute.xlu0 %6792
        %6794 = vrot.lane.b32.xlu0 %v6284, 96
        %v6795 = vpop.permute.xlu0 %6794
        %6796 = vrot.lane.b32.xlu0 %v6285, 96
        %v6797 = vpop.permute.xlu0 %6796
        %6798 = vrot.lane.b32.xlu0 %v6286, 96
        %v6799 = vpop.permute.xlu0 %6798
        %vm6832 = vcmask 261120
        %6833 = vst.msk [vmem:[%s272] sm:$0xff] %vm6832, %v6737
        %6834 = vst.msk [vmem:[%s272 + $0x8] sm:$0xff] %vm6832, %v6739
        %6835 = vst.msk [vmem:[%s272 + $0x10] sm:$0xff] %vm6832, %v6741
        %6836 = vst.msk [vmem:[%s272 + $0x18] sm:$0xff] %vm6832, %v6743
        %6837 = vst.msk [vmem:[%s272 + $0x20] sm:$0xff] %vm6832, %v6745
        %6838 = vst.msk [vmem:[%s272 + $0x28] sm:$0xff] %vm6832, %v6747
        %6839 = vst.msk [vmem:[%s272 + $0x30] sm:$0xff] %vm6832, %v6749
        %6840 = vst.msk [vmem:[%s272 + $0x38] sm:$0xff] %vm6832, %v6751
        %6841 = vst.msk [vmem:[%s272 + $0x40] sm:$0xff] %vm6832, %v6753
        %6842 = vst.msk [vmem:[%s272 + $0x48] sm:$0xff] %vm6832, %v6755
        %6843 = vst.msk [vmem:[%s272 + $0x50] sm:$0xff] %vm6832, %v6757
        %6844 = vst.msk [vmem:[%s272 + $0x58] sm:$0xff] %vm6832, %v6759
        %6845 = vst.msk [vmem:[%s272 + $0x60] sm:$0xff] %vm6832, %v6761
        %6846 = vst.msk [vmem:[%s272 + $0x68] sm:$0xff] %vm6832, %v6763
        %6847 = vst.msk [vmem:[%s272 + $0x70] sm:$0xff] %vm6832, %v6765
        %6848 = vst.msk [vmem:[%s272 + $0x78] sm:$0xff] %vm6832, %v6767
        %6849 = vst.msk [vmem:[%s272 + $0x80] sm:$0xff] %vm6832, %v6769
        %6850 = vst.msk [vmem:[%s272 + $0x88] sm:$0xff] %vm6832, %v6771
        %6851 = vst.msk [vmem:[%s272 + $0x90] sm:$0xff] %vm6832, %v6773
        %6852 = vst.msk [vmem:[%s272 + $0x98] sm:$0xff] %vm6832, %v6775
        %6853 = vst.msk [vmem:[%s272 + $0xa0] sm:$0xff] %vm6832, %v6777
        %6854 = vst.msk [vmem:[%s272 + $0xa8] sm:$0xff] %vm6832, %v6779
        %6855 = vst.msk [vmem:[%s272 + $0xb0] sm:$0xff] %vm6832, %v6781
        %6856 = vst.msk [vmem:[%s272 + $0xb8] sm:$0xff] %vm6832, %v6783
        %6857 = vst.msk [vmem:[%s272 + $0xc0] sm:$0xff] %vm6832, %v6785
        %6858 = vst.msk [vmem:[%s272 + $0xc8] sm:$0xff] %vm6832, %v6787
        %6859 = vst.msk [vmem:[%s272 + $0xd0] sm:$0xff] %vm6832, %v6789
        %6860 = vst.msk [vmem:[%s272 + $0xd8] sm:$0xff] %vm6832, %v6791
        %6861 = vst.msk [vmem:[%s272 + $0xe0] sm:$0xff] %vm6832, %v6793
        %6862 = vst.msk [vmem:[%s272 + $0xe8] sm:$0xff] %vm6832, %v6795
        %6863 = vst.msk [vmem:[%s272 + $0xf0] sm:$0xff] %vm6832, %v6797
        %6864 = vst.msk [vmem:[%s272 + $0xf8] sm:$0xff] %vm6832, %v6799
        %s6865 = sand.u32 %s141, 1
        %s6866 = scalar_lea.sflag [#allocation4], %s6865
        %s6867 = sand.u32 %s141, 1
        %s6868 = smul.addr %s6867, 128
        %s6869 = scalar_lea.vmem [#allocation3], %s6868
        %s6870 = sand.u32 %s169, 1
        %s6871 = scalar_lea.sflag [#allocation6], %s6870
        %s6872 = sand.u32 %s169, 1
        %s6873 = smul.addr %s6872, 256
        %s6874 = scalar_lea.vmem [#allocation5], %s6873
        // Predicated region
        $region37: #{tpu_custom_call.1} parent=35 // pred_check
          %p6875 = pneg %p151
        $region38: #{tpu_custom_call.1} parent=35 // pred_check_branch
          %6877 = sbr.rel (%p6875) target = $region40
        $region39: #{tpu_custom_call.1} parent=35 // pred_region
          %s6878 = smul.u32 16, %s28
          %s6880 = ssub.s32 2048, 2048
          %6881 = vsyncadd %s6866, %s6880
          %s6882 = smul.addr %s6878, 2
          %s6883 = smul.addr %s27, 32
          %s6884 = sadd.s32 %s6882, %s6883
          %s6885 = smul.addr %s6884, 64
          %s6886 = scalar_lea.hbm %s4, %s6885
          %s6887 = sshll.u32 %s6869, 4
          %s6888 = int_to_ptr.vmem [resolvable:$true] %s6887
          %6893 = dma.vmem_to_hbm [thread:$0]  %s6888, 2048, %s6886, %s6866, 64, 64, 4
        $region40: #{tpu_custom_call.1} parent=35 // pred_fallthru
          _
        // Predicated region
        $region41: #{tpu_custom_call.1} parent=35 // pred_check
          %p6894 = pneg %p179
        $region42: #{tpu_custom_call.1} parent=35 // pred_check_branch
          %6896 = sbr.rel (%p6894) target = $region44
        $region43: #{tpu_custom_call.1} parent=35 // pred_region
          %s6897 = smul.u32 16, %s28
          %s6899 = ssub.s32 4096, 4096
          %6900 = vsyncadd %s6871, %s6899
          %s6901 = smul.addr %s6897, 2
          %s6902 = smul.addr %s27, 32
          %s6903 = sadd.s32 %s6901, %s6902
          %s6904 = smul.addr %s6903, 128
          %s6905 = scalar_lea.hbm %s5, %s6904
          %s6906 = sshll.u32 %s6874, 4
          %s6907 = int_to_ptr.vmem [resolvable:$true] %s6906
          %6912 = dma.vmem_to_hbm [thread:$0]  %s6907, 4096, %s6905, %s6871, 128, 128, 8
        $region44: #{tpu_custom_call.1} parent=35 // pred_fallthru
          _
      $region36: #{tpu_custom_call.1} parent=5 // pred_fallthru
        _
      %p6913 = scmp.le.s32.totalorder 2, %s18
      // Predicated region
      $region45: #{tpu_custom_call.1} parent=5 // pred_check
        %p6914 = pneg %p6913
      $region46: #{tpu_custom_call.1} parent=5 // pred_check_branch
        %6916 = sbr.rel (%p6914) target = $region48
      $region47: #{tpu_custom_call.1} parent=5 // pred_region
        %s6917 = ssub.s32 %s18, 2
        // Predicated region
        $region49: #{tpu_custom_call.1} parent=47 // pred_check
          %p6918 = pneg %p157
        $region50: #{tpu_custom_call.1} parent=47 // pred_check_branch
          %6920 = sbr.rel (%p6918) target = $region52
        $region51: #{tpu_custom_call.1} parent=47 // pred_region
          %s6921 = sand.u32 %s142, 1
          %s6922 = scalar_lea.sflag [#allocation4], %s6921
          %s6923 = sand.u32 %s142, 1
          %s6924 = smul.addr %s6923, 128
          %s6925 = scalar_lea.vmem [#allocation3], %s6924
          %6926 = dma.done %s6922, 2048
        $region52: #{tpu_custom_call.1} parent=47 // pred_fallthru
          _
        // Predicated region
        $region53: #{tpu_custom_call.1} parent=47 // pred_check
          %p6927 = pneg %p185
        $region54: #{tpu_custom_call.1} parent=47 // pred_check_branch
          %6929 = sbr.rel (%p6927) target = $region56
        $region55: #{tpu_custom_call.1} parent=47 // pred_region
          %s6930 = sand.u32 %s170, 1
          %s6931 = scalar_lea.sflag [#allocation6], %s6930
          %s6932 = sand.u32 %s170, 1
          %s6933 = smul.addr %s6932, 256
          %s6934 = scalar_lea.vmem [#allocation5], %s6933
          %6935 = dma.done %s6931, 4096
        $region56: #{tpu_custom_call.1} parent=47 // pred_fallthru
          _
      $region48: #{tpu_custom_call.1} parent=5 // pred_fallthru
        _
    $region6: #{tpu_custom_call.1} parent=1 // loop_footer
      %s22 = sadd.s32 1, %s18
    $region7: #{tpu_custom_call.1} parent=1 // loop_footer_branch
      %17 = sbr.rel target = $region3
    $region8: #{tpu_custom_call.1} parent=1 // loop_exit
      _
    %6936 = vsyncpa [#allocation4], 1
    %s6937 = scalar_lea.sflag [#allocation4], 1
    %6938 = vsyncpa %s6937, 1
    %6939 = vsyncpa [#allocation6], 1
    %s6940 = scalar_lea.sflag [#allocation6], 1
    %6941 = vsyncpa %s6940, 1

</llo_original>
